<compile_context>
chip_gen: v7x
topology: tpu7x:2x2x1
jax: 0.10.0
libtpu: 0.0.40
codegen_flags: <defaults>
</compile_context>

<pallas_src>
import jax
import jax.numpy as jnp
from jax.experimental import pallas as pl
from jax.experimental.pallas import tpu as pltpu


def _round_up(v, m):
    return (v + m - 1) // m * m


def _vmem_limit_bytes():
    """Chip-aware VMEM limit (~3/4 of physical), conservative fallback."""
    try:
        cap = int(getattr(pltpu.get_tpu_info(), "vmem_capacity_bytes", 0))
    except Exception:  # e.g. interpret mode / no TPU info available
        cap = 0
    if cap <= 0:
        cap = 64 * 1024 * 1024
    return min((cap * 3) // 4, 112 * 1024 * 1024)


def _pick_row_tile(H, W, Cin, Cout, budget):
    """Largest divisor TR of H whose per-step VMEM working set fits `budget`.

    Accounts for lane/sublane padding, double-buffered pipeline operands
    (input halo block, y block, stats, weights) and the single im2col scratch.
    """
    C4 = 4 * Cout
    LANE, SUB = 128, 8

    def tile_bytes(tr):
        x_blk = (tr + 2) * _round_up(W + 2, SUB) * _round_up(Cin, LANE) * 4
        y_blk = _round_up(tr * W, SUB) * _round_up(C4, LANE) * 4
        w_blk = _round_up(9 * Cin, SUB) * _round_up(C4, LANE) * 4
        st_blk = SUB * _round_up(C4, LANE) * 4
        patch = _round_up(tr * W, SUB) * _round_up(9 * Cin, LANE) * 4
        return 2 * (x_blk + y_blk + w_blk + st_blk) + patch

    best = 1
    for tr in range(1, H + 1):
        if H % tr == 0 and tile_bytes(tr) <= budget:
            best = tr
    return best


# ---------------------------------------------------------------------------
# Pallas kernel: in-VMEM im2col (9 taps -> one scratch) + single polyphase
# conv GEMM + per-tile BatchNorm partial statistics.
# ---------------------------------------------------------------------------
def _make_conv_stats_kernel(TR, W, Cin, C4):
    def kernel(x_ref, w_ref, y_ref, stats_ref, patch_ref):
        # x_ref:     (1, TR+2, W+2, Cin)  f32  haloed original-resolution tile
        # w_ref:     (9*Cin, C4)          f32  folded polyphase weights
        # y_ref:     (1, TR*W, C4)        f32  conv output, phases interleaved
        # stats_ref: (1, 2, C4)           f32  per-tile [sum; sum-of-squares]
        # patch_ref: (TR*W, 9*Cin)        f32  VMEM im2col scratch
        for p in range(3):                      # static, fully unrolled
            for q in range(3):
                t = p * 3 + q
                patch_ref[:, t * Cin:(t + 1) * Cin] = (
                    x_ref[0, p:p + TR, q:q + W, :].reshape(TR * W, Cin))
        y = jnp.dot(patch_ref[...], w_ref[...],
                    precision=jax.lax.Precision.HIGHEST,
                    preferred_element_type=jnp.float32)
        y_ref[0] = y
        stats_ref[0, 0:1, :] = jnp.sum(y, axis=0, keepdims=True)
        stats_ref[0, 1:2, :] = jnp.sum(y * y, axis=0, keepdims=True)

    return kernel


def _conv_gemm_with_stats(x_halo, w_flat, TR, W, Cin, C4, vmem_limit):
    G = x_halo.shape[0]
    kernel = _make_conv_stats_kernel(TR, W, Cin, C4)
    grid_spec = pltpu.PrefetchScalarGridSpec(
        num_scalar_prefetch=0,
        grid=(G,),
        in_specs=[
            pl.BlockSpec((1, TR + 2, W + 2, Cin), lambda g: (g, 0, 0, 0)),
            pl.BlockSpec((9 * Cin, C4), lambda g: (0, 0)),
        ],
        out_specs=[
            pl.BlockSpec((1, TR * W, C4), lambda g: (g, 0, 0)),
            pl.BlockSpec((1, 2, C4), lambda g: (g, 0, 0)),
        ],
        scratch_shapes=[pltpu.VMEM((TR * W, 9 * Cin), jnp.float32)],
    )
    return pl.pallas_call(
        kernel,
        out_shape=(
            jax.ShapeDtypeStruct((G, TR * W, C4), jnp.float32),
            jax.ShapeDtypeStruct((G, 2, C4), jnp.float32),
        ),
        grid_spec=grid_spec,
        compiler_params=pltpu.CompilerParams(
            dimension_semantics=("parallel",),   # megacore-shardable on v7x
            vmem_limit_bytes=vmem_limit),
    )(x_halo, w_flat)


# ---------------------------------------------------------------------------
# UpBlock forward
# ---------------------------------------------------------------------------
@jax.jit
def up_block_forward(x_nchw, conv_w, gamma, beta, eps=1e-5):
    """
    x_nchw : (N, in_c, H, W)      float32
    conv_w : (out_c, in_c, 3, 3)  float32   (PyTorch Conv2d weight layout)
    gamma, beta : (out_c,)        float32   (BatchNorm2d affine params)
    returns: (N, out_c, 2H, 2W)   float32
    """
    N, Cin, H, W = x_nchw.shape
    Cout = conv_w.shape[0]
    C4 = 4 * Cout                               # (phase_a, phase_b, cout)

    # --- polyphase weight folding -------------------------------------------
    # Output sub-pixel (2r+a, 2c+b) of "nearest-x2 then 3x3 conv(pad=1)" only
    # reads padded ORIGINAL pixels x_pad[r+p, c+q]; R[a, p, dh] = 1 iff tap dh
    # of phase a lands on padded-original row offset p.
    R = jnp.array([[[1., 0., 0.], [0., 1., 1.], [0., 0., 0.]],   # a = 0
                   [[0., 0., 0.], [1., 1., 0.], [0., 0., 1.]]],  # a = 1
                  jnp.float32)
    w_eff = jnp.einsum('apx,bqy,ocxy->pqcabo', R, R,
                       conv_w.astype(jnp.float32))    # (3,3,Cin,2,2,Cout)
    w_flat = w_eff.reshape(9 * Cin, C4)               # K = (p,q,cin), N = (a,b,o)

    # --- input prep: NCHW -> NHWC, zero pad, (optionally) haloed row tiles ---
    x = jnp.transpose(x_nchw, (0, 2, 3, 1)).astype(jnp.float32)   # (N,H,W,Cin)
    x_pad = jnp.pad(x, ((0, 0), (1, 1), (1, 1), (0, 0)))          # (N,H+2,W+2,Cin)

    vmem_limit = _vmem_limit_bytes()
    TR = _pick_row_tile(H, W, Cin, Cout, budget=vmem_limit // 2)
    T = H // TR
    if T == 1:
        x_halo = x_pad                                            # no HBM dup
    else:
        row_idx = jnp.arange(T)[:, None] * TR + jnp.arange(TR + 2)[None, :]
        x_halo = x_pad[:, row_idx].reshape(N * T, TR + 2, W + 2, Cin)

    # --- Pallas: fused im2col + polyphase GEMM + BN partial stats ------------
    y, stats = _conv_gemm_with_stats(x_halo, w_flat, TR, W, Cin, C4, vmem_limit)

    # --- tiny scalar math: batch stats -> per-channel scale/shift ------------
    per = jnp.sum(stats, axis=0)                       # (2, C4)
    s = per[0].reshape(4, Cout).sum(axis=0)            # (Cout,)
    sq = per[1].reshape(4, Cout).sum(axis=0)
    count = jnp.float32(N * 4 * H * W)                 # pixels per channel
    mean = s / count
    var = jnp.maximum(sq / count - mean * mean, 0.0)   # guard cancellation
    inv_std = jax.lax.rsqrt(var + eps)
    scale = (gamma * inv_std).reshape(1, 1, 1, 1, 1, Cout)
    shift = (beta - mean * gamma * inv_std).reshape(1, 1, 1, 1, 1, Cout)

    # --- BN affine + LeakyReLU, fused by XLA into the mandatory depth-to-space
    #     + NHWC->NCHW relayout (y read once, final tensor written once). ------
    z = y.reshape(N, H, W, 2, 2, Cout) * scale + shift     # (n,r,c,a,b,o)
    z = jnp.where(z >= 0, z, 0.2 * z)
    out = jnp.transpose(z, (0, 5, 1, 3, 2, 4)).reshape(N, Cout, 2 * H, 2 * W)
    return out


# ---------------------------------------------------------------------------
# Pure-JAX reference (true f32 module semantics, for self-check)
# ---------------------------------------------------------------------------
def up_block_reference(x_nchw, conv_w, gamma, beta, eps=1e-5):
    x_up = jnp.repeat(jnp.repeat(x_nchw, 2, axis=2), 2, axis=3)
    y = jax.lax.conv_general_dilated(
        x_up, conv_w, window_strides=(1, 1), padding=((1, 1), (1, 1)),
        dimension_numbers=("NCHW", "OIHW", "NCHW"),
        precision=jax.lax.Precision.HIGHEST)
    mean = jnp.mean(y, axis=(0, 2, 3), keepdims=True)
    var = jnp.mean((y - mean) ** 2, axis=(0, 2, 3), keepdims=True)
    z = (y - mean) * jax.lax.rsqrt(var + eps)
    z = z * gamma.reshape(1, -1, 1, 1) + beta.reshape(1, -1, 1, 1)
    return jnp.where(z >= 0, z, 0.2 * z)


if __name__ == "__main__":
    # Small shapes consistent with the module: N=2, in_c=4, out_c=8, H=W=16.
    N, in_c, out_c, H, W = 2, 4, 8, 16, 16

    key = jax.random.PRNGKey(0)
    kx, kw, kg, kb = jax.random.split(key, 4)
    x = jax.random.normal(kx, (N, in_c, H, W), dtype=jnp.float32)
    conv_w = 0.1 * jax.random.normal(kw, (out_c, in_c, 3, 3), dtype=jnp.float32)
    gamma = 1.0 + 0.1 * jax.random.normal(kg, (out_c,), dtype=jnp.float32)
    beta = 0.1 * jax.random.normal(kb, (out_c,), dtype=jnp.float32)

    out = jax.block_until_ready(up_block_forward(x, conv_w, gamma, beta))
    assert out.shape == (N, out_c, 2 * H, 2 * W)
    assert bool(jnp.all(jnp.isfinite(out)))

    # f32 operands + HIGHEST-precision MXU accumulation: expected deviation
    # from the f32 reference is at the 1e-5 level (accumulation order + the
    # sum/sum-of-squares BN-stat formulation).  The tolerance below leaves
    # headroom for a backend that maps f32 matmuls onto reduced-precision
    # MXU passes despite the explicit HIGHEST request.
    ref = up_block_reference(x, conv_w, gamma, beta)
    max_err = float(jnp.max(jnp.abs(out - ref)))
    assert jnp.allclose(out, ref, atol=2e-2, rtol=2e-2), f"max_err={max_err}"

    print("KERNEL_OK")
</pallas_src>

<mosaic_0001>
module attributes {stable_mosaic.version = 11 : i64} {
  func.func @kernel(%arg0: i32, %arg1: memref<1x18x18x4xf32, #tpu.memory_space<vmem>>, %arg2: memref<36x32xf32, #tpu.memory_space<vmem>>, %arg3: memref<1x256x32xf32, #tpu.memory_space<vmem>>, %arg4: memref<1x2x32xf32, #tpu.memory_space<vmem>>, %arg5: memref<256x36xf32, #tpu.memory_space<vmem>>) attributes {dimension_semantics = [#tpu.dimension_semantics<parallel>], iteration_bounds = array<i64: 2>, scalar_prefetch = 0 : i64, scratch_operands = 1 : i64, tpu.core_type = #tpu.core_type<tc>, window_params = [{transform_indices = @transform_0, window_bounds = array<i64: 1, 18, 18, 4>}, {pipeline_mode = #tpu.pipeline_mode<synchronous>, transform_indices = @transform_1, window_bounds = array<i64: 36, 32>}, {transform_indices = @transform_2, window_bounds = array<i64: 1, 256, 32>}, {transform_indices = @transform_3, window_bounds = array<i64: 1, 2, 32>}]} {
    %c0 = arith.constant 0 : index
    %c0_0 = arith.constant 0 : index
    %c0_1 = arith.constant 0 : index
    %c0_2 = arith.constant 0 : index
    %0 = vector.load %arg1[%c0, %c0_0, %c0_1, %c0_2] : memref<1x18x18x4xf32, #tpu.memory_space<vmem>>, vector<1x16x16x4xf32>
    %1 = vector.shape_cast %0 : vector<1x16x16x4xf32> to vector<16x16x4xf32>
    %2 = vector.shape_cast %1 : vector<16x16x4xf32> to vector<256x4xf32>
    %c0_3 = arith.constant 0 : index
    %c0_4 = arith.constant 0 : index
    %3 = vector.load %arg5[%c0_3, %c0_4] : memref<256x36xf32, #tpu.memory_space<vmem>>, vector<256x4xf32>
    tpu.vector_store %arg5[%c0_3, %c0_4], %2 {strides = array<i32>} : memref<256x36xf32, #tpu.memory_space<vmem>>, vector<256x4xf32>,
    %c0_5 = arith.constant 0 : index
    %c0_6 = arith.constant 0 : index
    %c1 = arith.constant 1 : index
    %c0_7 = arith.constant 0 : index
    %4 = vector.load %arg1[%c0_5, %c0_6, %c1, %c0_7] : memref<1x18x18x4xf32, #tpu.memory_space<vmem>>, vector<1x16x16x4xf32>
    %5 = vector.shape_cast %4 : vector<1x16x16x4xf32> to vector<16x16x4xf32>
    %6 = vector.shape_cast %5 : vector<16x16x4xf32> to vector<256x4xf32>
    %c0_8 = arith.constant 0 : index
    %c4 = arith.constant 4 : index
    %7 = vector.load %arg5[%c0_8, %c4] : memref<256x36xf32, #tpu.memory_space<vmem>>, vector<256x4xf32>
    tpu.vector_store %arg5[%c0_8, %c4], %6 {strides = array<i32>} : memref<256x36xf32, #tpu.memory_space<vmem>>, vector<256x4xf32>,
    %c0_9 = arith.constant 0 : index
    %c0_10 = arith.constant 0 : index
    %c2 = arith.constant 2 : index
    %c0_11 = arith.constant 0 : index
    %8 = vector.load %arg1[%c0_9, %c0_10, %c2, %c0_11] : memref<1x18x18x4xf32, #tpu.memory_space<vmem>>, vector<1x16x16x4xf32>
    %9 = vector.shape_cast %8 : vector<1x16x16x4xf32> to vector<16x16x4xf32>
    %10 = vector.shape_cast %9 : vector<16x16x4xf32> to vector<256x4xf32>
    %c0_12 = arith.constant 0 : index
    %c8 = arith.constant 8 : index
    %11 = vector.load %arg5[%c0_12, %c8] : memref<256x36xf32, #tpu.memory_space<vmem>>, vector<256x4xf32>
    tpu.vector_store %arg5[%c0_12, %c8], %10 {strides = array<i32>} : memref<256x36xf32, #tpu.memory_space<vmem>>, vector<256x4xf32>,
    %c0_13 = arith.constant 0 : index
    %c1_14 = arith.constant 1 : index
    %c0_15 = arith.constant 0 : index
    %c0_16 = arith.constant 0 : index
    %12 = vector.load %arg1[%c0_13, %c1_14, %c0_15, %c0_16] : memref<1x18x18x4xf32, #tpu.memory_space<vmem>>, vector<1x16x16x4xf32>
    %13 = vector.shape_cast %12 : vector<1x16x16x4xf32> to vector<16x16x4xf32>
    %14 = vector.shape_cast %13 : vector<16x16x4xf32> to vector<256x4xf32>
    %c0_17 = arith.constant 0 : index
    %c12 = arith.constant 12 : index
    %15 = vector.load %arg5[%c0_17, %c12] : memref<256x36xf32, #tpu.memory_space<vmem>>, vector<256x4xf32>
    tpu.vector_store %arg5[%c0_17, %c12], %14 {strides = array<i32>} : memref<256x36xf32, #tpu.memory_space<vmem>>, vector<256x4xf32>,
    %c0_18 = arith.constant 0 : index
    %c1_19 = arith.constant 1 : index
    %c1_20 = arith.constant 1 : index
    %c0_21 = arith.constant 0 : index
    %16 = vector.load %arg1[%c0_18, %c1_19, %c1_20, %c0_21] : memref<1x18x18x4xf32, #tpu.memory_space<vmem>>, vector<1x16x16x4xf32>
    %17 = vector.shape_cast %16 : vector<1x16x16x4xf32> to vector<16x16x4xf32>
    %18 = vector.shape_cast %17 : vector<16x16x4xf32> to vector<256x4xf32>
    %c0_22 = arith.constant 0 : index
    %c16 = arith.constant 16 : index
    %19 = vector.load %arg5[%c0_22, %c16] : memref<256x36xf32, #tpu.memory_space<vmem>>, vector<256x4xf32>
    tpu.vector_store %arg5[%c0_22, %c16], %18 {strides = array<i32>} : memref<256x36xf32, #tpu.memory_space<vmem>>, vector<256x4xf32>,
    %c0_23 = arith.constant 0 : index
    %c1_24 = arith.constant 1 : index
    %c2_25 = arith.constant 2 : index
    %c0_26 = arith.constant 0 : index
    %20 = vector.load %arg1[%c0_23, %c1_24, %c2_25, %c0_26] : memref<1x18x18x4xf32, #tpu.memory_space<vmem>>, vector<1x16x16x4xf32>
    %21 = vector.shape_cast %20 : vector<1x16x16x4xf32> to vector<16x16x4xf32>
    %22 = vector.shape_cast %21 : vector<16x16x4xf32> to vector<256x4xf32>
    %c0_27 = arith.constant 0 : index
    %c20 = arith.constant 20 : index
    %23 = vector.load %arg5[%c0_27, %c20] : memref<256x36xf32, #tpu.memory_space<vmem>>, vector<256x4xf32>
    tpu.vector_store %arg5[%c0_27, %c20], %22 {strides = array<i32>} : memref<256x36xf32, #tpu.memory_space<vmem>>, vector<256x4xf32>,
    %c0_28 = arith.constant 0 : index
    %c2_29 = arith.constant 2 : index
    %c0_30 = arith.constant 0 : index
    %c0_31 = arith.constant 0 : index
    %24 = vector.load %arg1[%c0_28, %c2_29, %c0_30, %c0_31] : memref<1x18x18x4xf32, #tpu.memory_space<vmem>>, vector<1x16x16x4xf32>
    %25 = vector.shape_cast %24 : vector<1x16x16x4xf32> to vector<16x16x4xf32>
    %26 = vector.shape_cast %25 : vector<16x16x4xf32> to vector<256x4xf32>
    %c0_32 = arith.constant 0 : index
    %c24 = arith.constant 24 : index
    %27 = vector.load %arg5[%c0_32, %c24] : memref<256x36xf32, #tpu.memory_space<vmem>>, vector<256x4xf32>
    tpu.vector_store %arg5[%c0_32, %c24], %26 {strides = array<i32>} : memref<256x36xf32, #tpu.memory_space<vmem>>, vector<256x4xf32>,
    %c0_33 = arith.constant 0 : index
    %c2_34 = arith.constant 2 : index
    %c1_35 = arith.constant 1 : index
    %c0_36 = arith.constant 0 : index
    %28 = vector.load %arg1[%c0_33, %c2_34, %c1_35, %c0_36] : memref<1x18x18x4xf32, #tpu.memory_space<vmem>>, vector<1x16x16x4xf32>
    %29 = vector.shape_cast %28 : vector<1x16x16x4xf32> to vector<16x16x4xf32>
    %30 = vector.shape_cast %29 : vector<16x16x4xf32> to vector<256x4xf32>
    %c0_37 = arith.constant 0 : index
    %c28 = arith.constant 28 : index
    %31 = vector.load %arg5[%c0_37, %c28] : memref<256x36xf32, #tpu.memory_space<vmem>>, vector<256x4xf32>
    tpu.vector_store %arg5[%c0_37, %c28], %30 {strides = array<i32>} : memref<256x36xf32, #tpu.memory_space<vmem>>, vector<256x4xf32>,
    %c0_38 = arith.constant 0 : index
    %c2_39 = arith.constant 2 : index
    %c2_40 = arith.constant 2 : index
    %c0_41 = arith.constant 0 : index
    %32 = vector.load %arg1[%c0_38, %c2_39, %c2_40, %c0_41] : memref<1x18x18x4xf32, #tpu.memory_space<vmem>>, vector<1x16x16x4xf32>
    %33 = vector.shape_cast %32 : vector<1x16x16x4xf32> to vector<16x16x4xf32>
    %34 = vector.shape_cast %33 : vector<16x16x4xf32> to vector<256x4xf32>
    %c0_42 = arith.constant 0 : index
    %c32 = arith.constant 32 : index
    %35 = vector.load %arg5[%c0_42, %c32] : memref<256x36xf32, #tpu.memory_space<vmem>>, vector<256x4xf32>
    tpu.vector_store %arg5[%c0_42, %c32], %34 {strides = array<i32>} : memref<256x36xf32, #tpu.memory_space<vmem>>, vector<256x4xf32>,
    %c0_43 = arith.constant 0 : index
    %c0_44 = arith.constant 0 : index
    %36 = vector.load %arg5[%c0_43, %c0_44] : memref<256x36xf32, #tpu.memory_space<vmem>>, vector<256x36xf32>
    %c0_45 = arith.constant 0 : index
    %c0_46 = arith.constant 0 : index
    %37 = vector.load %arg2[%c0_45, %c0_46] : memref<36x32xf32, #tpu.memory_space<vmem>>, vector<36x32xf32>
    %cst = arith.constant dense<0.000000e+00> : vector<256x32xf32>
    %38 = tpu.matmul %36, %37, %cst {dimension_numbers = #tpu.dot_dimension_numbers<[1], [0], [0], [1], [0, 0, 1, 1], [], []>, precision = #tpu.contract_precision<fp32>} : vector<256x36xf32>, vector<36x32xf32>, vector<256x32xf32> -> vector<256x32xf32>
    %c0_47 = arith.constant 0 : index
    %c0_48 = arith.constant 0 : index
    %c0_49 = arith.constant 0 : index
    %39 = vector.load %arg3[%c0_47, %c0_48, %c0_49] : memref<1x256x32xf32, #tpu.memory_space<vmem>>, vector<1x256x32xf32>
    %40 = vector.shape_cast %39 : vector<1x256x32xf32> to vector<256x32xf32>
    %41 = vector.shape_cast %38 : vector<256x32xf32> to vector<1x256x32xf32>
    tpu.vector_store %arg3[%c0_47, %c0_48, %c0_49], %41 {strides = array<i32>} : memref<1x256x32xf32, #tpu.memory_space<vmem>>, vector<1x256x32xf32>,
    %cst_50 = arith.constant dense<0.000000e+00> : vector<32xf32>
    %42 = vector.multi_reduction <add>, %38, %cst_50 [0] : vector<256x32xf32> to vector<32xf32>
    %43 = vector.shape_cast %42 : vector<32xf32> to vector<1x32xf32>
    %c0_51 = arith.constant 0 : index
    %c0_52 = arith.constant 0 : index
    %c0_53 = arith.constant 0 : index
    %44 = vector.load %arg4[%c0_51, %c0_52, %c0_53] : memref<1x2x32xf32, #tpu.memory_space<vmem>>, vector<1x1x32xf32>
    %45 = vector.shape_cast %44 : vector<1x1x32xf32> to vector<1x32xf32>
    %46 = vector.shape_cast %43 : vector<1x32xf32> to vector<1x1x32xf32>
    tpu.vector_store %arg4[%c0_51, %c0_52, %c0_53], %46 {strides = array<i32>} : memref<1x2x32xf32, #tpu.memory_space<vmem>>, vector<1x1x32xf32>,
    %47 = arith.mulf %38, %38 : vector<256x32xf32>
    %cst_54 = arith.constant dense<0.000000e+00> : vector<32xf32>
    %48 = vector.multi_reduction <add>, %47, %cst_54 [0] : vector<256x32xf32> to vector<32xf32>
    %49 = vector.shape_cast %48 : vector<32xf32> to vector<1x32xf32>
    %c0_55 = arith.constant 0 : index
    %c1_56 = arith.constant 1 : index
    %c0_57 = arith.constant 0 : index
    %50 = vector.load %arg4[%c0_55, %c1_56, %c0_57] : memref<1x2x32xf32, #tpu.memory_space<vmem>>, vector<1x1x32xf32>
    %51 = vector.shape_cast %50 : vector<1x1x32xf32> to vector<1x32xf32>
    %52 = vector.shape_cast %49 : vector<1x32xf32> to vector<1x1x32xf32>
    tpu.vector_store %arg4[%c0_55, %c1_56, %c0_57], %52 {strides = array<i32>} : memref<1x2x32xf32, #tpu.memory_space<vmem>>, vector<1x1x32xf32>,
    return
  }
  func.func @transform_0(%arg0: i32) -> (i32, i32, i32, i32) {
    %c0_i32 = arith.constant 0 : i32
    %c0_i32_0 = arith.constant 0 : i32
    %c0_i32_1 = arith.constant 0 : i32
    %c0_i32_2 = arith.constant 0 : i32
    return %arg0, %c0_i32, %c0_i32_0, %c0_i32_1 : i32, i32, i32, i32
  }
  func.func @transform_1(%arg0: i32) -> (i32, i32) {
    %c0_i32 = arith.constant 0 : i32
    %c0_i32_0 = arith.constant 0 : i32
    %c0_i32_1 = arith.constant 0 : i32
    return %c0_i32, %c0_i32_0 : i32, i32
  }
  func.func @transform_2(%arg0: i32) -> (i32, i32, i32) {
    %c0_i32 = arith.constant 0 : i32
    %c0_i32_0 = arith.constant 0 : i32
    %c0_i32_1 = arith.constant 0 : i32
    return %arg0, %c0_i32, %c0_i32_0 : i32, i32, i32
  }
  func.func @transform_3(%arg0: i32) -> (i32, i32, i32) {
    %c0_i32 = arith.constant 0 : i32
    %c0_i32_0 = arith.constant 0 : i32
    %c0_i32_1 = arith.constant 0 : i32
    return %arg0, %c0_i32, %c0_i32_0 : i32, i32, i32
  }
}

</mosaic_0001>

<llo_original>
// kernel: squeeze.3
$region0: #{squeeze.3}
  %s0 = inlined_call_operand.vmem [shape: f32[32], index: 0, kind: input, shape index: {}]
  %s1 = inlined_call_operand.vmem [shape: f32[4,8], index: 1, kind: output, shape index: {}]
  $region1: #{squeeze.3} parent=0
    #allocation0 [shape = 'u8[4096]{0}', space=vmem, size = 0x1000, scoped, tag = 'scoped mem for output reshape']
    #allocation1 [shape = 'u8[4096]{0}', space=vmem, size = 0x1000, scoped, tag = 'scoped mem for input reshape']
    %s3 = sshllo.u32 0, 1
    %v4 = vld [vmem:[%s0] sm:%s3]
    %5 = vst [vmem:[#allocation1] sm:%s3] %v4
    %v6 = vld [vmem:[#allocation1] sm:$0x1]
    %vm7 = vcmask 64512
    %8 = vst.msk [vmem:[#allocation0] sm:$0x1] %vm7, %v6
    %v9 = vld [vmem:[#allocation1] sm:$0x1]
    %10 = vrot.lane.b32.xlu0 %v9, 120
    %v11 = vpop.permute.xlu0 %10
    %vm12 = vcmask 64512
    %s13 = scalar_lea.vmem [#allocation0], 1
    %14 = vst.msk [vmem:[%s13] sm:$0x1] %vm12, %v11
    %v15 = vld [vmem:[#allocation1] sm:$0x1]
    %16 = vrot.lane.b32.xlu0 %v15, 112
    %v17 = vpop.permute.xlu0 %16
    %vm18 = vcmask 64512
    %s19 = scalar_lea.vmem [#allocation0], 2
    %20 = vst.msk [vmem:[%s19] sm:$0x1] %vm18, %v17
    %v21 = vld [vmem:[#allocation1] sm:$0x1]
    %22 = vrot.lane.b32.xlu0 %v21, 104
    %v23 = vpop.permute.xlu0 %22
    %vm24 = vcmask 64512
    %s25 = scalar_lea.vmem [#allocation0], 3
    %26 = vst.msk [vmem:[%s25] sm:$0x1] %vm24, %v23
    %s28 = sshllo.u32 0, 4
    %v30 = vld [vmem:[#allocation0] sm:%s28]
    %s31 = sshllo.u32 0, 4
    %32 = vst [vmem:[%s1] sm:%s31] %v30

// kernel: up_block_forward.1
$region0: #{up_block_forward.1}
  #allocation0 [shape = 'u32[]', space=smem, size = 0x4, offset = 0x4, fixed_abs, tag = 'smem constant byte address 0x4 - core index']
  #allocation1 [shape = 'u32[144,128]{1,0:T(1,128)}', space=vmem, size = 0x12000, scoped, tag = 'internal scratch']
  #allocation2 [shape = 'f32[256,36]{1,0:T(8,128)}', space=vmem, size = 0x20000, scoped, tag = 'scratch operand']
  %s0 = inlined_call_operand.vmem [shape: f32[2,18,18,4], index: 0, kind: input, shape index: {}]
  %s1 = inlined_call_operand.vmem [shape: f32[36,32], index: 1, kind: input, shape index: {}]
  %s2 = inlined_call_operand.vmem [shape: f32[2,256,32], index: 2, kind: output, shape index: {0}]
  %s3 = inlined_call_operand.vmem [shape: f32[2,2,32], index: 3, kind: output, shape index: {1}]
  %4 = xla_tuple %s2, %s3
  %s5 = sld [smem:[#allocation0]]
  $region49: #{up_block_forward.1} parent=0
    _
  %s7 = ssub.s32 1, %s5
  %s8 = scalar_select 0, %s7, %s5
  loop: start=0, step=1, limit=4
  $region2: #{up_block_forward.1} parent=0 // loop_pre_header
    _
  $region3: #{up_block_forward.1} parent=0 // loop_header
    %s10 = sphi 0, %s14
    %p11 = scmp.ge.s32.totalorder %s10, 4
    %s20 = sphi 0, %s22
    %s23 = sphi 0, %s20
    %s24 = sphi 0, %s23
    %s40 = sphi 0, %s24
    %s44 = sphi 0, %s44
    %s46 = sphi 0, %s44
    %s47 = sphi 0, %s46
    %s61 = sphi 0, %s47
    %s67 = sphi 0, %s69
    %s70 = sphi 0, %s67
    %s71 = sphi 0, %s70
    %s87 = sphi 0, %s71
    %s93 = sphi 0, %s95
    %s96 = sphi 0, %s93
    %s97 = sphi 0, %s96
    %s113 = sphi 0, %s97
  $region4: #{up_block_forward.1} parent=0 // loop_header_branch
    %13 = sbr.rel (%p11) target = $region8
  $region5: #{up_block_forward.1} parent=0 // loop_body
    %s15 = ssub.s32 %s10, 1
    %s16 = ssub.s32 %s10, 2
    %s17 = sadd.s32 %s10, 1
    %s18 = ssub.s32 %s10, %s17
    %p19 = scmp.eq.s32.totalorder %s18, 0
    %s21 = sadd.s32 %s20, 1
    %s22 = scalar_select %p19, %s20, %s21
    %p25 = pneg %p19
    %p26 = scmp.eq.s32.totalorder %s10, 1
    %p27 = por %p25, %p26
    %p28 = scmp.ne.s32.totalorder %s20, %s23
    %p29 = scmp.eq.s32.totalorder %s10, 0
    %p30 = por %p28, %p29
    %p31 = scmp.ne.s32.totalorder %s20, %s23
    %p32 = scmp.eq.s32.totalorder %s15, 1
    %p33 = por %p31, %p32
    %p34 = scmp.ne.s32.totalorder %s23, %s24
    %p35 = scmp.eq.s32.totalorder %s15, 0
    %p36 = por %p34, %p35
    %p37 = scmp.ne.s32.totalorder %s23, %s24
    %p38 = scmp.eq.s32.totalorder %s16, 1
    %p39 = por %p37, %p38
    %p41 = scmp.ne.s32.totalorder %s24, %s40
    %p42 = scmp.eq.s32.totalorder %s16, 0
    %p43 = por %p41, %p42
    %s45 = sadd.s32 %s44, 1
    %p48 = scmp.eq.s32.totalorder %s10, 1
    %p49 = scmp.ne.s32.totalorder %s44, %s46
    %p50 = scmp.eq.s32.totalorder %s10, 0
    %p51 = por %p49, %p50
    %p52 = scmp.ne.s32.totalorder %s44, %s46
    %p53 = scmp.eq.s32.totalorder %s15, 1
    %p54 = por %p52, %p53
    %p55 = scmp.ne.s32.totalorder %s46, %s47
    %p56 = scmp.eq.s32.totalorder %s15, 0
    %p57 = por %p55, %p56
    %p58 = scmp.ne.s32.totalorder %s46, %s47
    %p59 = scmp.eq.s32.totalorder %s16, 1
    %p60 = por %p58, %p59
    %p62 = scmp.ne.s32.totalorder %s47, %s61
    %p63 = scmp.eq.s32.totalorder %s16, 0
    %p64 = por %p62, %p63
    %s65 = ssub.s32 %s10, %s17
    %p66 = scmp.eq.s32.totalorder %s65, 0
    %s68 = sadd.s32 %s67, 1
    %s69 = scalar_select %p66, %s67, %s68
    %p72 = pneg %p66
    %p73 = scmp.eq.s32.totalorder %s10, 1
    %p74 = por %p72, %p73
    %p75 = scmp.ne.s32.totalorder %s67, %s70
    %p76 = scmp.eq.s32.totalorder %s10, 0
    %p77 = por %p75, %p76
    %p78 = scmp.ne.s32.totalorder %s67, %s70
    %p79 = scmp.eq.s32.totalorder %s15, 1
    %p80 = por %p78, %p79
    %p81 = scmp.ne.s32.totalorder %s70, %s71
    %p82 = scmp.eq.s32.totalorder %s15, 0
    %p83 = por %p81, %p82
    %p84 = scmp.ne.s32.totalorder %s70, %s71
    %p85 = scmp.eq.s32.totalorder %s16, 1
    %p86 = por %p84, %p85
    %p88 = scmp.ne.s32.totalorder %s71, %s87
    %p89 = scmp.eq.s32.totalorder %s16, 0
    %p90 = por %p88, %p89
    %s91 = ssub.s32 %s10, %s17
    %p92 = scmp.eq.s32.totalorder %s91, 0
    %s94 = sadd.s32 %s93, 1
    %s95 = scalar_select %p92, %s93, %s94
    %p98 = pneg %p92
    %p99 = scmp.eq.s32.totalorder %s10, 1
    %p100 = por %p98, %p99
    %p101 = scmp.ne.s32.totalorder %s93, %s96
    %p102 = scmp.eq.s32.totalorder %s10, 0
    %p103 = por %p101, %p102
    %p104 = scmp.ne.s32.totalorder %s93, %s96
    %p105 = scmp.eq.s32.totalorder %s15, 1
    %p106 = por %p104, %p105
    %p107 = scmp.ne.s32.totalorder %s96, %s97
    %p108 = scmp.eq.s32.totalorder %s15, 0
    %p109 = por %p107, %p108
    %p110 = scmp.ne.s32.totalorder %s96, %s97
    %p111 = scmp.eq.s32.totalorder %s16, 1
    %p112 = por %p110, %p111
    %p114 = scmp.ne.s32.totalorder %s97, %s113
    %p115 = scmp.eq.s32.totalorder %s16, 0
    %p116 = por %p114, %p115
    %p117 = scmp.le.s32.totalorder 1, %s10
    %p118 = scmp.lt.s32.totalorder %s10, 3
    %p119 = pnand %p117, %p118
    %p120 = pneg %p119
    // Predicated region
    $region9: #{up_block_forward.1} parent=5 // pred_check
      _
    $region10: #{up_block_forward.1} parent=5 // pred_check_branch
      %122 = sbr.rel (%p119) target = $region12
    $region11: #{up_block_forward.1} parent=5 // pred_region
      %s123 = ssub.s32 %s10, 1
      // Predicated region
      $region13: #{up_block_forward.1} parent=11 // pred_check
        %p124 = pneg %p57
      $region14: #{up_block_forward.1} parent=11 // pred_check_branch
        %126 = sbr.rel (%p124) target = $region16
      $region15: #{up_block_forward.1} parent=11 // pred_region
        _
      $region16: #{up_block_forward.1} parent=11 // pred_fallthru
        _
    $region12: #{up_block_forward.1} parent=5 // pred_fallthru
      _
    %p127 = scmp.lt.s32.totalorder %s10, 2
    // Predicated region
    $region17: #{up_block_forward.1} parent=5 // pred_check
      %p128 = pneg %p127
    $region18: #{up_block_forward.1} parent=5 // pred_check_branch
      %130 = sbr.rel (%p128) target = $region20
    $region19: #{up_block_forward.1} parent=5 // pred_region
      // Predicated region
      $region21: #{up_block_forward.1} parent=19 // pred_check
        %p131 = pneg %p30
      $region22: #{up_block_forward.1} parent=19 // pred_check_branch
        %133 = sbr.rel (%p131) target = $region24
      $region23: #{up_block_forward.1} parent=19 // pred_region
        %p134 = scmp.lt.s32.totalorder %s10, 1
        %s135 = scalar_select %p134, %s10, 1
        %s136 = smul.addr %s135, 54
        %s137 = smul.addr %s136, 8
        %s138 = scalar_lea.vmem %s0, %s137
      $region24: #{up_block_forward.1} parent=19 // pred_fallthru
        _
    $region20: #{up_block_forward.1} parent=5 // pred_fallthru
      _
    %p139 = scmp.le.s32.totalorder 1, %s10
    %p140 = scmp.lt.s32.totalorder %s10, 3
    %p141 = pnand %p139, %p140
    %p142 = pneg %p141
    // Predicated region
    $region25: #{up_block_forward.1} parent=5 // pred_check
      _
    $region26: #{up_block_forward.1} parent=5 // pred_check_branch
      %144 = sbr.rel (%p141) target = $region28
    $region27: #{up_block_forward.1} parent=5 // pred_region
      %s145 = ssub.s32 %s10, 1
      %p146 = scmp.lt.s32.totalorder %s15, 1
      %s147 = scalar_select %p146, %s15, 1
      %s148 = smul.addr %s147, 54
      %s149 = smul.addr %s148, 8
      %s150 = scalar_lea.vmem %s0, %s149
      %p151 = pneg %p36
      %p152 = pneg %p33
      %p153 = pneg %p57
      %p154 = pneg %p54
      %p155 = pneg %p83
      %p156 = pneg %p80
      %p157 = scmp.lt.s32.totalorder %s15, 1
      %s158 = scalar_select %p157, %s15, 1
      %s159 = smul.addr %s158, 32
      %s160 = smul.addr %s159, 8
      %s161 = scalar_lea.vmem %s2, %s160
      %p162 = pneg %p109
      %p163 = pneg %p106
      %p164 = scmp.lt.s32.totalorder %s15, 1
      %s165 = scalar_select %p164, %s15, 1
      %s166 = smul.addr %s165, 2
      %s167 = scalar_lea.vmem %s3, %s166
      %p168 = scmp.lt.s32.totalorder %s15, 1
      %s169 = scalar_select %p168, %s15, 1
      %s170 = smul.addr %s169, 54
      %s171 = smul.addr %s170, 8
      %s172 = scalar_lea.vmem %s0, %s171
      %p173 = scmp.lt.s32.totalorder %s15, 1
      %s174 = scalar_select %p173, %s15, 1
      %s175 = smul.addr %s174, 32
      %s176 = smul.addr %s175, 8
      %s177 = scalar_lea.vmem %s2, %s176
      %p178 = scmp.lt.s32.totalorder %s15, 1
      %s179 = scalar_select %p178, %s15, 1
      %s180 = smul.addr %s179, 2
      %s181 = scalar_lea.vmem %s3, %s180
      %v182 = vld [vmem:[%s172] sm:$0xff]
      %v183 = vld [vmem:[%s172 + $0x8] sm:$0xff]
      %v184 = vld [vmem:[%s172 + $0x18] sm:$0xff]
      %v185 = vld [vmem:[%s172 + $0x20] sm:$0xff]
      %v186 = vld [vmem:[%s172 + $0x30] sm:$0xff]
      %v187 = vld [vmem:[%s172 + $0x38] sm:$0xff]
      %v188 = vld [vmem:[%s172 + $0x48] sm:$0xff]
      %v189 = vld [vmem:[%s172 + $0x50] sm:$0xff]
      %v190 = vld [vmem:[%s172 + $0x60] sm:$0xff]
      %v191 = vld [vmem:[%s172 + $0x68] sm:$0xff]
      %v192 = vld [vmem:[%s172 + $0x78] sm:$0xff]
      %v193 = vld [vmem:[%s172 + $0x80] sm:$0xff]
      %v194 = vld [vmem:[%s172 + $0x90] sm:$0xff]
      %v195 = vld [vmem:[%s172 + $0x98] sm:$0xff]
      %v196 = vld [vmem:[%s172 + $0xa8] sm:$0xff]
      %v197 = vld [vmem:[%s172 + $0xb0] sm:$0xff]
      %v198 = vld [vmem:[%s172 + $0xc0] sm:$0xff]
      %v199 = vld [vmem:[%s172 + $0xc8] sm:$0xff]
      %v200 = vld [vmem:[%s172 + $0xd8] sm:$0xff]
      %v201 = vld [vmem:[%s172 + $0xe0] sm:$0xff]
      %v202 = vld [vmem:[%s172 + $0xf0] sm:$0xff]
      %v203 = vld [vmem:[%s172 + $0xf8] sm:$0xff]
      %v204 = vld [vmem:[%s172 + $0x108] sm:$0xff]
      %v205 = vld [vmem:[%s172 + $0x110] sm:$0xff]
      %v206 = vld [vmem:[%s172 + $0x120] sm:$0xff]
      %v207 = vld [vmem:[%s172 + $0x128] sm:$0xff]
      %v208 = vld [vmem:[%s172 + $0x138] sm:$0xff]
      %v209 = vld [vmem:[%s172 + $0x140] sm:$0xff]
      %v210 = vld [vmem:[%s172 + $0x150] sm:$0xff]
      %v211 = vld [vmem:[%s172 + $0x158] sm:$0xff]
      %v212 = vld [vmem:[%s172 + $0x168] sm:$0xff]
      %v213 = vld [vmem:[%s172 + $0x170] sm:$0xff]
      %vm214 = vcmask 31744
      %215 = vst.msk [vmem:[#allocation2] sm:$0xff] %vm214, %v182
      %216 = vst.msk [vmem:[#allocation2 + $0x8] sm:$0xff] %vm214, %v183
      %217 = vst.msk [vmem:[#allocation2 + $0x10] sm:$0xff] %vm214, %v184
      %218 = vst.msk [vmem:[#allocation2 + $0x18] sm:$0xff] %vm214, %v185
      %219 = vst.msk [vmem:[#allocation2 + $0x20] sm:$0xff] %vm214, %v186
      %220 = vst.msk [vmem:[#allocation2 + $0x28] sm:$0xff] %vm214, %v187
      %221 = vst.msk [vmem:[#allocation2 + $0x30] sm:$0xff] %vm214, %v188
      %222 = vst.msk [vmem:[#allocation2 + $0x38] sm:$0xff] %vm214, %v189
      %223 = vst.msk [vmem:[#allocation2 + $0x40] sm:$0xff] %vm214, %v190
      %224 = vst.msk [vmem:[#allocation2 + $0x48] sm:$0xff] %vm214, %v191
      %225 = vst.msk [vmem:[#allocation2 + $0x50] sm:$0xff] %vm214, %v192
      %226 = vst.msk [vmem:[#allocation2 + $0x58] sm:$0xff] %vm214, %v193
      %227 = vst.msk [vmem:[#allocation2 + $0x60] sm:$0xff] %vm214, %v194
      %228 = vst.msk [vmem:[#allocation2 + $0x68] sm:$0xff] %vm214, %v195
      %229 = vst.msk [vmem:[#allocation2 + $0x70] sm:$0xff] %vm214, %v196
      %230 = vst.msk [vmem:[#allocation2 + $0x78] sm:$0xff] %vm214, %v197
      %231 = vst.msk [vmem:[#allocation2 + $0x80] sm:$0xff] %vm214, %v198
      %232 = vst.msk [vmem:[#allocation2 + $0x88] sm:$0xff] %vm214, %v199
      %233 = vst.msk [vmem:[#allocation2 + $0x90] sm:$0xff] %vm214, %v200
      %234 = vst.msk [vmem:[#allocation2 + $0x98] sm:$0xff] %vm214, %v201
      %235 = vst.msk [vmem:[#allocation2 + $0xa0] sm:$0xff] %vm214, %v202
      %236 = vst.msk [vmem:[#allocation2 + $0xa8] sm:$0xff] %vm214, %v203
      %237 = vst.msk [vmem:[#allocation2 + $0xb0] sm:$0xff] %vm214, %v204
      %238 = vst.msk [vmem:[#allocation2 + $0xb8] sm:$0xff] %vm214, %v205
      %239 = vst.msk [vmem:[#allocation2 + $0xc0] sm:$0xff] %vm214, %v206
      %240 = vst.msk [vmem:[#allocation2 + $0xc8] sm:$0xff] %vm214, %v207
      %241 = vst.msk [vmem:[#allocation2 + $0xd0] sm:$0xff] %vm214, %v208
      %242 = vst.msk [vmem:[#allocation2 + $0xd8] sm:$0xff] %vm214, %v209
      %243 = vst.msk [vmem:[#allocation2 + $0xe0] sm:$0xff] %vm214, %v210
      %244 = vst.msk [vmem:[#allocation2 + $0xe8] sm:$0xff] %vm214, %v211
      %245 = vst.msk [vmem:[#allocation2 + $0xf0] sm:$0xff] %vm214, %v212
      %246 = vst.msk [vmem:[#allocation2 + $0xf8] sm:$0xff] %vm214, %v213
      %v247 = vld [vmem:[%s172 + $0x1] sm:$0xff]
      %v248 = vld [vmem:[%s172 + $0x9] sm:$0xff]
      %v249 = vld [vmem:[%s172 + $0x19] sm:$0xff]
      %v250 = vld [vmem:[%s172 + $0x21] sm:$0xff]
      %v251 = vld [vmem:[%s172 + $0x31] sm:$0xff]
      %v252 = vld [vmem:[%s172 + $0x39] sm:$0xff]
      %v253 = vld [vmem:[%s172 + $0x49] sm:$0xff]
      %v254 = vld [vmem:[%s172 + $0x51] sm:$0xff]
      %v255 = vld [vmem:[%s172 + $0x61] sm:$0xff]
      %v256 = vld [vmem:[%s172 + $0x69] sm:$0xff]
      %v257 = vld [vmem:[%s172 + $0x79] sm:$0xff]
      %v258 = vld [vmem:[%s172 + $0x81] sm:$0xff]
      %v259 = vld [vmem:[%s172 + $0x91] sm:$0xff]
      %v260 = vld [vmem:[%s172 + $0x99] sm:$0xff]
      %v261 = vld [vmem:[%s172 + $0xa9] sm:$0xff]
      %v262 = vld [vmem:[%s172 + $0xb1] sm:$0xff]
      %v263 = vld [vmem:[%s172 + $0xc1] sm:$0xff]
      %v264 = vld [vmem:[%s172 + $0xc9] sm:$0xff]
      %v265 = vld [vmem:[%s172 + $0xd9] sm:$0xff]
      %v266 = vld [vmem:[%s172 + $0xe1] sm:$0xff]
      %v267 = vld [vmem:[%s172 + $0xf1] sm:$0xff]
      %v268 = vld [vmem:[%s172 + $0xf9] sm:$0xff]
      %v269 = vld [vmem:[%s172 + $0x109] sm:$0xff]
      %v270 = vld [vmem:[%s172 + $0x111] sm:$0xff]
      %v271 = vld [vmem:[%s172 + $0x121] sm:$0xff]
      %v272 = vld [vmem:[%s172 + $0x129] sm:$0xff]
      %v273 = vld [vmem:[%s172 + $0x139] sm:$0xff]
      %v274 = vld [vmem:[%s172 + $0x141] sm:$0xff]
      %v275 = vld [vmem:[%s172 + $0x151] sm:$0xff]
      %v276 = vld [vmem:[%s172 + $0x159] sm:$0xff]
      %v277 = vld [vmem:[%s172 + $0x169] sm:$0xff]
      %v278 = vld [vmem:[%s172 + $0x171] sm:$0xff]
      %311 = vrot.lane.b32.xlu0 %v247, 4
      %v312 = vpop.permute.xlu0 %311
      %313 = vrot.lane.b32.xlu0 %v248, 4
      %v314 = vpop.permute.xlu0 %313
      %315 = vrot.lane.b32.xlu0 %v249, 4
      %v316 = vpop.permute.xlu0 %315
      %317 = vrot.lane.b32.xlu0 %v250, 4
      %v318 = vpop.permute.xlu0 %317
      %319 = vrot.lane.b32.xlu0 %v251, 4
      %v320 = vpop.permute.xlu0 %319
      %321 = vrot.lane.b32.xlu0 %v252, 4
      %v322 = vpop.permute.xlu0 %321
      %323 = vrot.lane.b32.xlu0 %v253, 4
      %v324 = vpop.permute.xlu0 %323
      %325 = vrot.lane.b32.xlu0 %v254, 4
      %v326 = vpop.permute.xlu0 %325
      %327 = vrot.lane.b32.xlu0 %v255, 4
      %v328 = vpop.permute.xlu0 %327
      %329 = vrot.lane.b32.xlu0 %v256, 4
      %v330 = vpop.permute.xlu0 %329
      %331 = vrot.lane.b32.xlu0 %v257, 4
      %v332 = vpop.permute.xlu0 %331
      %333 = vrot.lane.b32.xlu0 %v258, 4
      %v334 = vpop.permute.xlu0 %333
      %335 = vrot.lane.b32.xlu0 %v259, 4
      %v336 = vpop.permute.xlu0 %335
      %337 = vrot.lane.b32.xlu0 %v260, 4
      %v338 = vpop.permute.xlu0 %337
      %339 = vrot.lane.b32.xlu0 %v261, 4
      %v340 = vpop.permute.xlu0 %339
      %341 = vrot.lane.b32.xlu0 %v262, 4
      %v342 = vpop.permute.xlu0 %341
      %343 = vrot.lane.b32.xlu0 %v263, 4
      %v344 = vpop.permute.xlu0 %343
      %345 = vrot.lane.b32.xlu0 %v264, 4
      %v346 = vpop.permute.xlu0 %345
      %347 = vrot.lane.b32.xlu0 %v265, 4
      %v348 = vpop.permute.xlu0 %347
      %349 = vrot.lane.b32.xlu0 %v266, 4
      %v350 = vpop.permute.xlu0 %349
      %351 = vrot.lane.b32.xlu0 %v267, 4
      %v352 = vpop.permute.xlu0 %351
      %353 = vrot.lane.b32.xlu0 %v268, 4
      %v354 = vpop.permute.xlu0 %353
      %355 = vrot.lane.b32.xlu0 %v269, 4
      %v356 = vpop.permute.xlu0 %355
      %357 = vrot.lane.b32.xlu0 %v270, 4
      %v358 = vpop.permute.xlu0 %357
      %359 = vrot.lane.b32.xlu0 %v271, 4
      %v360 = vpop.permute.xlu0 %359
      %361 = vrot.lane.b32.xlu0 %v272, 4
      %v362 = vpop.permute.xlu0 %361
      %363 = vrot.lane.b32.xlu0 %v273, 4
      %v364 = vpop.permute.xlu0 %363
      %365 = vrot.lane.b32.xlu0 %v274, 4
      %v366 = vpop.permute.xlu0 %365
      %367 = vrot.lane.b32.xlu0 %v275, 4
      %v368 = vpop.permute.xlu0 %367
      %369 = vrot.lane.b32.xlu0 %v276, 4
      %v370 = vpop.permute.xlu0 %369
      %371 = vrot.lane.b32.xlu0 %v277, 4
      %v372 = vpop.permute.xlu0 %371
      %373 = vrot.lane.b32.xlu0 %v278, 4
      %v374 = vpop.permute.xlu0 %373
      %vm407 = vcmask 64544
      %408 = vst.msk [vmem:[#allocation2] sm:$0xff] %vm407, %v312
      %409 = vst.msk [vmem:[#allocation2 + $0x8] sm:$0xff] %vm407, %v314
      %410 = vst.msk [vmem:[#allocation2 + $0x10] sm:$0xff] %vm407, %v316
      %411 = vst.msk [vmem:[#allocation2 + $0x18] sm:$0xff] %vm407, %v318
      %412 = vst.msk [vmem:[#allocation2 + $0x20] sm:$0xff] %vm407, %v320
      %413 = vst.msk [vmem:[#allocation2 + $0x28] sm:$0xff] %vm407, %v322
      %414 = vst.msk [vmem:[#allocation2 + $0x30] sm:$0xff] %vm407, %v324
      %415 = vst.msk [vmem:[#allocation2 + $0x38] sm:$0xff] %vm407, %v326
      %416 = vst.msk [vmem:[#allocation2 + $0x40] sm:$0xff] %vm407, %v328
      %417 = vst.msk [vmem:[#allocation2 + $0x48] sm:$0xff] %vm407, %v330
      %418 = vst.msk [vmem:[#allocation2 + $0x50] sm:$0xff] %vm407, %v332
      %419 = vst.msk [vmem:[#allocation2 + $0x58] sm:$0xff] %vm407, %v334
      %420 = vst.msk [vmem:[#allocation2 + $0x60] sm:$0xff] %vm407, %v336
      %421 = vst.msk [vmem:[#allocation2 + $0x68] sm:$0xff] %vm407, %v338
      %422 = vst.msk [vmem:[#allocation2 + $0x70] sm:$0xff] %vm407, %v340
      %423 = vst.msk [vmem:[#allocation2 + $0x78] sm:$0xff] %vm407, %v342
      %424 = vst.msk [vmem:[#allocation2 + $0x80] sm:$0xff] %vm407, %v344
      %425 = vst.msk [vmem:[#allocation2 + $0x88] sm:$0xff] %vm407, %v346
      %426 = vst.msk [vmem:[#allocation2 + $0x90] sm:$0xff] %vm407, %v348
      %427 = vst.msk [vmem:[#allocation2 + $0x98] sm:$0xff] %vm407, %v350
      %428 = vst.msk [vmem:[#allocation2 + $0xa0] sm:$0xff] %vm407, %v352
      %429 = vst.msk [vmem:[#allocation2 + $0xa8] sm:$0xff] %vm407, %v354
      %430 = vst.msk [vmem:[#allocation2 + $0xb0] sm:$0xff] %vm407, %v356
      %431 = vst.msk [vmem:[#allocation2 + $0xb8] sm:$0xff] %vm407, %v358
      %432 = vst.msk [vmem:[#allocation2 + $0xc0] sm:$0xff] %vm407, %v360
      %433 = vst.msk [vmem:[#allocation2 + $0xc8] sm:$0xff] %vm407, %v362
      %434 = vst.msk [vmem:[#allocation2 + $0xd0] sm:$0xff] %vm407, %v364
      %435 = vst.msk [vmem:[#allocation2 + $0xd8] sm:$0xff] %vm407, %v366
      %436 = vst.msk [vmem:[#allocation2 + $0xe0] sm:$0xff] %vm407, %v368
      %437 = vst.msk [vmem:[#allocation2 + $0xe8] sm:$0xff] %vm407, %v370
      %438 = vst.msk [vmem:[#allocation2 + $0xf0] sm:$0xff] %vm407, %v372
      %439 = vst.msk [vmem:[#allocation2 + $0xf8] sm:$0xff] %vm407, %v374
      %v440 = vld [vmem:[%s172 + $0x2] sm:$0xff]
      %v441 = vld [vmem:[%s172 + $0xa] sm:$0xff]
      %v442 = vld [vmem:[%s172 + $0x1a] sm:$0xff]
      %v443 = vld [vmem:[%s172 + $0x22] sm:$0xff]
      %v444 = vld [vmem:[%s172 + $0x32] sm:$0xff]
      %v445 = vld [vmem:[%s172 + $0x3a] sm:$0xff]
      %v446 = vld [vmem:[%s172 + $0x4a] sm:$0xff]
      %v447 = vld [vmem:[%s172 + $0x52] sm:$0xff]
      %v448 = vld [vmem:[%s172 + $0x62] sm:$0xff]
      %v449 = vld [vmem:[%s172 + $0x6a] sm:$0xff]
      %v450 = vld [vmem:[%s172 + $0x7a] sm:$0xff]
      %v451 = vld [vmem:[%s172 + $0x82] sm:$0xff]
      %v452 = vld [vmem:[%s172 + $0x92] sm:$0xff]
      %v453 = vld [vmem:[%s172 + $0x9a] sm:$0xff]
      %v454 = vld [vmem:[%s172 + $0xaa] sm:$0xff]
      %v455 = vld [vmem:[%s172 + $0xb2] sm:$0xff]
      %v456 = vld [vmem:[%s172 + $0xc2] sm:$0xff]
      %v457 = vld [vmem:[%s172 + $0xca] sm:$0xff]
      %v458 = vld [vmem:[%s172 + $0xda] sm:$0xff]
      %v459 = vld [vmem:[%s172 + $0xe2] sm:$0xff]
      %v460 = vld [vmem:[%s172 + $0xf2] sm:$0xff]
      %v461 = vld [vmem:[%s172 + $0xfa] sm:$0xff]
      %v462 = vld [vmem:[%s172 + $0x10a] sm:$0xff]
      %v463 = vld [vmem:[%s172 + $0x112] sm:$0xff]
      %v464 = vld [vmem:[%s172 + $0x122] sm:$0xff]
      %v465 = vld [vmem:[%s172 + $0x12a] sm:$0xff]
      %v466 = vld [vmem:[%s172 + $0x13a] sm:$0xff]
      %v467 = vld [vmem:[%s172 + $0x142] sm:$0xff]
      %v468 = vld [vmem:[%s172 + $0x152] sm:$0xff]
      %v469 = vld [vmem:[%s172 + $0x15a] sm:$0xff]
      %v470 = vld [vmem:[%s172 + $0x16a] sm:$0xff]
      %v471 = vld [vmem:[%s172 + $0x172] sm:$0xff]
      %504 = vrot.lane.b32.xlu0 %v440, 8
      %v505 = vpop.permute.xlu0 %504
      %506 = vrot.lane.b32.xlu0 %v441, 8
      %v507 = vpop.permute.xlu0 %506
      %508 = vrot.lane.b32.xlu0 %v442, 8
      %v509 = vpop.permute.xlu0 %508
      %510 = vrot.lane.b32.xlu0 %v443, 8
      %v511 = vpop.permute.xlu0 %510
      %512 = vrot.lane.b32.xlu0 %v444, 8
      %v513 = vpop.permute.xlu0 %512
      %514 = vrot.lane.b32.xlu0 %v445, 8
      %v515 = vpop.permute.xlu0 %514
      %516 = vrot.lane.b32.xlu0 %v446, 8
      %v517 = vpop.permute.xlu0 %516
      %518 = vrot.lane.b32.xlu0 %v447, 8
      %v519 = vpop.permute.xlu0 %518
      %520 = vrot.lane.b32.xlu0 %v448, 8
      %v521 = vpop.permute.xlu0 %520
      %522 = vrot.lane.b32.xlu0 %v449, 8
      %v523 = vpop.permute.xlu0 %522
      %524 = vrot.lane.b32.xlu0 %v450, 8
      %v525 = vpop.permute.xlu0 %524
      %526 = vrot.lane.b32.xlu0 %v451, 8
      %v527 = vpop.permute.xlu0 %526
      %528 = vrot.lane.b32.xlu0 %v452, 8
      %v529 = vpop.permute.xlu0 %528
      %530 = vrot.lane.b32.xlu0 %v453, 8
      %v531 = vpop.permute.xlu0 %530
      %532 = vrot.lane.b32.xlu0 %v454, 8
      %v533 = vpop.permute.xlu0 %532
      %534 = vrot.lane.b32.xlu0 %v455, 8
      %v535 = vpop.permute.xlu0 %534
      %536 = vrot.lane.b32.xlu0 %v456, 8
      %v537 = vpop.permute.xlu0 %536
      %538 = vrot.lane.b32.xlu0 %v457, 8
      %v539 = vpop.permute.xlu0 %538
      %540 = vrot.lane.b32.xlu0 %v458, 8
      %v541 = vpop.permute.xlu0 %540
      %542 = vrot.lane.b32.xlu0 %v459, 8
      %v543 = vpop.permute.xlu0 %542
      %544 = vrot.lane.b32.xlu0 %v460, 8
      %v545 = vpop.permute.xlu0 %544
      %546 = vrot.lane.b32.xlu0 %v461, 8
      %v547 = vpop.permute.xlu0 %546
      %548 = vrot.lane.b32.xlu0 %v462, 8
      %v549 = vpop.permute.xlu0 %548
      %550 = vrot.lane.b32.xlu0 %v463, 8
      %v551 = vpop.permute.xlu0 %550
      %552 = vrot.lane.b32.xlu0 %v464, 8
      %v553 = vpop.permute.xlu0 %552
      %554 = vrot.lane.b32.xlu0 %v465, 8
      %v555 = vpop.permute.xlu0 %554
      %556 = vrot.lane.b32.xlu0 %v466, 8
      %v557 = vpop.permute.xlu0 %556
      %558 = vrot.lane.b32.xlu0 %v467, 8
      %v559 = vpop.permute.xlu0 %558
      %560 = vrot.lane.b32.xlu0 %v468, 8
      %v561 = vpop.permute.xlu0 %560
      %562 = vrot.lane.b32.xlu0 %v469, 8
      %v563 = vpop.permute.xlu0 %562
      %564 = vrot.lane.b32.xlu0 %v470, 8
      %v565 = vpop.permute.xlu0 %564
      %566 = vrot.lane.b32.xlu0 %v471, 8
      %v567 = vpop.permute.xlu0 %566
      %vm600 = vcmask 97344
      %601 = vst.msk [vmem:[#allocation2] sm:$0xff] %vm600, %v505
      %602 = vst.msk [vmem:[#allocation2 + $0x8] sm:$0xff] %vm600, %v507
      %603 = vst.msk [vmem:[#allocation2 + $0x10] sm:$0xff] %vm600, %v509
      %604 = vst.msk [vmem:[#allocation2 + $0x18] sm:$0xff] %vm600, %v511
      %605 = vst.msk [vmem:[#allocation2 + $0x20] sm:$0xff] %vm600, %v513
      %606 = vst.msk [vmem:[#allocation2 + $0x28] sm:$0xff] %vm600, %v515
      %607 = vst.msk [vmem:[#allocation2 + $0x30] sm:$0xff] %vm600, %v517
      %608 = vst.msk [vmem:[#allocation2 + $0x38] sm:$0xff] %vm600, %v519
      %609 = vst.msk [vmem:[#allocation2 + $0x40] sm:$0xff] %vm600, %v521
      %610 = vst.msk [vmem:[#allocation2 + $0x48] sm:$0xff] %vm600, %v523
      %611 = vst.msk [vmem:[#allocation2 + $0x50] sm:$0xff] %vm600, %v525
      %612 = vst.msk [vmem:[#allocation2 + $0x58] sm:$0xff] %vm600, %v527
      %613 = vst.msk [vmem:[#allocation2 + $0x60] sm:$0xff] %vm600, %v529
      %614 = vst.msk [vmem:[#allocation2 + $0x68] sm:$0xff] %vm600, %v531
      %615 = vst.msk [vmem:[#allocation2 + $0x70] sm:$0xff] %vm600, %v533
      %616 = vst.msk [vmem:[#allocation2 + $0x78] sm:$0xff] %vm600, %v535
      %617 = vst.msk [vmem:[#allocation2 + $0x80] sm:$0xff] %vm600, %v537
      %618 = vst.msk [vmem:[#allocation2 + $0x88] sm:$0xff] %vm600, %v539
      %619 = vst.msk [vmem:[#allocation2 + $0x90] sm:$0xff] %vm600, %v541
      %620 = vst.msk [vmem:[#allocation2 + $0x98] sm:$0xff] %vm600, %v543
      %621 = vst.msk [vmem:[#allocation2 + $0xa0] sm:$0xff] %vm600, %v545
      %622 = vst.msk [vmem:[#allocation2 + $0xa8] sm:$0xff] %vm600, %v547
      %623 = vst.msk [vmem:[#allocation2 + $0xb0] sm:$0xff] %vm600, %v549
      %624 = vst.msk [vmem:[#allocation2 + $0xb8] sm:$0xff] %vm600, %v551
      %625 = vst.msk [vmem:[#allocation2 + $0xc0] sm:$0xff] %vm600, %v553
      %626 = vst.msk [vmem:[#allocation2 + $0xc8] sm:$0xff] %vm600, %v555
      %627 = vst.msk [vmem:[#allocation2 + $0xd0] sm:$0xff] %vm600, %v557
      %628 = vst.msk [vmem:[#allocation2 + $0xd8] sm:$0xff] %vm600, %v559
      %629 = vst.msk [vmem:[#allocation2 + $0xe0] sm:$0xff] %vm600, %v561
      %630 = vst.msk [vmem:[#allocation2 + $0xe8] sm:$0xff] %vm600, %v563
      %631 = vst.msk [vmem:[#allocation2 + $0xf0] sm:$0xff] %vm600, %v565
      %632 = vst.msk [vmem:[#allocation2 + $0xf8] sm:$0xff] %vm600, %v567
      %s633 = scalar_lea.vmem %s172, 24
      %v634 = vld [vmem:[%s633] sm:$0xff]
      %v635 = vld [vmem:[%s633 + $0x8] sm:$0xff]
      %v636 = vld [vmem:[%s633 + $0x18] sm:$0xff]
      %v637 = vld [vmem:[%s633 + $0x20] sm:$0xff]
      %v638 = vld [vmem:[%s633 + $0x30] sm:$0xff]
      %v639 = vld [vmem:[%s633 + $0x38] sm:$0xff]
      %v640 = vld [vmem:[%s633 + $0x48] sm:$0xff]
      %v641 = vld [vmem:[%s633 + $0x50] sm:$0xff]
      %v642 = vld [vmem:[%s633 + $0x60] sm:$0xff]
      %v643 = vld [vmem:[%s633 + $0x68] sm:$0xff]
      %v644 = vld [vmem:[%s633 + $0x78] sm:$0xff]
      %v645 = vld [vmem:[%s633 + $0x80] sm:$0xff]
      %v646 = vld [vmem:[%s633 + $0x90] sm:$0xff]
      %v647 = vld [vmem:[%s633 + $0x98] sm:$0xff]
      %v648 = vld [vmem:[%s633 + $0xa8] sm:$0xff]
      %v649 = vld [vmem:[%s633 + $0xb0] sm:$0xff]
      %v650 = vld [vmem:[%s633 + $0xc0] sm:$0xff]
      %v651 = vld [vmem:[%s633 + $0xc8] sm:$0xff]
      %v652 = vld [vmem:[%s633 + $0xd8] sm:$0xff]
      %v653 = vld [vmem:[%s633 + $0xe0] sm:$0xff]
      %v654 = vld [vmem:[%s633 + $0xf0] sm:$0xff]
      %v655 = vld [vmem:[%s633 + $0xf8] sm:$0xff]
      %v656 = vld [vmem:[%s633 + $0x108] sm:$0xff]
      %v657 = vld [vmem:[%s633 + $0x110] sm:$0xff]
      %v658 = vld [vmem:[%s633 + $0x120] sm:$0xff]
      %v659 = vld [vmem:[%s633 + $0x128] sm:$0xff]
      %v660 = vld [vmem:[%s633 + $0x138] sm:$0xff]
      %v661 = vld [vmem:[%s633 + $0x140] sm:$0xff]
      %v662 = vld [vmem:[%s633 + $0x150] sm:$0xff]
      %v663 = vld [vmem:[%s633 + $0x158] sm:$0xff]
      %v664 = vld [vmem:[%s633 + $0x168] sm:$0xff]
      %v665 = vld [vmem:[%s633 + $0x170] sm:$0xff]
      %698 = vrot.lane.b32.xlu0 %v634, 12
      %v699 = vpop.permute.xlu0 %698
      %700 = vrot.lane.b32.xlu0 %v635, 12
      %v701 = vpop.permute.xlu0 %700
      %702 = vrot.lane.b32.xlu0 %v636, 12
      %v703 = vpop.permute.xlu0 %702
      %704 = vrot.lane.b32.xlu0 %v637, 12
      %v705 = vpop.permute.xlu0 %704
      %706 = vrot.lane.b32.xlu0 %v638, 12
      %v707 = vpop.permute.xlu0 %706
      %708 = vrot.lane.b32.xlu0 %v639, 12
      %v709 = vpop.permute.xlu0 %708
      %710 = vrot.lane.b32.xlu0 %v640, 12
      %v711 = vpop.permute.xlu0 %710
      %712 = vrot.lane.b32.xlu0 %v641, 12
      %v713 = vpop.permute.xlu0 %712
      %714 = vrot.lane.b32.xlu0 %v642, 12
      %v715 = vpop.permute.xlu0 %714
      %716 = vrot.lane.b32.xlu0 %v643, 12
      %v717 = vpop.permute.xlu0 %716
      %718 = vrot.lane.b32.xlu0 %v644, 12
      %v719 = vpop.permute.xlu0 %718
      %720 = vrot.lane.b32.xlu0 %v645, 12
      %v721 = vpop.permute.xlu0 %720
      %722 = vrot.lane.b32.xlu0 %v646, 12
      %v723 = vpop.permute.xlu0 %722
      %724 = vrot.lane.b32.xlu0 %v647, 12
      %v725 = vpop.permute.xlu0 %724
      %726 = vrot.lane.b32.xlu0 %v648, 12
      %v727 = vpop.permute.xlu0 %726
      %728 = vrot.lane.b32.xlu0 %v649, 12
      %v729 = vpop.permute.xlu0 %728
      %730 = vrot.lane.b32.xlu0 %v650, 12
      %v731 = vpop.permute.xlu0 %730
      %732 = vrot.lane.b32.xlu0 %v651, 12
      %v733 = vpop.permute.xlu0 %732
      %734 = vrot.lane.b32.xlu0 %v652, 12
      %v735 = vpop.permute.xlu0 %734
      %736 = vrot.lane.b32.xlu0 %v653, 12
      %v737 = vpop.permute.xlu0 %736
      %738 = vrot.lane.b32.xlu0 %v654, 12
      %v739 = vpop.permute.xlu0 %738
      %740 = vrot.lane.b32.xlu0 %v655, 12
      %v741 = vpop.permute.xlu0 %740
      %742 = vrot.lane.b32.xlu0 %v656, 12
      %v743 = vpop.permute.xlu0 %742
      %744 = vrot.lane.b32.xlu0 %v657, 12
      %v745 = vpop.permute.xlu0 %744
      %746 = vrot.lane.b32.xlu0 %v658, 12
      %v747 = vpop.permute.xlu0 %746
      %748 = vrot.lane.b32.xlu0 %v659, 12
      %v749 = vpop.permute.xlu0 %748
      %750 = vrot.lane.b32.xlu0 %v660, 12
      %v751 = vpop.permute.xlu0 %750
      %752 = vrot.lane.b32.xlu0 %v661, 12
      %v753 = vpop.permute.xlu0 %752
      %754 = vrot.lane.b32.xlu0 %v662, 12
      %v755 = vpop.permute.xlu0 %754
      %756 = vrot.lane.b32.xlu0 %v663, 12
      %v757 = vpop.permute.xlu0 %756
      %758 = vrot.lane.b32.xlu0 %v664, 12
      %v759 = vpop.permute.xlu0 %758
      %760 = vrot.lane.b32.xlu0 %v665, 12
      %v761 = vpop.permute.xlu0 %760
      %vm794 = vcmask 130144
      %795 = vst.msk [vmem:[#allocation2] sm:$0xff] %vm794, %v699
      %796 = vst.msk [vmem:[#allocation2 + $0x8] sm:$0xff] %vm794, %v701
      %797 = vst.msk [vmem:[#allocation2 + $0x10] sm:$0xff] %vm794, %v703
      %798 = vst.msk [vmem:[#allocation2 + $0x18] sm:$0xff] %vm794, %v705
      %799 = vst.msk [vmem:[#allocation2 + $0x20] sm:$0xff] %vm794, %v707
      %800 = vst.msk [vmem:[#allocation2 + $0x28] sm:$0xff] %vm794, %v709
      %801 = vst.msk [vmem:[#allocation2 + $0x30] sm:$0xff] %vm794, %v711
      %802 = vst.msk [vmem:[#allocation2 + $0x38] sm:$0xff] %vm794, %v713
      %803 = vst.msk [vmem:[#allocation2 + $0x40] sm:$0xff] %vm794, %v715
      %804 = vst.msk [vmem:[#allocation2 + $0x48] sm:$0xff] %vm794, %v717
      %805 = vst.msk [vmem:[#allocation2 + $0x50] sm:$0xff] %vm794, %v719
      %806 = vst.msk [vmem:[#allocation2 + $0x58] sm:$0xff] %vm794, %v721
      %807 = vst.msk [vmem:[#allocation2 + $0x60] sm:$0xff] %vm794, %v723
      %808 = vst.msk [vmem:[#allocation2 + $0x68] sm:$0xff] %vm794, %v725
      %809 = vst.msk [vmem:[#allocation2 + $0x70] sm:$0xff] %vm794, %v727
      %810 = vst.msk [vmem:[#allocation2 + $0x78] sm:$0xff] %vm794, %v729
      %811 = vst.msk [vmem:[#allocation2 + $0x80] sm:$0xff] %vm794, %v731
      %812 = vst.msk [vmem:[#allocation2 + $0x88] sm:$0xff] %vm794, %v733
      %813 = vst.msk [vmem:[#allocation2 + $0x90] sm:$0xff] %vm794, %v735
      %814 = vst.msk [vmem:[#allocation2 + $0x98] sm:$0xff] %vm794, %v737
      %815 = vst.msk [vmem:[#allocation2 + $0xa0] sm:$0xff] %vm794, %v739
      %816 = vst.msk [vmem:[#allocation2 + $0xa8] sm:$0xff] %vm794, %v741
      %817 = vst.msk [vmem:[#allocation2 + $0xb0] sm:$0xff] %vm794, %v743
      %818 = vst.msk [vmem:[#allocation2 + $0xb8] sm:$0xff] %vm794, %v745
      %819 = vst.msk [vmem:[#allocation2 + $0xc0] sm:$0xff] %vm794, %v747
      %820 = vst.msk [vmem:[#allocation2 + $0xc8] sm:$0xff] %vm794, %v749
      %821 = vst.msk [vmem:[#allocation2 + $0xd0] sm:$0xff] %vm794, %v751
      %822 = vst.msk [vmem:[#allocation2 + $0xd8] sm:$0xff] %vm794, %v753
      %823 = vst.msk [vmem:[#allocation2 + $0xe0] sm:$0xff] %vm794, %v755
      %824 = vst.msk [vmem:[#allocation2 + $0xe8] sm:$0xff] %vm794, %v757
      %825 = vst.msk [vmem:[#allocation2 + $0xf0] sm:$0xff] %vm794, %v759
      %826 = vst.msk [vmem:[#allocation2 + $0xf8] sm:$0xff] %vm794, %v761
      %v827 = vld [vmem:[%s633 + $0x1] sm:$0xff]
      %v828 = vld [vmem:[%s633 + $0x9] sm:$0xff]
      %v829 = vld [vmem:[%s633 + $0x19] sm:$0xff]
      %v830 = vld [vmem:[%s633 + $0x21] sm:$0xff]
      %v831 = vld [vmem:[%s633 + $0x31] sm:$0xff]
      %v832 = vld [vmem:[%s633 + $0x39] sm:$0xff]
      %v833 = vld [vmem:[%s633 + $0x49] sm:$0xff]
      %v834 = vld [vmem:[%s633 + $0x51] sm:$0xff]
      %v835 = vld [vmem:[%s633 + $0x61] sm:$0xff]
      %v836 = vld [vmem:[%s633 + $0x69] sm:$0xff]
      %v837 = vld [vmem:[%s633 + $0x79] sm:$0xff]
      %v838 = vld [vmem:[%s633 + $0x81] sm:$0xff]
      %v839 = vld [vmem:[%s633 + $0x91] sm:$0xff]
      %v840 = vld [vmem:[%s633 + $0x99] sm:$0xff]
      %v841 = vld [vmem:[%s633 + $0xa9] sm:$0xff]
      %v842 = vld [vmem:[%s633 + $0xb1] sm:$0xff]
      %v843 = vld [vmem:[%s633 + $0xc1] sm:$0xff]
      %v844 = vld [vmem:[%s633 + $0xc9] sm:$0xff]
      %v845 = vld [vmem:[%s633 + $0xd9] sm:$0xff]
      %v846 = vld [vmem:[%s633 + $0xe1] sm:$0xff]
      %v847 = vld [vmem:[%s633 + $0xf1] sm:$0xff]
      %v848 = vld [vmem:[%s633 + $0xf9] sm:$0xff]
      %v849 = vld [vmem:[%s633 + $0x109] sm:$0xff]
      %v850 = vld [vmem:[%s633 + $0x111] sm:$0xff]
      %v851 = vld [vmem:[%s633 + $0x121] sm:$0xff]
      %v852 = vld [vmem:[%s633 + $0x129] sm:$0xff]
      %v853 = vld [vmem:[%s633 + $0x139] sm:$0xff]
      %v854 = vld [vmem:[%s633 + $0x141] sm:$0xff]
      %v855 = vld [vmem:[%s633 + $0x151] sm:$0xff]
      %v856 = vld [vmem:[%s633 + $0x159] sm:$0xff]
      %v857 = vld [vmem:[%s633 + $0x169] sm:$0xff]
      %v858 = vld [vmem:[%s633 + $0x171] sm:$0xff]
      %891 = vrot.lane.b32.xlu0 %v827, 16
      %v892 = vpop.permute.xlu0 %891
      %893 = vrot.lane.b32.xlu0 %v828, 16
      %v894 = vpop.permute.xlu0 %893
      %895 = vrot.lane.b32.xlu0 %v829, 16
      %v896 = vpop.permute.xlu0 %895
      %897 = vrot.lane.b32.xlu0 %v830, 16
      %v898 = vpop.permute.xlu0 %897
      %899 = vrot.lane.b32.xlu0 %v831, 16
      %v900 = vpop.permute.xlu0 %899
      %901 = vrot.lane.b32.xlu0 %v832, 16
      %v902 = vpop.permute.xlu0 %901
      %903 = vrot.lane.b32.xlu0 %v833, 16
      %v904 = vpop.permute.xlu0 %903
      %905 = vrot.lane.b32.xlu0 %v834, 16
      %v906 = vpop.permute.xlu0 %905
      %907 = vrot.lane.b32.xlu0 %v835, 16
      %v908 = vpop.permute.xlu0 %907
      %909 = vrot.lane.b32.xlu0 %v836, 16
      %v910 = vpop.permute.xlu0 %909
      %911 = vrot.lane.b32.xlu0 %v837, 16
      %v912 = vpop.permute.xlu0 %911
      %913 = vrot.lane.b32.xlu0 %v838, 16
      %v914 = vpop.permute.xlu0 %913
      %915 = vrot.lane.b32.xlu0 %v839, 16
      %v916 = vpop.permute.xlu0 %915
      %917 = vrot.lane.b32.xlu0 %v840, 16
      %v918 = vpop.permute.xlu0 %917
      %919 = vrot.lane.b32.xlu0 %v841, 16
      %v920 = vpop.permute.xlu0 %919
      %921 = vrot.lane.b32.xlu0 %v842, 16
      %v922 = vpop.permute.xlu0 %921
      %923 = vrot.lane.b32.xlu0 %v843, 16
      %v924 = vpop.permute.xlu0 %923
      %925 = vrot.lane.b32.xlu0 %v844, 16
      %v926 = vpop.permute.xlu0 %925
      %927 = vrot.lane.b32.xlu0 %v845, 16
      %v928 = vpop.permute.xlu0 %927
      %929 = vrot.lane.b32.xlu0 %v846, 16
      %v930 = vpop.permute.xlu0 %929
      %931 = vrot.lane.b32.xlu0 %v847, 16
      %v932 = vpop.permute.xlu0 %931
      %933 = vrot.lane.b32.xlu0 %v848, 16
      %v934 = vpop.permute.xlu0 %933
      %935 = vrot.lane.b32.xlu0 %v849, 16
      %v936 = vpop.permute.xlu0 %935
      %937 = vrot.lane.b32.xlu0 %v850, 16
      %v938 = vpop.permute.xlu0 %937
      %939 = vrot.lane.b32.xlu0 %v851, 16
      %v940 = vpop.permute.xlu0 %939
      %941 = vrot.lane.b32.xlu0 %v852, 16
      %v942 = vpop.permute.xlu0 %941
      %943 = vrot.lane.b32.xlu0 %v853, 16
      %v944 = vpop.permute.xlu0 %943
      %945 = vrot.lane.b32.xlu0 %v854, 16
      %v946 = vpop.permute.xlu0 %945
      %947 = vrot.lane.b32.xlu0 %v855, 16
      %v948 = vpop.permute.xlu0 %947
      %949 = vrot.lane.b32.xlu0 %v856, 16
      %v950 = vpop.permute.xlu0 %949
      %951 = vrot.lane.b32.xlu0 %v857, 16
      %v952 = vpop.permute.xlu0 %951
      %953 = vrot.lane.b32.xlu0 %v858, 16
      %v954 = vpop.permute.xlu0 %953
      %vm987 = vcmask 162944
      %988 = vst.msk [vmem:[#allocation2] sm:$0xff] %vm987, %v892
      %989 = vst.msk [vmem:[#allocation2 + $0x8] sm:$0xff] %vm987, %v894
      %990 = vst.msk [vmem:[#allocation2 + $0x10] sm:$0xff] %vm987, %v896
      %991 = vst.msk [vmem:[#allocation2 + $0x18] sm:$0xff] %vm987, %v898
      %992 = vst.msk [vmem:[#allocation2 + $0x20] sm:$0xff] %vm987, %v900
      %993 = vst.msk [vmem:[#allocation2 + $0x28] sm:$0xff] %vm987, %v902
      %994 = vst.msk [vmem:[#allocation2 + $0x30] sm:$0xff] %vm987, %v904
      %995 = vst.msk [vmem:[#allocation2 + $0x38] sm:$0xff] %vm987, %v906
      %996 = vst.msk [vmem:[#allocation2 + $0x40] sm:$0xff] %vm987, %v908
      %997 = vst.msk [vmem:[#allocation2 + $0x48] sm:$0xff] %vm987, %v910
      %998 = vst.msk [vmem:[#allocation2 + $0x50] sm:$0xff] %vm987, %v912
      %999 = vst.msk [vmem:[#allocation2 + $0x58] sm:$0xff] %vm987, %v914
      %1000 = vst.msk [vmem:[#allocation2 + $0x60] sm:$0xff] %vm987, %v916
      %1001 = vst.msk [vmem:[#allocation2 + $0x68] sm:$0xff] %vm987, %v918
      %1002 = vst.msk [vmem:[#allocation2 + $0x70] sm:$0xff] %vm987, %v920
      %1003 = vst.msk [vmem:[#allocation2 + $0x78] sm:$0xff] %vm987, %v922
      %1004 = vst.msk [vmem:[#allocation2 + $0x80] sm:$0xff] %vm987, %v924
      %1005 = vst.msk [vmem:[#allocation2 + $0x88] sm:$0xff] %vm987, %v926
      %1006 = vst.msk [vmem:[#allocation2 + $0x90] sm:$0xff] %vm987, %v928
      %1007 = vst.msk [vmem:[#allocation2 + $0x98] sm:$0xff] %vm987, %v930
      %1008 = vst.msk [vmem:[#allocation2 + $0xa0] sm:$0xff] %vm987, %v932
      %1009 = vst.msk [vmem:[#allocation2 + $0xa8] sm:$0xff] %vm987, %v934
      %1010 = vst.msk [vmem:[#allocation2 + $0xb0] sm:$0xff] %vm987, %v936
      %1011 = vst.msk [vmem:[#allocation2 + $0xb8] sm:$0xff] %vm987, %v938
      %1012 = vst.msk [vmem:[#allocation2 + $0xc0] sm:$0xff] %vm987, %v940
      %1013 = vst.msk [vmem:[#allocation2 + $0xc8] sm:$0xff] %vm987, %v942
      %1014 = vst.msk [vmem:[#allocation2 + $0xd0] sm:$0xff] %vm987, %v944
      %1015 = vst.msk [vmem:[#allocation2 + $0xd8] sm:$0xff] %vm987, %v946
      %1016 = vst.msk [vmem:[#allocation2 + $0xe0] sm:$0xff] %vm987, %v948
      %1017 = vst.msk [vmem:[#allocation2 + $0xe8] sm:$0xff] %vm987, %v950
      %1018 = vst.msk [vmem:[#allocation2 + $0xf0] sm:$0xff] %vm987, %v952
      %1019 = vst.msk [vmem:[#allocation2 + $0xf8] sm:$0xff] %vm987, %v954
      %v1020 = vld [vmem:[%s633 + $0x2] sm:$0xff]
      %v1021 = vld [vmem:[%s633 + $0xa] sm:$0xff]
      %v1022 = vld [vmem:[%s633 + $0x1a] sm:$0xff]
      %v1023 = vld [vmem:[%s633 + $0x22] sm:$0xff]
      %v1024 = vld [vmem:[%s633 + $0x32] sm:$0xff]
      %v1025 = vld [vmem:[%s633 + $0x3a] sm:$0xff]
      %v1026 = vld [vmem:[%s633 + $0x4a] sm:$0xff]
      %v1027 = vld [vmem:[%s633 + $0x52] sm:$0xff]
      %v1028 = vld [vmem:[%s633 + $0x62] sm:$0xff]
      %v1029 = vld [vmem:[%s633 + $0x6a] sm:$0xff]
      %v1030 = vld [vmem:[%s633 + $0x7a] sm:$0xff]
      %v1031 = vld [vmem:[%s633 + $0x82] sm:$0xff]
      %v1032 = vld [vmem:[%s633 + $0x92] sm:$0xff]
      %v1033 = vld [vmem:[%s633 + $0x9a] sm:$0xff]
      %v1034 = vld [vmem:[%s633 + $0xaa] sm:$0xff]
      %v1035 = vld [vmem:[%s633 + $0xb2] sm:$0xff]
      %v1036 = vld [vmem:[%s633 + $0xc2] sm:$0xff]
      %v1037 = vld [vmem:[%s633 + $0xca] sm:$0xff]
      %v1038 = vld [vmem:[%s633 + $0xda] sm:$0xff]
      %v1039 = vld [vmem:[%s633 + $0xe2] sm:$0xff]
      %v1040 = vld [vmem:[%s633 + $0xf2] sm:$0xff]
      %v1041 = vld [vmem:[%s633 + $0xfa] sm:$0xff]
      %v1042 = vld [vmem:[%s633 + $0x10a] sm:$0xff]
      %v1043 = vld [vmem:[%s633 + $0x112] sm:$0xff]
      %v1044 = vld [vmem:[%s633 + $0x122] sm:$0xff]
      %v1045 = vld [vmem:[%s633 + $0x12a] sm:$0xff]
      %v1046 = vld [vmem:[%s633 + $0x13a] sm:$0xff]
      %v1047 = vld [vmem:[%s633 + $0x142] sm:$0xff]
      %v1048 = vld [vmem:[%s633 + $0x152] sm:$0xff]
      %v1049 = vld [vmem:[%s633 + $0x15a] sm:$0xff]
      %v1050 = vld [vmem:[%s633 + $0x16a] sm:$0xff]
      %v1051 = vld [vmem:[%s633 + $0x172] sm:$0xff]
      %1084 = vrot.lane.b32.xlu0 %v1020, 20
      %v1085 = vpop.permute.xlu0 %1084
      %1086 = vrot.lane.b32.xlu0 %v1021, 20
      %v1087 = vpop.permute.xlu0 %1086
      %1088 = vrot.lane.b32.xlu0 %v1022, 20
      %v1089 = vpop.permute.xlu0 %1088
      %1090 = vrot.lane.b32.xlu0 %v1023, 20
      %v1091 = vpop.permute.xlu0 %1090
      %1092 = vrot.lane.b32.xlu0 %v1024, 20
      %v1093 = vpop.permute.xlu0 %1092
      %1094 = vrot.lane.b32.xlu0 %v1025, 20
      %v1095 = vpop.permute.xlu0 %1094
      %1096 = vrot.lane.b32.xlu0 %v1026, 20
      %v1097 = vpop.permute.xlu0 %1096
      %1098 = vrot.lane.b32.xlu0 %v1027, 20
      %v1099 = vpop.permute.xlu0 %1098
      %1100 = vrot.lane.b32.xlu0 %v1028, 20
      %v1101 = vpop.permute.xlu0 %1100
      %1102 = vrot.lane.b32.xlu0 %v1029, 20
      %v1103 = vpop.permute.xlu0 %1102
      %1104 = vrot.lane.b32.xlu0 %v1030, 20
      %v1105 = vpop.permute.xlu0 %1104
      %1106 = vrot.lane.b32.xlu0 %v1031, 20
      %v1107 = vpop.permute.xlu0 %1106
      %1108 = vrot.lane.b32.xlu0 %v1032, 20
      %v1109 = vpop.permute.xlu0 %1108
      %1110 = vrot.lane.b32.xlu0 %v1033, 20
      %v1111 = vpop.permute.xlu0 %1110
      %1112 = vrot.lane.b32.xlu0 %v1034, 20
      %v1113 = vpop.permute.xlu0 %1112
      %1114 = vrot.lane.b32.xlu0 %v1035, 20
      %v1115 = vpop.permute.xlu0 %1114
      %1116 = vrot.lane.b32.xlu0 %v1036, 20
      %v1117 = vpop.permute.xlu0 %1116
      %1118 = vrot.lane.b32.xlu0 %v1037, 20
      %v1119 = vpop.permute.xlu0 %1118
      %1120 = vrot.lane.b32.xlu0 %v1038, 20
      %v1121 = vpop.permute.xlu0 %1120
      %1122 = vrot.lane.b32.xlu0 %v1039, 20
      %v1123 = vpop.permute.xlu0 %1122
      %1124 = vrot.lane.b32.xlu0 %v1040, 20
      %v1125 = vpop.permute.xlu0 %1124
      %1126 = vrot.lane.b32.xlu0 %v1041, 20
      %v1127 = vpop.permute.xlu0 %1126
      %1128 = vrot.lane.b32.xlu0 %v1042, 20
      %v1129 = vpop.permute.xlu0 %1128
      %1130 = vrot.lane.b32.xlu0 %v1043, 20
      %v1131 = vpop.permute.xlu0 %1130
      %1132 = vrot.lane.b32.xlu0 %v1044, 20
      %v1133 = vpop.permute.xlu0 %1132
      %1134 = vrot.lane.b32.xlu0 %v1045, 20
      %v1135 = vpop.permute.xlu0 %1134
      %1136 = vrot.lane.b32.xlu0 %v1046, 20
      %v1137 = vpop.permute.xlu0 %1136
      %1138 = vrot.lane.b32.xlu0 %v1047, 20
      %v1139 = vpop.permute.xlu0 %1138
      %1140 = vrot.lane.b32.xlu0 %v1048, 20
      %v1141 = vpop.permute.xlu0 %1140
      %1142 = vrot.lane.b32.xlu0 %v1049, 20
      %v1143 = vpop.permute.xlu0 %1142
      %1144 = vrot.lane.b32.xlu0 %v1050, 20
      %v1145 = vpop.permute.xlu0 %1144
      %1146 = vrot.lane.b32.xlu0 %v1051, 20
      %v1147 = vpop.permute.xlu0 %1146
      %vm1180 = vcmask 195744
      %1181 = vst.msk [vmem:[#allocation2] sm:$0xff] %vm1180, %v1085
      %1182 = vst.msk [vmem:[#allocation2 + $0x8] sm:$0xff] %vm1180, %v1087
      %1183 = vst.msk [vmem:[#allocation2 + $0x10] sm:$0xff] %vm1180, %v1089
      %1184 = vst.msk [vmem:[#allocation2 + $0x18] sm:$0xff] %vm1180, %v1091
      %1185 = vst.msk [vmem:[#allocation2 + $0x20] sm:$0xff] %vm1180, %v1093
      %1186 = vst.msk [vmem:[#allocation2 + $0x28] sm:$0xff] %vm1180, %v1095
      %1187 = vst.msk [vmem:[#allocation2 + $0x30] sm:$0xff] %vm1180, %v1097
      %1188 = vst.msk [vmem:[#allocation2 + $0x38] sm:$0xff] %vm1180, %v1099
      %1189 = vst.msk [vmem:[#allocation2 + $0x40] sm:$0xff] %vm1180, %v1101
      %1190 = vst.msk [vmem:[#allocation2 + $0x48] sm:$0xff] %vm1180, %v1103
      %1191 = vst.msk [vmem:[#allocation2 + $0x50] sm:$0xff] %vm1180, %v1105
      %1192 = vst.msk [vmem:[#allocation2 + $0x58] sm:$0xff] %vm1180, %v1107
      %1193 = vst.msk [vmem:[#allocation2 + $0x60] sm:$0xff] %vm1180, %v1109
      %1194 = vst.msk [vmem:[#allocation2 + $0x68] sm:$0xff] %vm1180, %v1111
      %1195 = vst.msk [vmem:[#allocation2 + $0x70] sm:$0xff] %vm1180, %v1113
      %1196 = vst.msk [vmem:[#allocation2 + $0x78] sm:$0xff] %vm1180, %v1115
      %1197 = vst.msk [vmem:[#allocation2 + $0x80] sm:$0xff] %vm1180, %v1117
      %1198 = vst.msk [vmem:[#allocation2 + $0x88] sm:$0xff] %vm1180, %v1119
      %1199 = vst.msk [vmem:[#allocation2 + $0x90] sm:$0xff] %vm1180, %v1121
      %1200 = vst.msk [vmem:[#allocation2 + $0x98] sm:$0xff] %vm1180, %v1123
      %1201 = vst.msk [vmem:[#allocation2 + $0xa0] sm:$0xff] %vm1180, %v1125
      %1202 = vst.msk [vmem:[#allocation2 + $0xa8] sm:$0xff] %vm1180, %v1127
      %1203 = vst.msk [vmem:[#allocation2 + $0xb0] sm:$0xff] %vm1180, %v1129
      %1204 = vst.msk [vmem:[#allocation2 + $0xb8] sm:$0xff] %vm1180, %v1131
      %1205 = vst.msk [vmem:[#allocation2 + $0xc0] sm:$0xff] %vm1180, %v1133
      %1206 = vst.msk [vmem:[#allocation2 + $0xc8] sm:$0xff] %vm1180, %v1135
      %1207 = vst.msk [vmem:[#allocation2 + $0xd0] sm:$0xff] %vm1180, %v1137
      %1208 = vst.msk [vmem:[#allocation2 + $0xd8] sm:$0xff] %vm1180, %v1139
      %1209 = vst.msk [vmem:[#allocation2 + $0xe0] sm:$0xff] %vm1180, %v1141
      %1210 = vst.msk [vmem:[#allocation2 + $0xe8] sm:$0xff] %vm1180, %v1143
      %1211 = vst.msk [vmem:[#allocation2 + $0xf0] sm:$0xff] %vm1180, %v1145
      %1212 = vst.msk [vmem:[#allocation2 + $0xf8] sm:$0xff] %vm1180, %v1147
      %s1213 = scalar_lea.vmem %s172, 48
      %v1214 = vld [vmem:[%s1213] sm:$0xff]
      %v1215 = vld [vmem:[%s1213 + $0x8] sm:$0xff]
      %v1216 = vld [vmem:[%s1213 + $0x18] sm:$0xff]
      %v1217 = vld [vmem:[%s1213 + $0x20] sm:$0xff]
      %v1218 = vld [vmem:[%s1213 + $0x30] sm:$0xff]
      %v1219 = vld [vmem:[%s1213 + $0x38] sm:$0xff]
      %v1220 = vld [vmem:[%s1213 + $0x48] sm:$0xff]
      %v1221 = vld [vmem:[%s1213 + $0x50] sm:$0xff]
      %v1222 = vld [vmem:[%s1213 + $0x60] sm:$0xff]
      %v1223 = vld [vmem:[%s1213 + $0x68] sm:$0xff]
      %v1224 = vld [vmem:[%s1213 + $0x78] sm:$0xff]
      %v1225 = vld [vmem:[%s1213 + $0x80] sm:$0xff]
      %v1226 = vld [vmem:[%s1213 + $0x90] sm:$0xff]
      %v1227 = vld [vmem:[%s1213 + $0x98] sm:$0xff]
      %v1228 = vld [vmem:[%s1213 + $0xa8] sm:$0xff]
      %v1229 = vld [vmem:[%s1213 + $0xb0] sm:$0xff]
      %v1230 = vld [vmem:[%s1213 + $0xc0] sm:$0xff]
      %v1231 = vld [vmem:[%s1213 + $0xc8] sm:$0xff]
      %v1232 = vld [vmem:[%s1213 + $0xd8] sm:$0xff]
      %v1233 = vld [vmem:[%s1213 + $0xe0] sm:$0xff]
      %v1234 = vld [vmem:[%s1213 + $0xf0] sm:$0xff]
      %v1235 = vld [vmem:[%s1213 + $0xf8] sm:$0xff]
      %v1236 = vld [vmem:[%s1213 + $0x108] sm:$0xff]
      %v1237 = vld [vmem:[%s1213 + $0x110] sm:$0xff]
      %v1238 = vld [vmem:[%s1213 + $0x120] sm:$0xff]
      %v1239 = vld [vmem:[%s1213 + $0x128] sm:$0xff]
      %v1240 = vld [vmem:[%s1213 + $0x138] sm:$0xff]
      %v1241 = vld [vmem:[%s1213 + $0x140] sm:$0xff]
      %v1242 = vld [vmem:[%s1213 + $0x150] sm:$0xff]
      %v1243 = vld [vmem:[%s1213 + $0x158] sm:$0xff]
      %v1244 = vld [vmem:[%s1213 + $0x168] sm:$0xff]
      %v1245 = vld [vmem:[%s1213 + $0x170] sm:$0xff]
      %1278 = vrot.lane.b32.xlu0 %v1214, 24
      %v1279 = vpop.permute.xlu0 %1278
      %1280 = vrot.lane.b32.xlu0 %v1215, 24
      %v1281 = vpop.permute.xlu0 %1280
      %1282 = vrot.lane.b32.xlu0 %v1216, 24
      %v1283 = vpop.permute.xlu0 %1282
      %1284 = vrot.lane.b32.xlu0 %v1217, 24
      %v1285 = vpop.permute.xlu0 %1284
      %1286 = vrot.lane.b32.xlu0 %v1218, 24
      %v1287 = vpop.permute.xlu0 %1286
      %1288 = vrot.lane.b32.xlu0 %v1219, 24
      %v1289 = vpop.permute.xlu0 %1288
      %1290 = vrot.lane.b32.xlu0 %v1220, 24
      %v1291 = vpop.permute.xlu0 %1290
      %1292 = vrot.lane.b32.xlu0 %v1221, 24
      %v1293 = vpop.permute.xlu0 %1292
      %1294 = vrot.lane.b32.xlu0 %v1222, 24
      %v1295 = vpop.permute.xlu0 %1294
      %1296 = vrot.lane.b32.xlu0 %v1223, 24
      %v1297 = vpop.permute.xlu0 %1296
      %1298 = vrot.lane.b32.xlu0 %v1224, 24
      %v1299 = vpop.permute.xlu0 %1298
      %1300 = vrot.lane.b32.xlu0 %v1225, 24
      %v1301 = vpop.permute.xlu0 %1300
      %1302 = vrot.lane.b32.xlu0 %v1226, 24
      %v1303 = vpop.permute.xlu0 %1302
      %1304 = vrot.lane.b32.xlu0 %v1227, 24
      %v1305 = vpop.permute.xlu0 %1304
      %1306 = vrot.lane.b32.xlu0 %v1228, 24
      %v1307 = vpop.permute.xlu0 %1306
      %1308 = vrot.lane.b32.xlu0 %v1229, 24
      %v1309 = vpop.permute.xlu0 %1308
      %1310 = vrot.lane.b32.xlu0 %v1230, 24
      %v1311 = vpop.permute.xlu0 %1310
      %1312 = vrot.lane.b32.xlu0 %v1231, 24
      %v1313 = vpop.permute.xlu0 %1312
      %1314 = vrot.lane.b32.xlu0 %v1232, 24
      %v1315 = vpop.permute.xlu0 %1314
      %1316 = vrot.lane.b32.xlu0 %v1233, 24
      %v1317 = vpop.permute.xlu0 %1316
      %1318 = vrot.lane.b32.xlu0 %v1234, 24
      %v1319 = vpop.permute.xlu0 %1318
      %1320 = vrot.lane.b32.xlu0 %v1235, 24
      %v1321 = vpop.permute.xlu0 %1320
      %1322 = vrot.lane.b32.xlu0 %v1236, 24
      %v1323 = vpop.permute.xlu0 %1322
      %1324 = vrot.lane.b32.xlu0 %v1237, 24
      %v1325 = vpop.permute.xlu0 %1324
      %1326 = vrot.lane.b32.xlu0 %v1238, 24
      %v1327 = vpop.permute.xlu0 %1326
      %1328 = vrot.lane.b32.xlu0 %v1239, 24
      %v1329 = vpop.permute.xlu0 %1328
      %1330 = vrot.lane.b32.xlu0 %v1240, 24
      %v1331 = vpop.permute.xlu0 %1330
      %1332 = vrot.lane.b32.xlu0 %v1241, 24
      %v1333 = vpop.permute.xlu0 %1332
      %1334 = vrot.lane.b32.xlu0 %v1242, 24
      %v1335 = vpop.permute.xlu0 %1334
      %1336 = vrot.lane.b32.xlu0 %v1243, 24
      %v1337 = vpop.permute.xlu0 %1336
      %1338 = vrot.lane.b32.xlu0 %v1244, 24
      %v1339 = vpop.permute.xlu0 %1338
      %1340 = vrot.lane.b32.xlu0 %v1245, 24
      %v1341 = vpop.permute.xlu0 %1340
      %vm1374 = vcmask 228544
      %1375 = vst.msk [vmem:[#allocation2] sm:$0xff] %vm1374, %v1279
      %1376 = vst.msk [vmem:[#allocation2 + $0x8] sm:$0xff] %vm1374, %v1281
      %1377 = vst.msk [vmem:[#allocation2 + $0x10] sm:$0xff] %vm1374, %v1283
      %1378 = vst.msk [vmem:[#allocation2 + $0x18] sm:$0xff] %vm1374, %v1285
      %1379 = vst.msk [vmem:[#allocation2 + $0x20] sm:$0xff] %vm1374, %v1287
      %1380 = vst.msk [vmem:[#allocation2 + $0x28] sm:$0xff] %vm1374, %v1289
      %1381 = vst.msk [vmem:[#allocation2 + $0x30] sm:$0xff] %vm1374, %v1291
      %1382 = vst.msk [vmem:[#allocation2 + $0x38] sm:$0xff] %vm1374, %v1293
      %1383 = vst.msk [vmem:[#allocation2 + $0x40] sm:$0xff] %vm1374, %v1295
      %1384 = vst.msk [vmem:[#allocation2 + $0x48] sm:$0xff] %vm1374, %v1297
      %1385 = vst.msk [vmem:[#allocation2 + $0x50] sm:$0xff] %vm1374, %v1299
      %1386 = vst.msk [vmem:[#allocation2 + $0x58] sm:$0xff] %vm1374, %v1301
      %1387 = vst.msk [vmem:[#allocation2 + $0x60] sm:$0xff] %vm1374, %v1303
      %1388 = vst.msk [vmem:[#allocation2 + $0x68] sm:$0xff] %vm1374, %v1305
      %1389 = vst.msk [vmem:[#allocation2 + $0x70] sm:$0xff] %vm1374, %v1307
      %1390 = vst.msk [vmem:[#allocation2 + $0x78] sm:$0xff] %vm1374, %v1309
      %1391 = vst.msk [vmem:[#allocation2 + $0x80] sm:$0xff] %vm1374, %v1311
      %1392 = vst.msk [vmem:[#allocation2 + $0x88] sm:$0xff] %vm1374, %v1313
      %1393 = vst.msk [vmem:[#allocation2 + $0x90] sm:$0xff] %vm1374, %v1315
      %1394 = vst.msk [vmem:[#allocation2 + $0x98] sm:$0xff] %vm1374, %v1317
      %1395 = vst.msk [vmem:[#allocation2 + $0xa0] sm:$0xff] %vm1374, %v1319
      %1396 = vst.msk [vmem:[#allocation2 + $0xa8] sm:$0xff] %vm1374, %v1321
      %1397 = vst.msk [vmem:[#allocation2 + $0xb0] sm:$0xff] %vm1374, %v1323
      %1398 = vst.msk [vmem:[#allocation2 + $0xb8] sm:$0xff] %vm1374, %v1325
      %1399 = vst.msk [vmem:[#allocation2 + $0xc0] sm:$0xff] %vm1374, %v1327
      %1400 = vst.msk [vmem:[#allocation2 + $0xc8] sm:$0xff] %vm1374, %v1329
      %1401 = vst.msk [vmem:[#allocation2 + $0xd0] sm:$0xff] %vm1374, %v1331
      %1402 = vst.msk [vmem:[#allocation2 + $0xd8] sm:$0xff] %vm1374, %v1333
      %1403 = vst.msk [vmem:[#allocation2 + $0xe0] sm:$0xff] %vm1374, %v1335
      %1404 = vst.msk [vmem:[#allocation2 + $0xe8] sm:$0xff] %vm1374, %v1337
      %1405 = vst.msk [vmem:[#allocation2 + $0xf0] sm:$0xff] %vm1374, %v1339
      %1406 = vst.msk [vmem:[#allocation2 + $0xf8] sm:$0xff] %vm1374, %v1341
      %v1407 = vld [vmem:[%s1213 + $0x1] sm:$0xff]
      %v1408 = vld [vmem:[%s1213 + $0x9] sm:$0xff]
      %v1409 = vld [vmem:[%s1213 + $0x19] sm:$0xff]
      %v1410 = vld [vmem:[%s1213 + $0x21] sm:$0xff]
      %v1411 = vld [vmem:[%s1213 + $0x31] sm:$0xff]
      %v1412 = vld [vmem:[%s1213 + $0x39] sm:$0xff]
      %v1413 = vld [vmem:[%s1213 + $0x49] sm:$0xff]
      %v1414 = vld [vmem:[%s1213 + $0x51] sm:$0xff]
      %v1415 = vld [vmem:[%s1213 + $0x61] sm:$0xff]
      %v1416 = vld [vmem:[%s1213 + $0x69] sm:$0xff]
      %v1417 = vld [vmem:[%s1213 + $0x79] sm:$0xff]
      %v1418 = vld [vmem:[%s1213 + $0x81] sm:$0xff]
      %v1419 = vld [vmem:[%s1213 + $0x91] sm:$0xff]
      %v1420 = vld [vmem:[%s1213 + $0x99] sm:$0xff]
      %v1421 = vld [vmem:[%s1213 + $0xa9] sm:$0xff]
      %v1422 = vld [vmem:[%s1213 + $0xb1] sm:$0xff]
      %v1423 = vld [vmem:[%s1213 + $0xc1] sm:$0xff]
      %v1424 = vld [vmem:[%s1213 + $0xc9] sm:$0xff]
      %v1425 = vld [vmem:[%s1213 + $0xd9] sm:$0xff]
      %v1426 = vld [vmem:[%s1213 + $0xe1] sm:$0xff]
      %v1427 = vld [vmem:[%s1213 + $0xf1] sm:$0xff]
      %v1428 = vld [vmem:[%s1213 + $0xf9] sm:$0xff]
      %v1429 = vld [vmem:[%s1213 + $0x109] sm:$0xff]
      %v1430 = vld [vmem:[%s1213 + $0x111] sm:$0xff]
      %v1431 = vld [vmem:[%s1213 + $0x121] sm:$0xff]
      %v1432 = vld [vmem:[%s1213 + $0x129] sm:$0xff]
      %v1433 = vld [vmem:[%s1213 + $0x139] sm:$0xff]
      %v1434 = vld [vmem:[%s1213 + $0x141] sm:$0xff]
      %v1435 = vld [vmem:[%s1213 + $0x151] sm:$0xff]
      %v1436 = vld [vmem:[%s1213 + $0x159] sm:$0xff]
      %v1437 = vld [vmem:[%s1213 + $0x169] sm:$0xff]
      %v1438 = vld [vmem:[%s1213 + $0x171] sm:$0xff]
      %1471 = vrot.lane.b32.xlu0 %v1407, 28
      %v1472 = vpop.permute.xlu0 %1471
      %1473 = vrot.lane.b32.xlu0 %v1408, 28
      %v1474 = vpop.permute.xlu0 %1473
      %1475 = vrot.lane.b32.xlu0 %v1409, 28
      %v1476 = vpop.permute.xlu0 %1475
      %1477 = vrot.lane.b32.xlu0 %v1410, 28
      %v1478 = vpop.permute.xlu0 %1477
      %1479 = vrot.lane.b32.xlu0 %v1411, 28
      %v1480 = vpop.permute.xlu0 %1479
      %1481 = vrot.lane.b32.xlu0 %v1412, 28
      %v1482 = vpop.permute.xlu0 %1481
      %1483 = vrot.lane.b32.xlu0 %v1413, 28
      %v1484 = vpop.permute.xlu0 %1483
      %1485 = vrot.lane.b32.xlu0 %v1414, 28
      %v1486 = vpop.permute.xlu0 %1485
      %1487 = vrot.lane.b32.xlu0 %v1415, 28
      %v1488 = vpop.permute.xlu0 %1487
      %1489 = vrot.lane.b32.xlu0 %v1416, 28
      %v1490 = vpop.permute.xlu0 %1489
      %1491 = vrot.lane.b32.xlu0 %v1417, 28
      %v1492 = vpop.permute.xlu0 %1491
      %1493 = vrot.lane.b32.xlu0 %v1418, 28
      %v1494 = vpop.permute.xlu0 %1493
      %1495 = vrot.lane.b32.xlu0 %v1419, 28
      %v1496 = vpop.permute.xlu0 %1495
      %1497 = vrot.lane.b32.xlu0 %v1420, 28
      %v1498 = vpop.permute.xlu0 %1497
      %1499 = vrot.lane.b32.xlu0 %v1421, 28
      %v1500 = vpop.permute.xlu0 %1499
      %1501 = vrot.lane.b32.xlu0 %v1422, 28
      %v1502 = vpop.permute.xlu0 %1501
      %1503 = vrot.lane.b32.xlu0 %v1423, 28
      %v1504 = vpop.permute.xlu0 %1503
      %1505 = vrot.lane.b32.xlu0 %v1424, 28
      %v1506 = vpop.permute.xlu0 %1505
      %1507 = vrot.lane.b32.xlu0 %v1425, 28
      %v1508 = vpop.permute.xlu0 %1507
      %1509 = vrot.lane.b32.xlu0 %v1426, 28
      %v1510 = vpop.permute.xlu0 %1509
      %1511 = vrot.lane.b32.xlu0 %v1427, 28
      %v1512 = vpop.permute.xlu0 %1511
      %1513 = vrot.lane.b32.xlu0 %v1428, 28
      %v1514 = vpop.permute.xlu0 %1513
      %1515 = vrot.lane.b32.xlu0 %v1429, 28
      %v1516 = vpop.permute.xlu0 %1515
      %1517 = vrot.lane.b32.xlu0 %v1430, 28
      %v1518 = vpop.permute.xlu0 %1517
      %1519 = vrot.lane.b32.xlu0 %v1431, 28
      %v1520 = vpop.permute.xlu0 %1519
      %1521 = vrot.lane.b32.xlu0 %v1432, 28
      %v1522 = vpop.permute.xlu0 %1521
      %1523 = vrot.lane.b32.xlu0 %v1433, 28
      %v1524 = vpop.permute.xlu0 %1523
      %1525 = vrot.lane.b32.xlu0 %v1434, 28
      %v1526 = vpop.permute.xlu0 %1525
      %1527 = vrot.lane.b32.xlu0 %v1435, 28
      %v1528 = vpop.permute.xlu0 %1527
      %1529 = vrot.lane.b32.xlu0 %v1436, 28
      %v1530 = vpop.permute.xlu0 %1529
      %1531 = vrot.lane.b32.xlu0 %v1437, 28
      %v1532 = vpop.permute.xlu0 %1531
      %1533 = vrot.lane.b32.xlu0 %v1438, 28
      %v1534 = vpop.permute.xlu0 %1533
      %vm1567 = vcmask 261344
      %1568 = vst.msk [vmem:[#allocation2] sm:$0xff] %vm1567, %v1472
      %1569 = vst.msk [vmem:[#allocation2 + $0x8] sm:$0xff] %vm1567, %v1474
      %1570 = vst.msk [vmem:[#allocation2 + $0x10] sm:$0xff] %vm1567, %v1476
      %1571 = vst.msk [vmem:[#allocation2 + $0x18] sm:$0xff] %vm1567, %v1478
      %1572 = vst.msk [vmem:[#allocation2 + $0x20] sm:$0xff] %vm1567, %v1480
      %1573 = vst.msk [vmem:[#allocation2 + $0x28] sm:$0xff] %vm1567, %v1482
      %1574 = vst.msk [vmem:[#allocation2 + $0x30] sm:$0xff] %vm1567, %v1484
      %1575 = vst.msk [vmem:[#allocation2 + $0x38] sm:$0xff] %vm1567, %v1486
      %1576 = vst.msk [vmem:[#allocation2 + $0x40] sm:$0xff] %vm1567, %v1488
      %1577 = vst.msk [vmem:[#allocation2 + $0x48] sm:$0xff] %vm1567, %v1490
      %1578 = vst.msk [vmem:[#allocation2 + $0x50] sm:$0xff] %vm1567, %v1492
      %1579 = vst.msk [vmem:[#allocation2 + $0x58] sm:$0xff] %vm1567, %v1494
      %1580 = vst.msk [vmem:[#allocation2 + $0x60] sm:$0xff] %vm1567, %v1496
      %1581 = vst.msk [vmem:[#allocation2 + $0x68] sm:$0xff] %vm1567, %v1498
      %1582 = vst.msk [vmem:[#allocation2 + $0x70] sm:$0xff] %vm1567, %v1500
      %1583 = vst.msk [vmem:[#allocation2 + $0x78] sm:$0xff] %vm1567, %v1502
      %1584 = vst.msk [vmem:[#allocation2 + $0x80] sm:$0xff] %vm1567, %v1504
      %1585 = vst.msk [vmem:[#allocation2 + $0x88] sm:$0xff] %vm1567, %v1506
      %1586 = vst.msk [vmem:[#allocation2 + $0x90] sm:$0xff] %vm1567, %v1508
      %1587 = vst.msk [vmem:[#allocation2 + $0x98] sm:$0xff] %vm1567, %v1510
      %1588 = vst.msk [vmem:[#allocation2 + $0xa0] sm:$0xff] %vm1567, %v1512
      %1589 = vst.msk [vmem:[#allocation2 + $0xa8] sm:$0xff] %vm1567, %v1514
      %1590 = vst.msk [vmem:[#allocation2 + $0xb0] sm:$0xff] %vm1567, %v1516
      %1591 = vst.msk [vmem:[#allocation2 + $0xb8] sm:$0xff] %vm1567, %v1518
      %1592 = vst.msk [vmem:[#allocation2 + $0xc0] sm:$0xff] %vm1567, %v1520
      %1593 = vst.msk [vmem:[#allocation2 + $0xc8] sm:$0xff] %vm1567, %v1522
      %1594 = vst.msk [vmem:[#allocation2 + $0xd0] sm:$0xff] %vm1567, %v1524
      %1595 = vst.msk [vmem:[#allocation2 + $0xd8] sm:$0xff] %vm1567, %v1526
      %1596 = vst.msk [vmem:[#allocation2 + $0xe0] sm:$0xff] %vm1567, %v1528
      %1597 = vst.msk [vmem:[#allocation2 + $0xe8] sm:$0xff] %vm1567, %v1530
      %1598 = vst.msk [vmem:[#allocation2 + $0xf0] sm:$0xff] %vm1567, %v1532
      %1599 = vst.msk [vmem:[#allocation2 + $0xf8] sm:$0xff] %vm1567, %v1534
      %v1600 = vld [vmem:[%s1213 + $0x2] sm:$0xff]
      %v1601 = vld [vmem:[%s1213 + $0xa] sm:$0xff]
      %v1602 = vld [vmem:[%s1213 + $0x1a] sm:$0xff]
      %v1603 = vld [vmem:[%s1213 + $0x22] sm:$0xff]
      %v1604 = vld [vmem:[%s1213 + $0x32] sm:$0xff]
      %v1605 = vld [vmem:[%s1213 + $0x3a] sm:$0xff]
      %v1606 = vld [vmem:[%s1213 + $0x4a] sm:$0xff]
      %v1607 = vld [vmem:[%s1213 + $0x52] sm:$0xff]
      %v1608 = vld [vmem:[%s1213 + $0x62] sm:$0xff]
      %v1609 = vld [vmem:[%s1213 + $0x6a] sm:$0xff]
      %v1610 = vld [vmem:[%s1213 + $0x7a] sm:$0xff]
      %v1611 = vld [vmem:[%s1213 + $0x82] sm:$0xff]
      %v1612 = vld [vmem:[%s1213 + $0x92] sm:$0xff]
      %v1613 = vld [vmem:[%s1213 + $0x9a] sm:$0xff]
      %v1614 = vld [vmem:[%s1213 + $0xaa] sm:$0xff]
      %v1615 = vld [vmem:[%s1213 + $0xb2] sm:$0xff]
      %v1616 = vld [vmem:[%s1213 + $0xc2] sm:$0xff]
      %v1617 = vld [vmem:[%s1213 + $0xca] sm:$0xff]
      %v1618 = vld [vmem:[%s1213 + $0xda] sm:$0xff]
      %v1619 = vld [vmem:[%s1213 + $0xe2] sm:$0xff]
      %v1620 = vld [vmem:[%s1213 + $0xf2] sm:$0xff]
      %v1621 = vld [vmem:[%s1213 + $0xfa] sm:$0xff]
      %v1622 = vld [vmem:[%s1213 + $0x10a] sm:$0xff]
      %v1623 = vld [vmem:[%s1213 + $0x112] sm:$0xff]
      %v1624 = vld [vmem:[%s1213 + $0x122] sm:$0xff]
      %v1625 = vld [vmem:[%s1213 + $0x12a] sm:$0xff]
      %v1626 = vld [vmem:[%s1213 + $0x13a] sm:$0xff]
      %v1627 = vld [vmem:[%s1213 + $0x142] sm:$0xff]
      %v1628 = vld [vmem:[%s1213 + $0x152] sm:$0xff]
      %v1629 = vld [vmem:[%s1213 + $0x15a] sm:$0xff]
      %v1630 = vld [vmem:[%s1213 + $0x16a] sm:$0xff]
      %v1631 = vld [vmem:[%s1213 + $0x172] sm:$0xff]
      %1664 = vrot.lane.b32.xlu0 %v1600, 32
      %v1665 = vpop.permute.xlu0 %1664
      %1666 = vrot.lane.b32.xlu0 %v1601, 32
      %v1667 = vpop.permute.xlu0 %1666
      %1668 = vrot.lane.b32.xlu0 %v1602, 32
      %v1669 = vpop.permute.xlu0 %1668
      %1670 = vrot.lane.b32.xlu0 %v1603, 32
      %v1671 = vpop.permute.xlu0 %1670
      %1672 = vrot.lane.b32.xlu0 %v1604, 32
      %v1673 = vpop.permute.xlu0 %1672
      %1674 = vrot.lane.b32.xlu0 %v1605, 32
      %v1675 = vpop.permute.xlu0 %1674
      %1676 = vrot.lane.b32.xlu0 %v1606, 32
      %v1677 = vpop.permute.xlu0 %1676
      %1678 = vrot.lane.b32.xlu0 %v1607, 32
      %v1679 = vpop.permute.xlu0 %1678
      %1680 = vrot.lane.b32.xlu0 %v1608, 32
      %v1681 = vpop.permute.xlu0 %1680
      %1682 = vrot.lane.b32.xlu0 %v1609, 32
      %v1683 = vpop.permute.xlu0 %1682
      %1684 = vrot.lane.b32.xlu0 %v1610, 32
      %v1685 = vpop.permute.xlu0 %1684
      %1686 = vrot.lane.b32.xlu0 %v1611, 32
      %v1687 = vpop.permute.xlu0 %1686
      %1688 = vrot.lane.b32.xlu0 %v1612, 32
      %v1689 = vpop.permute.xlu0 %1688
      %1690 = vrot.lane.b32.xlu0 %v1613, 32
      %v1691 = vpop.permute.xlu0 %1690
      %1692 = vrot.lane.b32.xlu0 %v1614, 32
      %v1693 = vpop.permute.xlu0 %1692
      %1694 = vrot.lane.b32.xlu0 %v1615, 32
      %v1695 = vpop.permute.xlu0 %1694
      %1696 = vrot.lane.b32.xlu0 %v1616, 32
      %v1697 = vpop.permute.xlu0 %1696
      %1698 = vrot.lane.b32.xlu0 %v1617, 32
      %v1699 = vpop.permute.xlu0 %1698
      %1700 = vrot.lane.b32.xlu0 %v1618, 32
      %v1701 = vpop.permute.xlu0 %1700
      %1702 = vrot.lane.b32.xlu0 %v1619, 32
      %v1703 = vpop.permute.xlu0 %1702
      %1704 = vrot.lane.b32.xlu0 %v1620, 32
      %v1705 = vpop.permute.xlu0 %1704
      %1706 = vrot.lane.b32.xlu0 %v1621, 32
      %v1707 = vpop.permute.xlu0 %1706
      %1708 = vrot.lane.b32.xlu0 %v1622, 32
      %v1709 = vpop.permute.xlu0 %1708
      %1710 = vrot.lane.b32.xlu0 %v1623, 32
      %v1711 = vpop.permute.xlu0 %1710
      %1712 = vrot.lane.b32.xlu0 %v1624, 32
      %v1713 = vpop.permute.xlu0 %1712
      %1714 = vrot.lane.b32.xlu0 %v1625, 32
      %v1715 = vpop.permute.xlu0 %1714
      %1716 = vrot.lane.b32.xlu0 %v1626, 32
      %v1717 = vpop.permute.xlu0 %1716
      %1718 = vrot.lane.b32.xlu0 %v1627, 32
      %v1719 = vpop.permute.xlu0 %1718
      %1720 = vrot.lane.b32.xlu0 %v1628, 32
      %v1721 = vpop.permute.xlu0 %1720
      %1722 = vrot.lane.b32.xlu0 %v1629, 32
      %v1723 = vpop.permute.xlu0 %1722
      %1724 = vrot.lane.b32.xlu0 %v1630, 32
      %v1725 = vpop.permute.xlu0 %1724
      %1726 = vrot.lane.b32.xlu0 %v1631, 32
      %v1727 = vpop.permute.xlu0 %1726
      %vm1760 = vcmask 294144
      %1761 = vst.msk [vmem:[#allocation2] sm:$0xff] %vm1760, %v1665
      %1762 = vst.msk [vmem:[#allocation2 + $0x8] sm:$0xff] %vm1760, %v1667
      %1763 = vst.msk [vmem:[#allocation2 + $0x10] sm:$0xff] %vm1760, %v1669
      %1764 = vst.msk [vmem:[#allocation2 + $0x18] sm:$0xff] %vm1760, %v1671
      %1765 = vst.msk [vmem:[#allocation2 + $0x20] sm:$0xff] %vm1760, %v1673
      %1766 = vst.msk [vmem:[#allocation2 + $0x28] sm:$0xff] %vm1760, %v1675
      %1767 = vst.msk [vmem:[#allocation2 + $0x30] sm:$0xff] %vm1760, %v1677
      %1768 = vst.msk [vmem:[#allocation2 + $0x38] sm:$0xff] %vm1760, %v1679
      %1769 = vst.msk [vmem:[#allocation2 + $0x40] sm:$0xff] %vm1760, %v1681
      %1770 = vst.msk [vmem:[#allocation2 + $0x48] sm:$0xff] %vm1760, %v1683
      %1771 = vst.msk [vmem:[#allocation2 + $0x50] sm:$0xff] %vm1760, %v1685
      %1772 = vst.msk [vmem:[#allocation2 + $0x58] sm:$0xff] %vm1760, %v1687
      %1773 = vst.msk [vmem:[#allocation2 + $0x60] sm:$0xff] %vm1760, %v1689
      %1774 = vst.msk [vmem:[#allocation2 + $0x68] sm:$0xff] %vm1760, %v1691
      %1775 = vst.msk [vmem:[#allocation2 + $0x70] sm:$0xff] %vm1760, %v1693
      %1776 = vst.msk [vmem:[#allocation2 + $0x78] sm:$0xff] %vm1760, %v1695
      %1777 = vst.msk [vmem:[#allocation2 + $0x80] sm:$0xff] %vm1760, %v1697
      %1778 = vst.msk [vmem:[#allocation2 + $0x88] sm:$0xff] %vm1760, %v1699
      %1779 = vst.msk [vmem:[#allocation2 + $0x90] sm:$0xff] %vm1760, %v1701
      %1780 = vst.msk [vmem:[#allocation2 + $0x98] sm:$0xff] %vm1760, %v1703
      %1781 = vst.msk [vmem:[#allocation2 + $0xa0] sm:$0xff] %vm1760, %v1705
      %1782 = vst.msk [vmem:[#allocation2 + $0xa8] sm:$0xff] %vm1760, %v1707
      %1783 = vst.msk [vmem:[#allocation2 + $0xb0] sm:$0xff] %vm1760, %v1709
      %1784 = vst.msk [vmem:[#allocation2 + $0xb8] sm:$0xff] %vm1760, %v1711
      %1785 = vst.msk [vmem:[#allocation2 + $0xc0] sm:$0xff] %vm1760, %v1713
      %1786 = vst.msk [vmem:[#allocation2 + $0xc8] sm:$0xff] %vm1760, %v1715
      %1787 = vst.msk [vmem:[#allocation2 + $0xd0] sm:$0xff] %vm1760, %v1717
      %1788 = vst.msk [vmem:[#allocation2 + $0xd8] sm:$0xff] %vm1760, %v1719
      %1789 = vst.msk [vmem:[#allocation2 + $0xe0] sm:$0xff] %vm1760, %v1721
      %1790 = vst.msk [vmem:[#allocation2 + $0xe8] sm:$0xff] %vm1760, %v1723
      %1791 = vst.msk [vmem:[#allocation2 + $0xf0] sm:$0xff] %vm1760, %v1725
      %1792 = vst.msk [vmem:[#allocation2 + $0xf8] sm:$0xff] %vm1760, %v1727
      %v1793 = vld [vmem:[#allocation2] sm:$0xff]
      %v1794 = vld [vmem:[#allocation2 + $0x8] sm:$0xff]
      %v1795 = vld [vmem:[#allocation2 + $0x10] sm:$0xff]
      %v1796 = vld [vmem:[#allocation2 + $0x18] sm:$0xff]
      %v1797 = vld [vmem:[#allocation2 + $0x20] sm:$0xff]
      %v1798 = vld [vmem:[#allocation2 + $0x28] sm:$0xff]
      %v1799 = vld [vmem:[#allocation2 + $0x30] sm:$0xff]
      %v1800 = vld [vmem:[#allocation2 + $0x38] sm:$0xff]
      %v1801 = vld [vmem:[#allocation2 + $0x40] sm:$0xff]
      %v1802 = vld [vmem:[#allocation2 + $0x48] sm:$0xff]
      %v1803 = vld [vmem:[#allocation2 + $0x50] sm:$0xff]
      %v1804 = vld [vmem:[#allocation2 + $0x58] sm:$0xff]
      %v1805 = vld [vmem:[#allocation2 + $0x60] sm:$0xff]
      %v1806 = vld [vmem:[#allocation2 + $0x68] sm:$0xff]
      %v1807 = vld [vmem:[#allocation2 + $0x70] sm:$0xff]
      %v1808 = vld [vmem:[#allocation2 + $0x78] sm:$0xff]
      %v1809 = vld [vmem:[#allocation2 + $0x80] sm:$0xff]
      %v1810 = vld [vmem:[#allocation2 + $0x88] sm:$0xff]
      %v1811 = vld [vmem:[#allocation2 + $0x90] sm:$0xff]
      %v1812 = vld [vmem:[#allocation2 + $0x98] sm:$0xff]
      %v1813 = vld [vmem:[#allocation2 + $0xa0] sm:$0xff]
      %v1814 = vld [vmem:[#allocation2 + $0xa8] sm:$0xff]
      %v1815 = vld [vmem:[#allocation2 + $0xb0] sm:$0xff]
      %v1816 = vld [vmem:[#allocation2 + $0xb8] sm:$0xff]
      %v1817 = vld [vmem:[#allocation2 + $0xc0] sm:$0xff]
      %v1818 = vld [vmem:[#allocation2 + $0xc8] sm:$0xff]
      %v1819 = vld [vmem:[#allocation2 + $0xd0] sm:$0xff]
      %v1820 = vld [vmem:[#allocation2 + $0xd8] sm:$0xff]
      %v1821 = vld [vmem:[#allocation2 + $0xe0] sm:$0xff]
      %v1822 = vld [vmem:[#allocation2 + $0xe8] sm:$0xff]
      %v1823 = vld [vmem:[#allocation2 + $0xf0] sm:$0xff]
      %v1824 = vld [vmem:[#allocation2 + $0xf8] sm:$0xff]
      %v1825 = vld [vmem:[%s1] sm:$0xff]
      %v1826 = vld [vmem:[%s1 + $0x8] sm:$0xff]
      %v1827 = vld [vmem:[%s1 + $0x10] sm:$0xff]
      %v1828 = vld [vmem:[%s1 + $0x18] sm:$0xff]
      %v1829 = vld [vmem:[%s1 + $0x20] sm:$0xf]
      %vm1830 = vcmask 293888
      %v1832 = vsel %vm1830, %v1793, 0
      %v1835 = vsel %vm1830, %v1794, 0
      %v1838 = vsel %vm1830, %v1795, 0
      %v1841 = vsel %vm1830, %v1796, 0
      %v1844 = vsel %vm1830, %v1797, 0
      %v1847 = vsel %vm1830, %v1798, 0
      %v1850 = vsel %vm1830, %v1799, 0
      %v1853 = vsel %vm1830, %v1800, 0
      %v1856 = vsel %vm1830, %v1801, 0
      %v1859 = vsel %vm1830, %v1802, 0
      %v1862 = vsel %vm1830, %v1803, 0
      %v1865 = vsel %vm1830, %v1804, 0
      %v1868 = vsel %vm1830, %v1805, 0
      %v1871 = vsel %vm1830, %v1806, 0
      %v1874 = vsel %vm1830, %v1807, 0
      %v1877 = vsel %vm1830, %v1808, 0
      %v1880 = vsel %vm1830, %v1809, 0
      %v1883 = vsel %vm1830, %v1810, 0
      %v1886 = vsel %vm1830, %v1811, 0
      %v1889 = vsel %vm1830, %v1812, 0
      %v1892 = vsel %vm1830, %v1813, 0
      %v1895 = vsel %vm1830, %v1814, 0
      %v1898 = vsel %vm1830, %v1815, 0
      %v1901 = vsel %vm1830, %v1816, 0
      %v1904 = vsel %vm1830, %v1817, 0
      %v1907 = vsel %vm1830, %v1818, 0
      %v1910 = vsel %vm1830, %v1819, 0
      %v1913 = vsel %vm1830, %v1820, 0
      %v1916 = vsel %vm1830, %v1821, 0
      %v1919 = vsel %vm1830, %v1822, 0
      %v1922 = vsel %vm1830, %v1823, 0
      %v1925 = vsel %vm1830, %v1824, 0
      %vm1927 = vcmask 1043456
      %v1929 = vsel %vm1927, %v1829, 0
      %1931 = vmatprep.subr.mxu0 0.0
      %v1932 = vand.u32 %v1825, 4294901760
      %1933 = vmatpush1.msra.mxu0 %v1932
      %1934 = vmatprep.subr.mxu0 0.0
      %v1935 = vand.u32 %v1826, 4294901760
      %1936 = vmatpush1.msra.mxu0 %v1935
      %1937 = vmatprep.subr.mxu0 0.0
      %v1938 = vand.u32 %v1827, 4294901760
      %1939 = vmatpush1.msra.mxu0 %v1938
      %1940 = vmatprep.subr.mxu0 0.0
      %v1941 = vand.u32 %v1828, 4294901760
      %1942 = vmatpush1.msra.mxu0 %v1941
      %1943 = vmatprep.subr.mxu0 0.0
      %v1944 = vand.u32 %v1929, 4294901760
      %1945 = vmatpush1.msra.mxu0 %v1944
      %1946 = vmatprep.subr.mxu0 0.0
      %1947 = vmatpush1.msra.mxu0 0.0
      %1948 = vmatprep.subr.mxu0 0.0
      %1949 = vmatpush1.msra.mxu0 0.0
      %1950 = vmatprep.subr.mxu0 0.0
      %1951 = vmatpush1.msra.mxu0 0.0
      %1952 = vmatprep.subr.mxu0 0.0
      %1953 = vmatpush1.msra.mxu0 0.0
      %1954 = vmatprep.subr.mxu0 0.0
      %1955 = vmatpush1.msra.mxu0 0.0
      %1956 = vmatprep.subr.mxu0 0.0
      %1957 = vmatpush1.msra.mxu0 0.0
      %1958 = vmatprep.subr.mxu0 0.0
      %1959 = vmatpush1.msra.mxu0 0.0
      %1960 = vmatprep.subr.mxu0 0.0
      %1961 = vmatpush1.msra.mxu0 0.0
      %1962 = vmatprep.subr.mxu0 0.0
      %1963 = vmatpush1.msra.mxu0 0.0
      %1964 = vmatprep.subr.mxu0 0.0
      %1965 = vmatpush1.msra.mxu0 0.0
      %1966 = vmatprep.subr.mxu0 0.0
      %1967 = vmatpush1.msra.mxu0 0.0
      %1968 = vmatprep.subr.mxu0 0.0
      %1969 = vmatpush1.msra.mxu0 0.0
      %1970 = vmatprep.subr.mxu0 0.0
      %1971 = vmatpush1.msra.mxu0 0.0
      %1972 = vmatprep.subr.mxu0 0.0
      %1973 = vmatpush1.msra.mxu0 0.0
      %1974 = vmatprep.subr.mxu0 0.0
      %1975 = vmatpush1.msra.mxu0 0.0
      %1976 = vmatprep.subr.mxu0 0.0
      %1977 = vmatpush1.msra.mxu0 0.0
      %1978 = vmatprep.subr.mxu0 0.0
      %1979 = vmatpush1.msra.mxu0 0.0
      %1980 = vmatprep.subr.mxu0 0.0
      %1981 = vmatpush1.msra.mxu0 0.0
      %1982 = vmatprep.subr.mxu0 0.0
      %1983 = vmatpush1.msra.mxu0 0.0
      %1984 = vmatprep.subr.mxu0 0.0
      %1985 = vmatpush1.msra.mxu0 0.0
      %1986 = vmatprep.subr.mxu0 0.0
      %1987 = vmatpush1.msra.mxu0 0.0
      %1988 = vmatprep.subr.mxu0 0.0
      %1989 = vmatpush1.msra.mxu0 0.0
      %1990 = vmatprep.subr.mxu0 0.0
      %1991 = vmatpush1.msra.mxu0 0.0
      %1992 = vmatprep.subr.mxu0 0.0
      %1993 = vmatpush1.msra.mxu0 0.0
      %1994 = vmatprep.subr.mxu0 0.0
      %1995 = vmatpush1.msra.mxu0 0.0
      %1996 = vmatprep.subr.mxu0 0.0
      %1997 = vmatpush1.msra.mxu0 0.0
      %1998 = vmatprep.subr.mxu0 0.0
      %1999 = vmatpush1.msra.mxu0 0.0
      %2000 = vmatprep.mubr.f32.mxu0 0.0
      %v2001 = vand.u32 %v1832, 4294901760
      %v2002 = vsub.f32 %v1832, %v2001
      %v2003 = vand.u32 %v2002, 4294901760
      %v2004 = vsub.f32 %v2002, %v2003
      %v2005 = vand.u32 %v2004, 4294901760
      %2006 = vmatmul.mubr.f32.gmra.mrb[0].mxu0 %v2005
      %v2007 = vpop.f32.mrb[0].mxu0
      %v2008 = vadd.f32 0.0, %v2007
      %v2009 = vpop.f32.mrb[0].mxu0
      %2010 = vmatprep.mubr.f32.mxu0 0.0
      %v2011 = vand.u32 %v1835, 4294901760
      %v2012 = vsub.f32 %v1835, %v2011
      %v2013 = vand.u32 %v2012, 4294901760
      %v2014 = vsub.f32 %v2012, %v2013
      %v2015 = vand.u32 %v2014, 4294901760
      %2016 = vmatmul.mubr.f32.gmra.mrb[0].mxu0 %v2015
      %v2017 = vpop.f32.mrb[0].mxu0
      %v2018 = vadd.f32 0.0, %v2017
      %v2019 = vpop.f32.mrb[0].mxu0
      %2020 = vmatprep.mubr.f32.mxu0 0.0
      %v2021 = vand.u32 %v1838, 4294901760
      %v2022 = vsub.f32 %v1838, %v2021
      %v2023 = vand.u32 %v2022, 4294901760
      %v2024 = vsub.f32 %v2022, %v2023
      %v2025 = vand.u32 %v2024, 4294901760
      %2026 = vmatmul.mubr.f32.gmra.mrb[0].mxu0 %v2025
      %v2027 = vpop.f32.mrb[0].mxu0
      %v2028 = vadd.f32 0.0, %v2027
      %v2029 = vpop.f32.mrb[0].mxu0
      %2030 = vmatprep.mubr.f32.mxu0 0.0
      %v2031 = vand.u32 %v1841, 4294901760
      %v2032 = vsub.f32 %v1841, %v2031
      %v2033 = vand.u32 %v2032, 4294901760
      %v2034 = vsub.f32 %v2032, %v2033
      %v2035 = vand.u32 %v2034, 4294901760
      %2036 = vmatmul.mubr.f32.gmra.mrb[0].mxu0 %v2035
      %v2037 = vpop.f32.mrb[0].mxu0
      %v2038 = vadd.f32 0.0, %v2037
      %v2039 = vpop.f32.mrb[0].mxu0
      %2040 = vmatprep.mubr.f32.mxu0 0.0
      %v2041 = vand.u32 %v1844, 4294901760
      %v2042 = vsub.f32 %v1844, %v2041
      %v2043 = vand.u32 %v2042, 4294901760
      %v2044 = vsub.f32 %v2042, %v2043
      %v2045 = vand.u32 %v2044, 4294901760
      %2046 = vmatmul.mubr.f32.gmra.mrb[0].mxu0 %v2045
      %v2047 = vpop.f32.mrb[0].mxu0
      %v2048 = vadd.f32 0.0, %v2047
      %v2049 = vpop.f32.mrb[0].mxu0
      %2050 = vmatprep.mubr.f32.mxu0 0.0
      %v2051 = vand.u32 %v1847, 4294901760
      %v2052 = vsub.f32 %v1847, %v2051
      %v2053 = vand.u32 %v2052, 4294901760
      %v2054 = vsub.f32 %v2052, %v2053
      %v2055 = vand.u32 %v2054, 4294901760
      %2056 = vmatmul.mubr.f32.gmra.mrb[0].mxu0 %v2055
      %v2057 = vpop.f32.mrb[0].mxu0
      %v2058 = vadd.f32 0.0, %v2057
      %v2059 = vpop.f32.mrb[0].mxu0
      %2060 = vmatprep.mubr.f32.mxu0 0.0
      %v2061 = vand.u32 %v1850, 4294901760
      %v2062 = vsub.f32 %v1850, %v2061
      %v2063 = vand.u32 %v2062, 4294901760
      %v2064 = vsub.f32 %v2062, %v2063
      %v2065 = vand.u32 %v2064, 4294901760
      %2066 = vmatmul.mubr.f32.gmra.mrb[0].mxu0 %v2065
      %v2067 = vpop.f32.mrb[0].mxu0
      %v2068 = vadd.f32 0.0, %v2067
      %v2069 = vpop.f32.mrb[0].mxu0
      %2070 = vmatprep.mubr.f32.mxu0 0.0
      %v2071 = vand.u32 %v1853, 4294901760
      %v2072 = vsub.f32 %v1853, %v2071
      %v2073 = vand.u32 %v2072, 4294901760
      %v2074 = vsub.f32 %v2072, %v2073
      %v2075 = vand.u32 %v2074, 4294901760
      %2076 = vmatmul.mubr.f32.gmra.mrb[0].mxu0 %v2075
      %v2077 = vpop.f32.mrb[0].mxu0
      %v2078 = vadd.f32 0.0, %v2077
      %v2079 = vpop.f32.mrb[0].mxu0
      %2080 = vmatprep.mubr.f32.mxu0 0.0
      %v2081 = vand.u32 %v1856, 4294901760
      %v2082 = vsub.f32 %v1856, %v2081
      %v2083 = vand.u32 %v2082, 4294901760
      %v2084 = vsub.f32 %v2082, %v2083
      %v2085 = vand.u32 %v2084, 4294901760
      %2086 = vmatmul.mubr.f32.gmra.mrb[0].mxu0 %v2085
      %v2087 = vpop.f32.mrb[0].mxu0
      %v2088 = vadd.f32 0.0, %v2087
      %v2089 = vpop.f32.mrb[0].mxu0
      %2090 = vmatprep.mubr.f32.mxu0 0.0
      %v2091 = vand.u32 %v1859, 4294901760
      %v2092 = vsub.f32 %v1859, %v2091
      %v2093 = vand.u32 %v2092, 4294901760
      %v2094 = vsub.f32 %v2092, %v2093
      %v2095 = vand.u32 %v2094, 4294901760
      %2096 = vmatmul.mubr.f32.gmra.mrb[0].mxu0 %v2095
      %v2097 = vpop.f32.mrb[0].mxu0
      %v2098 = vadd.f32 0.0, %v2097
      %v2099 = vpop.f32.mrb[0].mxu0
      %2100 = vmatprep.mubr.f32.mxu0 0.0
      %v2101 = vand.u32 %v1862, 4294901760
      %v2102 = vsub.f32 %v1862, %v2101
      %v2103 = vand.u32 %v2102, 4294901760
      %v2104 = vsub.f32 %v2102, %v2103
      %v2105 = vand.u32 %v2104, 4294901760
      %2106 = vmatmul.mubr.f32.gmra.mrb[0].mxu0 %v2105
      %v2107 = vpop.f32.mrb[0].mxu0
      %v2108 = vadd.f32 0.0, %v2107
      %v2109 = vpop.f32.mrb[0].mxu0
      %2110 = vmatprep.mubr.f32.mxu0 0.0
      %v2111 = vand.u32 %v1865, 4294901760
      %v2112 = vsub.f32 %v1865, %v2111
      %v2113 = vand.u32 %v2112, 4294901760
      %v2114 = vsub.f32 %v2112, %v2113
      %v2115 = vand.u32 %v2114, 4294901760
      %2116 = vmatmul.mubr.f32.gmra.mrb[0].mxu0 %v2115
      %v2117 = vpop.f32.mrb[0].mxu0
      %v2118 = vadd.f32 0.0, %v2117
      %v2119 = vpop.f32.mrb[0].mxu0
      %2120 = vmatprep.mubr.f32.mxu0 0.0
      %v2121 = vand.u32 %v1868, 4294901760
      %v2122 = vsub.f32 %v1868, %v2121
      %v2123 = vand.u32 %v2122, 4294901760
      %v2124 = vsub.f32 %v2122, %v2123
      %v2125 = vand.u32 %v2124, 4294901760
      %2126 = vmatmul.mubr.f32.gmra.mrb[0].mxu0 %v2125
      %v2127 = vpop.f32.mrb[0].mxu0
      %v2128 = vadd.f32 0.0, %v2127
      %v2129 = vpop.f32.mrb[0].mxu0
      %2130 = vmatprep.mubr.f32.mxu0 0.0
      %v2131 = vand.u32 %v1871, 4294901760
      %v2132 = vsub.f32 %v1871, %v2131
      %v2133 = vand.u32 %v2132, 4294901760
      %v2134 = vsub.f32 %v2132, %v2133
      %v2135 = vand.u32 %v2134, 4294901760
      %2136 = vmatmul.mubr.f32.gmra.mrb[0].mxu0 %v2135
      %v2137 = vpop.f32.mrb[0].mxu0
      %v2138 = vadd.f32 0.0, %v2137
      %v2139 = vpop.f32.mrb[0].mxu0
      %2140 = vmatprep.mubr.f32.mxu0 0.0
      %v2141 = vand.u32 %v1874, 4294901760
      %v2142 = vsub.f32 %v1874, %v2141
      %v2143 = vand.u32 %v2142, 4294901760
      %v2144 = vsub.f32 %v2142, %v2143
      %v2145 = vand.u32 %v2144, 4294901760
      %2146 = vmatmul.mubr.f32.gmra.mrb[0].mxu0 %v2145
      %v2147 = vpop.f32.mrb[0].mxu0
      %v2148 = vadd.f32 0.0, %v2147
      %v2149 = vpop.f32.mrb[0].mxu0
      %2150 = vmatprep.mubr.f32.mxu0 0.0
      %v2151 = vand.u32 %v1877, 4294901760
      %v2152 = vsub.f32 %v1877, %v2151
      %v2153 = vand.u32 %v2152, 4294901760
      %v2154 = vsub.f32 %v2152, %v2153
      %v2155 = vand.u32 %v2154, 4294901760
      %2156 = vmatmul.mubr.f32.gmra.mrb[0].mxu0 %v2155
      %v2157 = vpop.f32.mrb[0].mxu0
      %v2158 = vadd.f32 0.0, %v2157
      %v2159 = vpop.f32.mrb[0].mxu0
      %2160 = vmatprep.mubr.f32.mxu0 0.0
      %v2161 = vand.u32 %v1880, 4294901760
      %v2162 = vsub.f32 %v1880, %v2161
      %v2163 = vand.u32 %v2162, 4294901760
      %v2164 = vsub.f32 %v2162, %v2163
      %v2165 = vand.u32 %v2164, 4294901760
      %2166 = vmatmul.mubr.f32.gmra.mrb[0].mxu0 %v2165
      %v2167 = vpop.f32.mrb[0].mxu0
      %v2168 = vadd.f32 0.0, %v2167
      %v2169 = vpop.f32.mrb[0].mxu0
      %2170 = vmatprep.mubr.f32.mxu0 0.0
      %v2171 = vand.u32 %v1883, 4294901760
      %v2172 = vsub.f32 %v1883, %v2171
      %v2173 = vand.u32 %v2172, 4294901760
      %v2174 = vsub.f32 %v2172, %v2173
      %v2175 = vand.u32 %v2174, 4294901760
      %2176 = vmatmul.mubr.f32.gmra.mrb[0].mxu0 %v2175
      %v2177 = vpop.f32.mrb[0].mxu0
      %v2178 = vadd.f32 0.0, %v2177
      %v2179 = vpop.f32.mrb[0].mxu0
      %2180 = vmatprep.mubr.f32.mxu0 0.0
      %v2181 = vand.u32 %v1886, 4294901760
      %v2182 = vsub.f32 %v1886, %v2181
      %v2183 = vand.u32 %v2182, 4294901760
      %v2184 = vsub.f32 %v2182, %v2183
      %v2185 = vand.u32 %v2184, 4294901760
      %2186 = vmatmul.mubr.f32.gmra.mrb[0].mxu0 %v2185
      %v2187 = vpop.f32.mrb[0].mxu0
      %v2188 = vadd.f32 0.0, %v2187
      %v2189 = vpop.f32.mrb[0].mxu0
      %2190 = vmatprep.mubr.f32.mxu0 0.0
      %v2191 = vand.u32 %v1889, 4294901760
      %v2192 = vsub.f32 %v1889, %v2191
      %v2193 = vand.u32 %v2192, 4294901760
      %v2194 = vsub.f32 %v2192, %v2193
      %v2195 = vand.u32 %v2194, 4294901760
      %2196 = vmatmul.mubr.f32.gmra.mrb[0].mxu0 %v2195
      %v2197 = vpop.f32.mrb[0].mxu0
      %v2198 = vadd.f32 0.0, %v2197
      %v2199 = vpop.f32.mrb[0].mxu0
      %2200 = vmatprep.mubr.f32.mxu0 0.0
      %v2201 = vand.u32 %v1892, 4294901760
      %v2202 = vsub.f32 %v1892, %v2201
      %v2203 = vand.u32 %v2202, 4294901760
      %v2204 = vsub.f32 %v2202, %v2203
      %v2205 = vand.u32 %v2204, 4294901760
      %2206 = vmatmul.mubr.f32.gmra.mrb[0].mxu0 %v2205
      %v2207 = vpop.f32.mrb[0].mxu0
      %v2208 = vadd.f32 0.0, %v2207
      %v2209 = vpop.f32.mrb[0].mxu0
      %2210 = vmatprep.mubr.f32.mxu0 0.0
      %v2211 = vand.u32 %v1895, 4294901760
      %v2212 = vsub.f32 %v1895, %v2211
      %v2213 = vand.u32 %v2212, 4294901760
      %v2214 = vsub.f32 %v2212, %v2213
      %v2215 = vand.u32 %v2214, 4294901760
      %2216 = vmatmul.mubr.f32.gmra.mrb[0].mxu0 %v2215
      %v2217 = vpop.f32.mrb[0].mxu0
      %v2218 = vadd.f32 0.0, %v2217
      %v2219 = vpop.f32.mrb[0].mxu0
      %2220 = vmatprep.mubr.f32.mxu0 0.0
      %v2221 = vand.u32 %v1898, 4294901760
      %v2222 = vsub.f32 %v1898, %v2221
      %v2223 = vand.u32 %v2222, 4294901760
      %v2224 = vsub.f32 %v2222, %v2223
      %v2225 = vand.u32 %v2224, 4294901760
      %2226 = vmatmul.mubr.f32.gmra.mrb[0].mxu0 %v2225
      %v2227 = vpop.f32.mrb[0].mxu0
      %v2228 = vadd.f32 0.0, %v2227
      %v2229 = vpop.f32.mrb[0].mxu0
      %2230 = vmatprep.mubr.f32.mxu0 0.0
      %v2231 = vand.u32 %v1901, 4294901760
      %v2232 = vsub.f32 %v1901, %v2231
      %v2233 = vand.u32 %v2232, 4294901760
      %v2234 = vsub.f32 %v2232, %v2233
      %v2235 = vand.u32 %v2234, 4294901760
      %2236 = vmatmul.mubr.f32.gmra.mrb[0].mxu0 %v2235
      %v2237 = vpop.f32.mrb[0].mxu0
      %v2238 = vadd.f32 0.0, %v2237
      %v2239 = vpop.f32.mrb[0].mxu0
      %2240 = vmatprep.mubr.f32.mxu0 0.0
      %v2241 = vand.u32 %v1904, 4294901760
      %v2242 = vsub.f32 %v1904, %v2241
      %v2243 = vand.u32 %v2242, 4294901760
      %v2244 = vsub.f32 %v2242, %v2243
      %v2245 = vand.u32 %v2244, 4294901760
      %2246 = vmatmul.mubr.f32.gmra.mrb[0].mxu0 %v2245
      %v2247 = vpop.f32.mrb[0].mxu0
      %v2248 = vadd.f32 0.0, %v2247
      %v2249 = vpop.f32.mrb[0].mxu0
      %2250 = vmatprep.mubr.f32.mxu0 0.0
      %v2251 = vand.u32 %v1907, 4294901760
      %v2252 = vsub.f32 %v1907, %v2251
      %v2253 = vand.u32 %v2252, 4294901760
      %v2254 = vsub.f32 %v2252, %v2253
      %v2255 = vand.u32 %v2254, 4294901760
      %2256 = vmatmul.mubr.f32.gmra.mrb[0].mxu0 %v2255
      %v2257 = vpop.f32.mrb[0].mxu0
      %v2258 = vadd.f32 0.0, %v2257
      %v2259 = vpop.f32.mrb[0].mxu0
      %2260 = vmatprep.mubr.f32.mxu0 0.0
      %v2261 = vand.u32 %v1910, 4294901760
      %v2262 = vsub.f32 %v1910, %v2261
      %v2263 = vand.u32 %v2262, 4294901760
      %v2264 = vsub.f32 %v2262, %v2263
      %v2265 = vand.u32 %v2264, 4294901760
      %2266 = vmatmul.mubr.f32.gmra.mrb[0].mxu0 %v2265
      %v2267 = vpop.f32.mrb[0].mxu0
      %v2268 = vadd.f32 0.0, %v2267
      %v2269 = vpop.f32.mrb[0].mxu0
      %2270 = vmatprep.mubr.f32.mxu0 0.0
      %v2271 = vand.u32 %v1913, 4294901760
      %v2272 = vsub.f32 %v1913, %v2271
      %v2273 = vand.u32 %v2272, 4294901760
      %v2274 = vsub.f32 %v2272, %v2273
      %v2275 = vand.u32 %v2274, 4294901760
      %2276 = vmatmul.mubr.f32.gmra.mrb[0].mxu0 %v2275
      %v2277 = vpop.f32.mrb[0].mxu0
      %v2278 = vadd.f32 0.0, %v2277
      %v2279 = vpop.f32.mrb[0].mxu0
      %2280 = vmatprep.mubr.f32.mxu0 0.0
      %v2281 = vand.u32 %v1916, 4294901760
      %v2282 = vsub.f32 %v1916, %v2281
      %v2283 = vand.u32 %v2282, 4294901760
      %v2284 = vsub.f32 %v2282, %v2283
      %v2285 = vand.u32 %v2284, 4294901760
      %2286 = vmatmul.mubr.f32.gmra.mrb[0].mxu0 %v2285
      %v2287 = vpop.f32.mrb[0].mxu0
      %v2288 = vadd.f32 0.0, %v2287
      %v2289 = vpop.f32.mrb[0].mxu0
      %2290 = vmatprep.mubr.f32.mxu0 0.0
      %v2291 = vand.u32 %v1919, 4294901760
      %v2292 = vsub.f32 %v1919, %v2291
      %v2293 = vand.u32 %v2292, 4294901760
      %v2294 = vsub.f32 %v2292, %v2293
      %v2295 = vand.u32 %v2294, 4294901760
      %2296 = vmatmul.mubr.f32.gmra.mrb[0].mxu0 %v2295
      %v2297 = vpop.f32.mrb[0].mxu0
      %v2298 = vadd.f32 0.0, %v2297
      %v2299 = vpop.f32.mrb[0].mxu0
      %2300 = vmatprep.mubr.f32.mxu0 0.0
      %v2301 = vand.u32 %v1922, 4294901760
      %v2302 = vsub.f32 %v1922, %v2301
      %v2303 = vand.u32 %v2302, 4294901760
      %v2304 = vsub.f32 %v2302, %v2303
      %v2305 = vand.u32 %v2304, 4294901760
      %2306 = vmatmul.mubr.f32.gmra.mrb[0].mxu0 %v2305
      %v2307 = vpop.f32.mrb[0].mxu0
      %v2308 = vadd.f32 0.0, %v2307
      %v2309 = vpop.f32.mrb[0].mxu0
      %2310 = vmatprep.mubr.f32.mxu0 0.0
      %v2311 = vand.u32 %v1925, 4294901760
      %v2312 = vsub.f32 %v1925, %v2311
      %v2313 = vand.u32 %v2312, 4294901760
      %v2314 = vsub.f32 %v2312, %v2313
      %v2315 = vand.u32 %v2314, 4294901760
      %2316 = vmatmul.mubr.f32.gmra.mrb[0].mxu0 %v2315
      %v2317 = vpop.f32.mrb[0].mxu0
      %v2318 = vadd.f32 0.0, %v2317
      %v2319 = vpop.f32.mrb[0].mxu0
      %2320 = vdwg.mxu0
      %2321 = vmatprep.subr.mxu0 0.0
      %v2322 = vand.u32 %v1825, 4294901760
      %v2323 = vsub.f32 %v1825, %v2322
      %v2324 = vand.u32 %v2323, 4294901760
      %v2325 = vsub.f32 %v2323, %v2324
      %v2326 = vand.u32 %v2325, 4294901760
      %2327 = vmatpush1.msra.mxu0 %v2326
      %2328 = vmatprep.subr.mxu0 0.0
      %v2329 = vand.u32 %v1826, 4294901760
      %v2330 = vsub.f32 %v1826, %v2329
      %v2331 = vand.u32 %v2330, 4294901760
      %v2332 = vsub.f32 %v2330, %v2331
      %v2333 = vand.u32 %v2332, 4294901760
      %2334 = vmatpush1.msra.mxu0 %v2333
      %2335 = vmatprep.subr.mxu0 0.0
      %v2336 = vand.u32 %v1827, 4294901760
      %v2337 = vsub.f32 %v1827, %v2336
      %v2338 = vand.u32 %v2337, 4294901760
      %v2339 = vsub.f32 %v2337, %v2338
      %v2340 = vand.u32 %v2339, 4294901760
      %2341 = vmatpush1.msra.mxu0 %v2340
      %2342 = vmatprep.subr.mxu0 0.0
      %v2343 = vand.u32 %v1828, 4294901760
      %v2344 = vsub.f32 %v1828, %v2343
      %v2345 = vand.u32 %v2344, 4294901760
      %v2346 = vsub.f32 %v2344, %v2345
      %v2347 = vand.u32 %v2346, 4294901760
      %2348 = vmatpush1.msra.mxu0 %v2347
      %2349 = vmatprep.subr.mxu0 0.0
      %v2350 = vand.u32 %v1929, 4294901760
      %v2351 = vsub.f32 %v1929, %v2350
      %v2352 = vand.u32 %v2351, 4294901760
      %v2353 = vsub.f32 %v2351, %v2352
      %v2354 = vand.u32 %v2353, 4294901760
      %2355 = vmatpush1.msra.mxu0 %v2354
      %2356 = vmatprep.subr.mxu0 0.0
      %2357 = vmatpush1.msra.mxu0 0.0
      %2358 = vmatprep.subr.mxu0 0.0
      %2359 = vmatpush1.msra.mxu0 0.0
      %2360 = vmatprep.subr.mxu0 0.0
      %2361 = vmatpush1.msra.mxu0 0.0
      %2362 = vmatprep.subr.mxu0 0.0
      %2363 = vmatpush1.msra.mxu0 0.0
      %2364 = vmatprep.subr.mxu0 0.0
      %2365 = vmatpush1.msra.mxu0 0.0
      %2366 = vmatprep.subr.mxu0 0.0
      %2367 = vmatpush1.msra.mxu0 0.0
      %2368 = vmatprep.subr.mxu0 0.0
      %2369 = vmatpush1.msra.mxu0 0.0
      %2370 = vmatprep.subr.mxu0 0.0
      %2371 = vmatpush1.msra.mxu0 0.0
      %2372 = vmatprep.subr.mxu0 0.0
      %2373 = vmatpush1.msra.mxu0 0.0
      %2374 = vmatprep.subr.mxu0 0.0
      %2375 = vmatpush1.msra.mxu0 0.0
      %2376 = vmatprep.subr.mxu0 0.0
      %2377 = vmatpush1.msra.mxu0 0.0
      %2378 = vmatprep.subr.mxu0 0.0
      %2379 = vmatpush1.msra.mxu0 0.0
      %2380 = vmatprep.subr.mxu0 0.0
      %2381 = vmatpush1.msra.mxu0 0.0
      %2382 = vmatprep.subr.mxu0 0.0
      %2383 = vmatpush1.msra.mxu0 0.0
      %2384 = vmatprep.subr.mxu0 0.0
      %2385 = vmatpush1.msra.mxu0 0.0
      %2386 = vmatprep.subr.mxu0 0.0
      %2387 = vmatpush1.msra.mxu0 0.0
      %2388 = vmatprep.subr.mxu0 0.0
      %2389 = vmatpush1.msra.mxu0 0.0
      %2390 = vmatprep.subr.mxu0 0.0
      %2391 = vmatpush1.msra.mxu0 0.0
      %2392 = vmatprep.subr.mxu0 0.0
      %2393 = vmatpush1.msra.mxu0 0.0
      %2394 = vmatprep.subr.mxu0 0.0
      %2395 = vmatpush1.msra.mxu0 0.0
      %2396 = vmatprep.subr.mxu0 0.0
      %2397 = vmatpush1.msra.mxu0 0.0
      %2398 = vmatprep.subr.mxu0 0.0
      %2399 = vmatpush1.msra.mxu0 0.0
      %2400 = vmatprep.subr.mxu0 0.0
      %2401 = vmatpush1.msra.mxu0 0.0
      %2402 = vmatprep.subr.mxu0 0.0
      %2403 = vmatpush1.msra.mxu0 0.0
      %2404 = vmatprep.subr.mxu0 0.0
      %2405 = vmatpush1.msra.mxu0 0.0
      %2406 = vmatprep.subr.mxu0 0.0
      %2407 = vmatpush1.msra.mxu0 0.0
      %2408 = vmatprep.subr.mxu0 0.0
      %2409 = vmatpush1.msra.mxu0 0.0
      %2410 = vmatprep.mubr.f32.mxu0 0.0
      %v2411 = vand.u32 %v1832, 4294901760
      %2412 = vmatmul.mubr.f32.gmra.mrb[0].mxu0 %v2411
      %v2413 = vpop.f32.mrb[0].mxu0
      %v2414 = vadd.f32 %v2008, %v2413
      %v2415 = vpop.f32.mrb[0].mxu0
      %2416 = vmatprep.mubr.f32.mxu0 0.0
      %v2417 = vand.u32 %v1835, 4294901760
      %2418 = vmatmul.mubr.f32.gmra.mrb[0].mxu0 %v2417
      %v2419 = vpop.f32.mrb[0].mxu0
      %v2420 = vadd.f32 %v2018, %v2419
      %v2421 = vpop.f32.mrb[0].mxu0
      %2422 = vmatprep.mubr.f32.mxu0 0.0
      %v2423 = vand.u32 %v1838, 4294901760
      %2424 = vmatmul.mubr.f32.gmra.mrb[0].mxu0 %v2423
      %v2425 = vpop.f32.mrb[0].mxu0
      %v2426 = vadd.f32 %v2028, %v2425
      %v2427 = vpop.f32.mrb[0].mxu0
      %2428 = vmatprep.mubr.f32.mxu0 0.0
      %v2429 = vand.u32 %v1841, 4294901760
      %2430 = vmatmul.mubr.f32.gmra.mrb[0].mxu0 %v2429
      %v2431 = vpop.f32.mrb[0].mxu0
      %v2432 = vadd.f32 %v2038, %v2431
      %v2433 = vpop.f32.mrb[0].mxu0
      %2434 = vmatprep.mubr.f32.mxu0 0.0
      %v2435 = vand.u32 %v1844, 4294901760
      %2436 = vmatmul.mubr.f32.gmra.mrb[0].mxu0 %v2435
      %v2437 = vpop.f32.mrb[0].mxu0
      %v2438 = vadd.f32 %v2048, %v2437
      %v2439 = vpop.f32.mrb[0].mxu0
      %2440 = vmatprep.mubr.f32.mxu0 0.0
      %v2441 = vand.u32 %v1847, 4294901760
      %2442 = vmatmul.mubr.f32.gmra.mrb[0].mxu0 %v2441
      %v2443 = vpop.f32.mrb[0].mxu0
      %v2444 = vadd.f32 %v2058, %v2443
      %v2445 = vpop.f32.mrb[0].mxu0
      %2446 = vmatprep.mubr.f32.mxu0 0.0
      %v2447 = vand.u32 %v1850, 4294901760
      %2448 = vmatmul.mubr.f32.gmra.mrb[0].mxu0 %v2447
      %v2449 = vpop.f32.mrb[0].mxu0
      %v2450 = vadd.f32 %v2068, %v2449
      %v2451 = vpop.f32.mrb[0].mxu0
      %2452 = vmatprep.mubr.f32.mxu0 0.0
      %v2453 = vand.u32 %v1853, 4294901760
      %2454 = vmatmul.mubr.f32.gmra.mrb[0].mxu0 %v2453
      %v2455 = vpop.f32.mrb[0].mxu0
      %v2456 = vadd.f32 %v2078, %v2455
      %v2457 = vpop.f32.mrb[0].mxu0
      %2458 = vmatprep.mubr.f32.mxu0 0.0
      %v2459 = vand.u32 %v1856, 4294901760
      %2460 = vmatmul.mubr.f32.gmra.mrb[0].mxu0 %v2459
      %v2461 = vpop.f32.mrb[0].mxu0
      %v2462 = vadd.f32 %v2088, %v2461
      %v2463 = vpop.f32.mrb[0].mxu0
      %2464 = vmatprep.mubr.f32.mxu0 0.0
      %v2465 = vand.u32 %v1859, 4294901760
      %2466 = vmatmul.mubr.f32.gmra.mrb[0].mxu0 %v2465
      %v2467 = vpop.f32.mrb[0].mxu0
      %v2468 = vadd.f32 %v2098, %v2467
      %v2469 = vpop.f32.mrb[0].mxu0
      %2470 = vmatprep.mubr.f32.mxu0 0.0
      %v2471 = vand.u32 %v1862, 4294901760
      %2472 = vmatmul.mubr.f32.gmra.mrb[0].mxu0 %v2471
      %v2473 = vpop.f32.mrb[0].mxu0
      %v2474 = vadd.f32 %v2108, %v2473
      %v2475 = vpop.f32.mrb[0].mxu0
      %2476 = vmatprep.mubr.f32.mxu0 0.0
      %v2477 = vand.u32 %v1865, 4294901760
      %2478 = vmatmul.mubr.f32.gmra.mrb[0].mxu0 %v2477
      %v2479 = vpop.f32.mrb[0].mxu0
      %v2480 = vadd.f32 %v2118, %v2479
      %v2481 = vpop.f32.mrb[0].mxu0
      %2482 = vmatprep.mubr.f32.mxu0 0.0
      %v2483 = vand.u32 %v1868, 4294901760
      %2484 = vmatmul.mubr.f32.gmra.mrb[0].mxu0 %v2483
      %v2485 = vpop.f32.mrb[0].mxu0
      %v2486 = vadd.f32 %v2128, %v2485
      %v2487 = vpop.f32.mrb[0].mxu0
      %2488 = vmatprep.mubr.f32.mxu0 0.0
      %v2489 = vand.u32 %v1871, 4294901760
      %2490 = vmatmul.mubr.f32.gmra.mrb[0].mxu0 %v2489
      %v2491 = vpop.f32.mrb[0].mxu0
      %v2492 = vadd.f32 %v2138, %v2491
      %v2493 = vpop.f32.mrb[0].mxu0
      %2494 = vmatprep.mubr.f32.mxu0 0.0
      %v2495 = vand.u32 %v1874, 4294901760
      %2496 = vmatmul.mubr.f32.gmra.mrb[0].mxu0 %v2495
      %v2497 = vpop.f32.mrb[0].mxu0
      %v2498 = vadd.f32 %v2148, %v2497
      %v2499 = vpop.f32.mrb[0].mxu0
      %2500 = vmatprep.mubr.f32.mxu0 0.0
      %v2501 = vand.u32 %v1877, 4294901760
      %2502 = vmatmul.mubr.f32.gmra.mrb[0].mxu0 %v2501
      %v2503 = vpop.f32.mrb[0].mxu0
      %v2504 = vadd.f32 %v2158, %v2503
      %v2505 = vpop.f32.mrb[0].mxu0
      %2506 = vmatprep.mubr.f32.mxu0 0.0
      %v2507 = vand.u32 %v1880, 4294901760
      %2508 = vmatmul.mubr.f32.gmra.mrb[0].mxu0 %v2507
      %v2509 = vpop.f32.mrb[0].mxu0
      %v2510 = vadd.f32 %v2168, %v2509
      %v2511 = vpop.f32.mrb[0].mxu0
      %2512 = vmatprep.mubr.f32.mxu0 0.0
      %v2513 = vand.u32 %v1883, 4294901760
      %2514 = vmatmul.mubr.f32.gmra.mrb[0].mxu0 %v2513
      %v2515 = vpop.f32.mrb[0].mxu0
      %v2516 = vadd.f32 %v2178, %v2515
      %v2517 = vpop.f32.mrb[0].mxu0
      %2518 = vmatprep.mubr.f32.mxu0 0.0
      %v2519 = vand.u32 %v1886, 4294901760
      %2520 = vmatmul.mubr.f32.gmra.mrb[0].mxu0 %v2519
      %v2521 = vpop.f32.mrb[0].mxu0
      %v2522 = vadd.f32 %v2188, %v2521
      %v2523 = vpop.f32.mrb[0].mxu0
      %2524 = vmatprep.mubr.f32.mxu0 0.0
      %v2525 = vand.u32 %v1889, 4294901760
      %2526 = vmatmul.mubr.f32.gmra.mrb[0].mxu0 %v2525
      %v2527 = vpop.f32.mrb[0].mxu0
      %v2528 = vadd.f32 %v2198, %v2527
      %v2529 = vpop.f32.mrb[0].mxu0
      %2530 = vmatprep.mubr.f32.mxu0 0.0
      %v2531 = vand.u32 %v1892, 4294901760
      %2532 = vmatmul.mubr.f32.gmra.mrb[0].mxu0 %v2531
      %v2533 = vpop.f32.mrb[0].mxu0
      %v2534 = vadd.f32 %v2208, %v2533
      %v2535 = vpop.f32.mrb[0].mxu0
      %2536 = vmatprep.mubr.f32.mxu0 0.0
      %v2537 = vand.u32 %v1895, 4294901760
      %2538 = vmatmul.mubr.f32.gmra.mrb[0].mxu0 %v2537
      %v2539 = vpop.f32.mrb[0].mxu0
      %v2540 = vadd.f32 %v2218, %v2539
      %v2541 = vpop.f32.mrb[0].mxu0
      %2542 = vmatprep.mubr.f32.mxu0 0.0
      %v2543 = vand.u32 %v1898, 4294901760
      %2544 = vmatmul.mubr.f32.gmra.mrb[0].mxu0 %v2543
      %v2545 = vpop.f32.mrb[0].mxu0
      %v2546 = vadd.f32 %v2228, %v2545
      %v2547 = vpop.f32.mrb[0].mxu0
      %2548 = vmatprep.mubr.f32.mxu0 0.0
      %v2549 = vand.u32 %v1901, 4294901760
      %2550 = vmatmul.mubr.f32.gmra.mrb[0].mxu0 %v2549
      %v2551 = vpop.f32.mrb[0].mxu0
      %v2552 = vadd.f32 %v2238, %v2551
      %v2553 = vpop.f32.mrb[0].mxu0
      %2554 = vmatprep.mubr.f32.mxu0 0.0
      %v2555 = vand.u32 %v1904, 4294901760
      %2556 = vmatmul.mubr.f32.gmra.mrb[0].mxu0 %v2555
      %v2557 = vpop.f32.mrb[0].mxu0
      %v2558 = vadd.f32 %v2248, %v2557
      %v2559 = vpop.f32.mrb[0].mxu0
      %2560 = vmatprep.mubr.f32.mxu0 0.0
      %v2561 = vand.u32 %v1907, 4294901760
      %2562 = vmatmul.mubr.f32.gmra.mrb[0].mxu0 %v2561
      %v2563 = vpop.f32.mrb[0].mxu0
      %v2564 = vadd.f32 %v2258, %v2563
      %v2565 = vpop.f32.mrb[0].mxu0
      %2566 = vmatprep.mubr.f32.mxu0 0.0
      %v2567 = vand.u32 %v1910, 4294901760
      %2568 = vmatmul.mubr.f32.gmra.mrb[0].mxu0 %v2567
      %v2569 = vpop.f32.mrb[0].mxu0
      %v2570 = vadd.f32 %v2268, %v2569
      %v2571 = vpop.f32.mrb[0].mxu0
      %2572 = vmatprep.mubr.f32.mxu0 0.0
      %v2573 = vand.u32 %v1913, 4294901760
      %2574 = vmatmul.mubr.f32.gmra.mrb[0].mxu0 %v2573
      %v2575 = vpop.f32.mrb[0].mxu0
      %v2576 = vadd.f32 %v2278, %v2575
      %v2577 = vpop.f32.mrb[0].mxu0
      %2578 = vmatprep.mubr.f32.mxu0 0.0
      %v2579 = vand.u32 %v1916, 4294901760
      %2580 = vmatmul.mubr.f32.gmra.mrb[0].mxu0 %v2579
      %v2581 = vpop.f32.mrb[0].mxu0
      %v2582 = vadd.f32 %v2288, %v2581
      %v2583 = vpop.f32.mrb[0].mxu0
      %2584 = vmatprep.mubr.f32.mxu0 0.0
      %v2585 = vand.u32 %v1919, 4294901760
      %2586 = vmatmul.mubr.f32.gmra.mrb[0].mxu0 %v2585
      %v2587 = vpop.f32.mrb[0].mxu0
      %v2588 = vadd.f32 %v2298, %v2587
      %v2589 = vpop.f32.mrb[0].mxu0
      %2590 = vmatprep.mubr.f32.mxu0 0.0
      %v2591 = vand.u32 %v1922, 4294901760
      %2592 = vmatmul.mubr.f32.gmra.mrb[0].mxu0 %v2591
      %v2593 = vpop.f32.mrb[0].mxu0
      %v2594 = vadd.f32 %v2308, %v2593
      %v2595 = vpop.f32.mrb[0].mxu0
      %2596 = vmatprep.mubr.f32.mxu0 0.0
      %v2597 = vand.u32 %v1925, 4294901760
      %2598 = vmatmul.mubr.f32.gmra.mrb[0].mxu0 %v2597
      %v2599 = vpop.f32.mrb[0].mxu0
      %v2600 = vadd.f32 %v2318, %v2599
      %v2601 = vpop.f32.mrb[0].mxu0
      %2602 = vdwg.mxu0
      %2603 = vmatprep.subr.mxu0 0.0
      %v2604 = vand.u32 %v1825, 4294901760
      %v2605 = vsub.f32 %v1825, %v2604
      %2606 = vmatpush1.msra.mxu0 %v2605
      %2607 = vmatprep.subr.mxu0 0.0
      %v2608 = vand.u32 %v1826, 4294901760
      %v2609 = vsub.f32 %v1826, %v2608
      %2610 = vmatpush1.msra.mxu0 %v2609
      %2611 = vmatprep.subr.mxu0 0.0
      %v2612 = vand.u32 %v1827, 4294901760
      %v2613 = vsub.f32 %v1827, %v2612
      %2614 = vmatpush1.msra.mxu0 %v2613
      %2615 = vmatprep.subr.mxu0 0.0
      %v2616 = vand.u32 %v1828, 4294901760
      %v2617 = vsub.f32 %v1828, %v2616
      %2618 = vmatpush1.msra.mxu0 %v2617
      %2619 = vmatprep.subr.mxu0 0.0
      %v2620 = vand.u32 %v1929, 4294901760
      %v2621 = vsub.f32 %v1929, %v2620
      %2622 = vmatpush1.msra.mxu0 %v2621
      %2623 = vmatprep.subr.mxu0 0.0
      %2624 = vmatpush1.msra.mxu0 0.0
      %2625 = vmatprep.subr.mxu0 0.0
      %2626 = vmatpush1.msra.mxu0 0.0
      %2627 = vmatprep.subr.mxu0 0.0
      %2628 = vmatpush1.msra.mxu0 0.0
      %2629 = vmatprep.subr.mxu0 0.0
      %2630 = vmatpush1.msra.mxu0 0.0
      %2631 = vmatprep.subr.mxu0 0.0
      %2632 = vmatpush1.msra.mxu0 0.0
      %2633 = vmatprep.subr.mxu0 0.0
      %2634 = vmatpush1.msra.mxu0 0.0
      %2635 = vmatprep.subr.mxu0 0.0
      %2636 = vmatpush1.msra.mxu0 0.0
      %2637 = vmatprep.subr.mxu0 0.0
      %2638 = vmatpush1.msra.mxu0 0.0
      %2639 = vmatprep.subr.mxu0 0.0
      %2640 = vmatpush1.msra.mxu0 0.0
      %2641 = vmatprep.subr.mxu0 0.0
      %2642 = vmatpush1.msra.mxu0 0.0
      %2643 = vmatprep.subr.mxu0 0.0
      %2644 = vmatpush1.msra.mxu0 0.0
      %2645 = vmatprep.subr.mxu0 0.0
      %2646 = vmatpush1.msra.mxu0 0.0
      %2647 = vmatprep.subr.mxu0 0.0
      %2648 = vmatpush1.msra.mxu0 0.0
      %2649 = vmatprep.subr.mxu0 0.0
      %2650 = vmatpush1.msra.mxu0 0.0
      %2651 = vmatprep.subr.mxu0 0.0
      %2652 = vmatpush1.msra.mxu0 0.0
      %2653 = vmatprep.subr.mxu0 0.0
      %2654 = vmatpush1.msra.mxu0 0.0
      %2655 = vmatprep.subr.mxu0 0.0
      %2656 = vmatpush1.msra.mxu0 0.0
      %2657 = vmatprep.subr.mxu0 0.0
      %2658 = vmatpush1.msra.mxu0 0.0
      %2659 = vmatprep.subr.mxu0 0.0
      %2660 = vmatpush1.msra.mxu0 0.0
      %2661 = vmatprep.subr.mxu0 0.0
      %2662 = vmatpush1.msra.mxu0 0.0
      %2663 = vmatprep.subr.mxu0 0.0
      %2664 = vmatpush1.msra.mxu0 0.0
      %2665 = vmatprep.subr.mxu0 0.0
      %2666 = vmatpush1.msra.mxu0 0.0
      %2667 = vmatprep.subr.mxu0 0.0
      %2668 = vmatpush1.msra.mxu0 0.0
      %2669 = vmatprep.subr.mxu0 0.0
      %2670 = vmatpush1.msra.mxu0 0.0
      %2671 = vmatprep.subr.mxu0 0.0
      %2672 = vmatpush1.msra.mxu0 0.0
      %2673 = vmatprep.subr.mxu0 0.0
      %2674 = vmatpush1.msra.mxu0 0.0
      %2675 = vmatprep.subr.mxu0 0.0
      %2676 = vmatpush1.msra.mxu0 0.0
      %2677 = vmatprep.mubr.f32.mxu0 0.0
      %v2678 = vand.u32 %v1832, 4294901760
      %v2679 = vsub.f32 %v1832, %v2678
      %2680 = vmatmul.mubr.f32.gmra.mrb[0].mxu0 %v2679
      %v2681 = vpop.f32.mrb[0].mxu0
      %v2682 = vadd.f32 %v2414, %v2681
      %v2683 = vpop.f32.mrb[0].mxu0
      %2684 = vmatprep.mubr.f32.mxu0 0.0
      %v2685 = vand.u32 %v1835, 4294901760
      %v2686 = vsub.f32 %v1835, %v2685
      %2687 = vmatmul.mubr.f32.gmra.mrb[0].mxu0 %v2686
      %v2688 = vpop.f32.mrb[0].mxu0
      %v2689 = vadd.f32 %v2420, %v2688
      %v2690 = vpop.f32.mrb[0].mxu0
      %2691 = vmatprep.mubr.f32.mxu0 0.0
      %v2692 = vand.u32 %v1838, 4294901760
      %v2693 = vsub.f32 %v1838, %v2692
      %2694 = vmatmul.mubr.f32.gmra.mrb[0].mxu0 %v2693
      %v2695 = vpop.f32.mrb[0].mxu0
      %v2696 = vadd.f32 %v2426, %v2695
      %v2697 = vpop.f32.mrb[0].mxu0
      %2698 = vmatprep.mubr.f32.mxu0 0.0
      %v2699 = vand.u32 %v1841, 4294901760
      %v2700 = vsub.f32 %v1841, %v2699
      %2701 = vmatmul.mubr.f32.gmra.mrb[0].mxu0 %v2700
      %v2702 = vpop.f32.mrb[0].mxu0
      %v2703 = vadd.f32 %v2432, %v2702
      %v2704 = vpop.f32.mrb[0].mxu0
      %2705 = vmatprep.mubr.f32.mxu0 0.0
      %v2706 = vand.u32 %v1844, 4294901760
      %v2707 = vsub.f32 %v1844, %v2706
      %2708 = vmatmul.mubr.f32.gmra.mrb[0].mxu0 %v2707
      %v2709 = vpop.f32.mrb[0].mxu0
      %v2710 = vadd.f32 %v2438, %v2709
      %v2711 = vpop.f32.mrb[0].mxu0
      %2712 = vmatprep.mubr.f32.mxu0 0.0
      %v2713 = vand.u32 %v1847, 4294901760
      %v2714 = vsub.f32 %v1847, %v2713
      %2715 = vmatmul.mubr.f32.gmra.mrb[0].mxu0 %v2714
      %v2716 = vpop.f32.mrb[0].mxu0
      %v2717 = vadd.f32 %v2444, %v2716
      %v2718 = vpop.f32.mrb[0].mxu0
      %2719 = vmatprep.mubr.f32.mxu0 0.0
      %v2720 = vand.u32 %v1850, 4294901760
      %v2721 = vsub.f32 %v1850, %v2720
      %2722 = vmatmul.mubr.f32.gmra.mrb[0].mxu0 %v2721
      %v2723 = vpop.f32.mrb[0].mxu0
      %v2724 = vadd.f32 %v2450, %v2723
      %v2725 = vpop.f32.mrb[0].mxu0
      %2726 = vmatprep.mubr.f32.mxu0 0.0
      %v2727 = vand.u32 %v1853, 4294901760
      %v2728 = vsub.f32 %v1853, %v2727
      %2729 = vmatmul.mubr.f32.gmra.mrb[0].mxu0 %v2728
      %v2730 = vpop.f32.mrb[0].mxu0
      %v2731 = vadd.f32 %v2456, %v2730
      %v2732 = vpop.f32.mrb[0].mxu0
      %2733 = vmatprep.mubr.f32.mxu0 0.0
      %v2734 = vand.u32 %v1856, 4294901760
      %v2735 = vsub.f32 %v1856, %v2734
      %2736 = vmatmul.mubr.f32.gmra.mrb[0].mxu0 %v2735
      %v2737 = vpop.f32.mrb[0].mxu0
      %v2738 = vadd.f32 %v2462, %v2737
      %v2739 = vpop.f32.mrb[0].mxu0
      %2740 = vmatprep.mubr.f32.mxu0 0.0
      %v2741 = vand.u32 %v1859, 4294901760
      %v2742 = vsub.f32 %v1859, %v2741
      %2743 = vmatmul.mubr.f32.gmra.mrb[0].mxu0 %v2742
      %v2744 = vpop.f32.mrb[0].mxu0
      %v2745 = vadd.f32 %v2468, %v2744
      %v2746 = vpop.f32.mrb[0].mxu0
      %2747 = vmatprep.mubr.f32.mxu0 0.0
      %v2748 = vand.u32 %v1862, 4294901760
      %v2749 = vsub.f32 %v1862, %v2748
      %2750 = vmatmul.mubr.f32.gmra.mrb[0].mxu0 %v2749
      %v2751 = vpop.f32.mrb[0].mxu0
      %v2752 = vadd.f32 %v2474, %v2751
      %v2753 = vpop.f32.mrb[0].mxu0
      %2754 = vmatprep.mubr.f32.mxu0 0.0
      %v2755 = vand.u32 %v1865, 4294901760
      %v2756 = vsub.f32 %v1865, %v2755
      %2757 = vmatmul.mubr.f32.gmra.mrb[0].mxu0 %v2756
      %v2758 = vpop.f32.mrb[0].mxu0
      %v2759 = vadd.f32 %v2480, %v2758
      %v2760 = vpop.f32.mrb[0].mxu0
      %2761 = vmatprep.mubr.f32.mxu0 0.0
      %v2762 = vand.u32 %v1868, 4294901760
      %v2763 = vsub.f32 %v1868, %v2762
      %2764 = vmatmul.mubr.f32.gmra.mrb[0].mxu0 %v2763
      %v2765 = vpop.f32.mrb[0].mxu0
      %v2766 = vadd.f32 %v2486, %v2765
      %v2767 = vpop.f32.mrb[0].mxu0
      %2768 = vmatprep.mubr.f32.mxu0 0.0
      %v2769 = vand.u32 %v1871, 4294901760
      %v2770 = vsub.f32 %v1871, %v2769
      %2771 = vmatmul.mubr.f32.gmra.mrb[0].mxu0 %v2770
      %v2772 = vpop.f32.mrb[0].mxu0
      %v2773 = vadd.f32 %v2492, %v2772
      %v2774 = vpop.f32.mrb[0].mxu0
      %2775 = vmatprep.mubr.f32.mxu0 0.0
      %v2776 = vand.u32 %v1874, 4294901760
      %v2777 = vsub.f32 %v1874, %v2776
      %2778 = vmatmul.mubr.f32.gmra.mrb[0].mxu0 %v2777
      %v2779 = vpop.f32.mrb[0].mxu0
      %v2780 = vadd.f32 %v2498, %v2779
      %v2781 = vpop.f32.mrb[0].mxu0
      %2782 = vmatprep.mubr.f32.mxu0 0.0
      %v2783 = vand.u32 %v1877, 4294901760
      %v2784 = vsub.f32 %v1877, %v2783
      %2785 = vmatmul.mubr.f32.gmra.mrb[0].mxu0 %v2784
      %v2786 = vpop.f32.mrb[0].mxu0
      %v2787 = vadd.f32 %v2504, %v2786
      %v2788 = vpop.f32.mrb[0].mxu0
      %2789 = vmatprep.mubr.f32.mxu0 0.0
      %v2790 = vand.u32 %v1880, 4294901760
      %v2791 = vsub.f32 %v1880, %v2790
      %2792 = vmatmul.mubr.f32.gmra.mrb[0].mxu0 %v2791
      %v2793 = vpop.f32.mrb[0].mxu0
      %v2794 = vadd.f32 %v2510, %v2793
      %v2795 = vpop.f32.mrb[0].mxu0
      %2796 = vmatprep.mubr.f32.mxu0 0.0
      %v2797 = vand.u32 %v1883, 4294901760
      %v2798 = vsub.f32 %v1883, %v2797
      %2799 = vmatmul.mubr.f32.gmra.mrb[0].mxu0 %v2798
      %v2800 = vpop.f32.mrb[0].mxu0
      %v2801 = vadd.f32 %v2516, %v2800
      %v2802 = vpop.f32.mrb[0].mxu0
      %2803 = vmatprep.mubr.f32.mxu0 0.0
      %v2804 = vand.u32 %v1886, 4294901760
      %v2805 = vsub.f32 %v1886, %v2804
      %2806 = vmatmul.mubr.f32.gmra.mrb[0].mxu0 %v2805
      %v2807 = vpop.f32.mrb[0].mxu0
      %v2808 = vadd.f32 %v2522, %v2807
      %v2809 = vpop.f32.mrb[0].mxu0
      %2810 = vmatprep.mubr.f32.mxu0 0.0
      %v2811 = vand.u32 %v1889, 4294901760
      %v2812 = vsub.f32 %v1889, %v2811
      %2813 = vmatmul.mubr.f32.gmra.mrb[0].mxu0 %v2812
      %v2814 = vpop.f32.mrb[0].mxu0
      %v2815 = vadd.f32 %v2528, %v2814
      %v2816 = vpop.f32.mrb[0].mxu0
      %2817 = vmatprep.mubr.f32.mxu0 0.0
      %v2818 = vand.u32 %v1892, 4294901760
      %v2819 = vsub.f32 %v1892, %v2818
      %2820 = vmatmul.mubr.f32.gmra.mrb[0].mxu0 %v2819
      %v2821 = vpop.f32.mrb[0].mxu0
      %v2822 = vadd.f32 %v2534, %v2821
      %v2823 = vpop.f32.mrb[0].mxu0
      %2824 = vmatprep.mubr.f32.mxu0 0.0
      %v2825 = vand.u32 %v1895, 4294901760
      %v2826 = vsub.f32 %v1895, %v2825
      %2827 = vmatmul.mubr.f32.gmra.mrb[0].mxu0 %v2826
      %v2828 = vpop.f32.mrb[0].mxu0
      %v2829 = vadd.f32 %v2540, %v2828
      %v2830 = vpop.f32.mrb[0].mxu0
      %2831 = vmatprep.mubr.f32.mxu0 0.0
      %v2832 = vand.u32 %v1898, 4294901760
      %v2833 = vsub.f32 %v1898, %v2832
      %2834 = vmatmul.mubr.f32.gmra.mrb[0].mxu0 %v2833
      %v2835 = vpop.f32.mrb[0].mxu0
      %v2836 = vadd.f32 %v2546, %v2835
      %v2837 = vpop.f32.mrb[0].mxu0
      %2838 = vmatprep.mubr.f32.mxu0 0.0
      %v2839 = vand.u32 %v1901, 4294901760
      %v2840 = vsub.f32 %v1901, %v2839
      %2841 = vmatmul.mubr.f32.gmra.mrb[0].mxu0 %v2840
      %v2842 = vpop.f32.mrb[0].mxu0
      %v2843 = vadd.f32 %v2552, %v2842
      %v2844 = vpop.f32.mrb[0].mxu0
      %2845 = vmatprep.mubr.f32.mxu0 0.0
      %v2846 = vand.u32 %v1904, 4294901760
      %v2847 = vsub.f32 %v1904, %v2846
      %2848 = vmatmul.mubr.f32.gmra.mrb[0].mxu0 %v2847
      %v2849 = vpop.f32.mrb[0].mxu0
      %v2850 = vadd.f32 %v2558, %v2849
      %v2851 = vpop.f32.mrb[0].mxu0
      %2852 = vmatprep.mubr.f32.mxu0 0.0
      %v2853 = vand.u32 %v1907, 4294901760
      %v2854 = vsub.f32 %v1907, %v2853
      %2855 = vmatmul.mubr.f32.gmra.mrb[0].mxu0 %v2854
      %v2856 = vpop.f32.mrb[0].mxu0
      %v2857 = vadd.f32 %v2564, %v2856
      %v2858 = vpop.f32.mrb[0].mxu0
      %2859 = vmatprep.mubr.f32.mxu0 0.0
      %v2860 = vand.u32 %v1910, 4294901760
      %v2861 = vsub.f32 %v1910, %v2860
      %2862 = vmatmul.mubr.f32.gmra.mrb[0].mxu0 %v2861
      %v2863 = vpop.f32.mrb[0].mxu0
      %v2864 = vadd.f32 %v2570, %v2863
      %v2865 = vpop.f32.mrb[0].mxu0
      %2866 = vmatprep.mubr.f32.mxu0 0.0
      %v2867 = vand.u32 %v1913, 4294901760
      %v2868 = vsub.f32 %v1913, %v2867
      %2869 = vmatmul.mubr.f32.gmra.mrb[0].mxu0 %v2868
      %v2870 = vpop.f32.mrb[0].mxu0
      %v2871 = vadd.f32 %v2576, %v2870
      %v2872 = vpop.f32.mrb[0].mxu0
      %2873 = vmatprep.mubr.f32.mxu0 0.0
      %v2874 = vand.u32 %v1916, 4294901760
      %v2875 = vsub.f32 %v1916, %v2874
      %2876 = vmatmul.mubr.f32.gmra.mrb[0].mxu0 %v2875
      %v2877 = vpop.f32.mrb[0].mxu0
      %v2878 = vadd.f32 %v2582, %v2877
      %v2879 = vpop.f32.mrb[0].mxu0
      %2880 = vmatprep.mubr.f32.mxu0 0.0
      %v2881 = vand.u32 %v1919, 4294901760
      %v2882 = vsub.f32 %v1919, %v2881
      %2883 = vmatmul.mubr.f32.gmra.mrb[0].mxu0 %v2882
      %v2884 = vpop.f32.mrb[0].mxu0
      %v2885 = vadd.f32 %v2588, %v2884
      %v2886 = vpop.f32.mrb[0].mxu0
      %2887 = vmatprep.mubr.f32.mxu0 0.0
      %v2888 = vand.u32 %v1922, 4294901760
      %v2889 = vsub.f32 %v1922, %v2888
      %2890 = vmatmul.mubr.f32.gmra.mrb[0].mxu0 %v2889
      %v2891 = vpop.f32.mrb[0].mxu0
      %v2892 = vadd.f32 %v2594, %v2891
      %v2893 = vpop.f32.mrb[0].mxu0
      %2894 = vmatprep.mubr.f32.mxu0 0.0
      %v2895 = vand.u32 %v1925, 4294901760
      %v2896 = vsub.f32 %v1925, %v2895
      %2897 = vmatmul.mubr.f32.gmra.mrb[0].mxu0 %v2896
      %v2898 = vpop.f32.mrb[0].mxu0
      %v2899 = vadd.f32 %v2600, %v2898
      %v2900 = vpop.f32.mrb[0].mxu0
      %2901 = vdwg.mxu0
      %2902 = vmatprep.subr.mxu0 0.0
      %v2903 = vand.u32 %v1825, 4294901760
      %2904 = vmatpush1.msra.mxu0 %v2903
      %2905 = vmatprep.subr.mxu0 0.0
      %v2906 = vand.u32 %v1826, 4294901760
      %2907 = vmatpush1.msra.mxu0 %v2906
      %2908 = vmatprep.subr.mxu0 0.0
      %v2909 = vand.u32 %v1827, 4294901760
      %2910 = vmatpush1.msra.mxu0 %v2909
      %2911 = vmatprep.subr.mxu0 0.0
      %v2912 = vand.u32 %v1828, 4294901760
      %2913 = vmatpush1.msra.mxu0 %v2912
      %2914 = vmatprep.subr.mxu0 0.0
      %v2915 = vand.u32 %v1929, 4294901760
      %2916 = vmatpush1.msra.mxu0 %v2915
      %2917 = vmatprep.subr.mxu0 0.0
      %2918 = vmatpush1.msra.mxu0 0.0
      %2919 = vmatprep.subr.mxu0 0.0
      %2920 = vmatpush1.msra.mxu0 0.0
      %2921 = vmatprep.subr.mxu0 0.0
      %2922 = vmatpush1.msra.mxu0 0.0
      %2923 = vmatprep.subr.mxu0 0.0
      %2924 = vmatpush1.msra.mxu0 0.0
      %2925 = vmatprep.subr.mxu0 0.0
      %2926 = vmatpush1.msra.mxu0 0.0
      %2927 = vmatprep.subr.mxu0 0.0
      %2928 = vmatpush1.msra.mxu0 0.0
      %2929 = vmatprep.subr.mxu0 0.0
      %2930 = vmatpush1.msra.mxu0 0.0
      %2931 = vmatprep.subr.mxu0 0.0
      %2932 = vmatpush1.msra.mxu0 0.0
      %2933 = vmatprep.subr.mxu0 0.0
      %2934 = vmatpush1.msra.mxu0 0.0
      %2935 = vmatprep.subr.mxu0 0.0
      %2936 = vmatpush1.msra.mxu0 0.0
      %2937 = vmatprep.subr.mxu0 0.0
      %2938 = vmatpush1.msra.mxu0 0.0
      %2939 = vmatprep.subr.mxu0 0.0
      %2940 = vmatpush1.msra.mxu0 0.0
      %2941 = vmatprep.subr.mxu0 0.0
      %2942 = vmatpush1.msra.mxu0 0.0
      %2943 = vmatprep.subr.mxu0 0.0
      %2944 = vmatpush1.msra.mxu0 0.0
      %2945 = vmatprep.subr.mxu0 0.0
      %2946 = vmatpush1.msra.mxu0 0.0
      %2947 = vmatprep.subr.mxu0 0.0
      %2948 = vmatpush1.msra.mxu0 0.0
      %2949 = vmatprep.subr.mxu0 0.0
      %2950 = vmatpush1.msra.mxu0 0.0
      %2951 = vmatprep.subr.mxu0 0.0
      %2952 = vmatpush1.msra.mxu0 0.0
      %2953 = vmatprep.subr.mxu0 0.0
      %2954 = vmatpush1.msra.mxu0 0.0
      %2955 = vmatprep.subr.mxu0 0.0
      %2956 = vmatpush1.msra.mxu0 0.0
      %2957 = vmatprep.subr.mxu0 0.0
      %2958 = vmatpush1.msra.mxu0 0.0
      %2959 = vmatprep.subr.mxu0 0.0
      %2960 = vmatpush1.msra.mxu0 0.0
      %2961 = vmatprep.subr.mxu0 0.0
      %2962 = vmatpush1.msra.mxu0 0.0
      %2963 = vmatprep.subr.mxu0 0.0
      %2964 = vmatpush1.msra.mxu0 0.0
      %2965 = vmatprep.subr.mxu0 0.0
      %2966 = vmatpush1.msra.mxu0 0.0
      %2967 = vmatprep.subr.mxu0 0.0
      %2968 = vmatpush1.msra.mxu0 0.0
      %2969 = vmatprep.subr.mxu0 0.0
      %2970 = vmatpush1.msra.mxu0 0.0
      %2971 = vmatprep.mubr.f32.mxu0 0.0
      %v2972 = vand.u32 %v1832, 4294901760
      %v2973 = vsub.f32 %v1832, %v2972
      %v2974 = vand.u32 %v2973, 4294901760
      %2975 = vmatmul.mubr.f32.gmra.mrb[0].mxu0 %v2974
      %v2976 = vpop.f32.mrb[0].mxu0
      %v2977 = vadd.f32 %v2682, %v2976
      %v2978 = vpop.f32.mrb[0].mxu0
      %2979 = vmatprep.mubr.f32.mxu0 0.0
      %v2980 = vand.u32 %v1835, 4294901760
      %v2981 = vsub.f32 %v1835, %v2980
      %v2982 = vand.u32 %v2981, 4294901760
      %2983 = vmatmul.mubr.f32.gmra.mrb[0].mxu0 %v2982
      %v2984 = vpop.f32.mrb[0].mxu0
      %v2985 = vadd.f32 %v2689, %v2984
      %v2986 = vpop.f32.mrb[0].mxu0
      %2987 = vmatprep.mubr.f32.mxu0 0.0
      %v2988 = vand.u32 %v1838, 4294901760
      %v2989 = vsub.f32 %v1838, %v2988
      %v2990 = vand.u32 %v2989, 4294901760
      %2991 = vmatmul.mubr.f32.gmra.mrb[0].mxu0 %v2990
      %v2992 = vpop.f32.mrb[0].mxu0
      %v2993 = vadd.f32 %v2696, %v2992
      %v2994 = vpop.f32.mrb[0].mxu0
      %2995 = vmatprep.mubr.f32.mxu0 0.0
      %v2996 = vand.u32 %v1841, 4294901760
      %v2997 = vsub.f32 %v1841, %v2996
      %v2998 = vand.u32 %v2997, 4294901760
      %2999 = vmatmul.mubr.f32.gmra.mrb[0].mxu0 %v2998
      %v3000 = vpop.f32.mrb[0].mxu0
      %v3001 = vadd.f32 %v2703, %v3000
      %v3002 = vpop.f32.mrb[0].mxu0
      %3003 = vmatprep.mubr.f32.mxu0 0.0
      %v3004 = vand.u32 %v1844, 4294901760
      %v3005 = vsub.f32 %v1844, %v3004
      %v3006 = vand.u32 %v3005, 4294901760
      %3007 = vmatmul.mubr.f32.gmra.mrb[0].mxu0 %v3006
      %v3008 = vpop.f32.mrb[0].mxu0
      %v3009 = vadd.f32 %v2710, %v3008
      %v3010 = vpop.f32.mrb[0].mxu0
      %3011 = vmatprep.mubr.f32.mxu0 0.0
      %v3012 = vand.u32 %v1847, 4294901760
      %v3013 = vsub.f32 %v1847, %v3012
      %v3014 = vand.u32 %v3013, 4294901760
      %3015 = vmatmul.mubr.f32.gmra.mrb[0].mxu0 %v3014
      %v3016 = vpop.f32.mrb[0].mxu0
      %v3017 = vadd.f32 %v2717, %v3016
      %v3018 = vpop.f32.mrb[0].mxu0
      %3019 = vmatprep.mubr.f32.mxu0 0.0
      %v3020 = vand.u32 %v1850, 4294901760
      %v3021 = vsub.f32 %v1850, %v3020
      %v3022 = vand.u32 %v3021, 4294901760
      %3023 = vmatmul.mubr.f32.gmra.mrb[0].mxu0 %v3022
      %v3024 = vpop.f32.mrb[0].mxu0
      %v3025 = vadd.f32 %v2724, %v3024
      %v3026 = vpop.f32.mrb[0].mxu0
      %3027 = vmatprep.mubr.f32.mxu0 0.0
      %v3028 = vand.u32 %v1853, 4294901760
      %v3029 = vsub.f32 %v1853, %v3028
      %v3030 = vand.u32 %v3029, 4294901760
      %3031 = vmatmul.mubr.f32.gmra.mrb[0].mxu0 %v3030
      %v3032 = vpop.f32.mrb[0].mxu0
      %v3033 = vadd.f32 %v2731, %v3032
      %v3034 = vpop.f32.mrb[0].mxu0
      %3035 = vmatprep.mubr.f32.mxu0 0.0
      %v3036 = vand.u32 %v1856, 4294901760
      %v3037 = vsub.f32 %v1856, %v3036
      %v3038 = vand.u32 %v3037, 4294901760
      %3039 = vmatmul.mubr.f32.gmra.mrb[0].mxu0 %v3038
      %v3040 = vpop.f32.mrb[0].mxu0
      %v3041 = vadd.f32 %v2738, %v3040
      %v3042 = vpop.f32.mrb[0].mxu0
      %3043 = vmatprep.mubr.f32.mxu0 0.0
      %v3044 = vand.u32 %v1859, 4294901760
      %v3045 = vsub.f32 %v1859, %v3044
      %v3046 = vand.u32 %v3045, 4294901760
      %3047 = vmatmul.mubr.f32.gmra.mrb[0].mxu0 %v3046
      %v3048 = vpop.f32.mrb[0].mxu0
      %v3049 = vadd.f32 %v2745, %v3048
      %v3050 = vpop.f32.mrb[0].mxu0
      %3051 = vmatprep.mubr.f32.mxu0 0.0
      %v3052 = vand.u32 %v1862, 4294901760
      %v3053 = vsub.f32 %v1862, %v3052
      %v3054 = vand.u32 %v3053, 4294901760
      %3055 = vmatmul.mubr.f32.gmra.mrb[0].mxu0 %v3054
      %v3056 = vpop.f32.mrb[0].mxu0
      %v3057 = vadd.f32 %v2752, %v3056
      %v3058 = vpop.f32.mrb[0].mxu0
      %3059 = vmatprep.mubr.f32.mxu0 0.0
      %v3060 = vand.u32 %v1865, 4294901760
      %v3061 = vsub.f32 %v1865, %v3060
      %v3062 = vand.u32 %v3061, 4294901760
      %3063 = vmatmul.mubr.f32.gmra.mrb[0].mxu0 %v3062
      %v3064 = vpop.f32.mrb[0].mxu0
      %v3065 = vadd.f32 %v2759, %v3064
      %v3066 = vpop.f32.mrb[0].mxu0
      %3067 = vmatprep.mubr.f32.mxu0 0.0
      %v3068 = vand.u32 %v1868, 4294901760
      %v3069 = vsub.f32 %v1868, %v3068
      %v3070 = vand.u32 %v3069, 4294901760
      %3071 = vmatmul.mubr.f32.gmra.mrb[0].mxu0 %v3070
      %v3072 = vpop.f32.mrb[0].mxu0
      %v3073 = vadd.f32 %v2766, %v3072
      %v3074 = vpop.f32.mrb[0].mxu0
      %3075 = vmatprep.mubr.f32.mxu0 0.0
      %v3076 = vand.u32 %v1871, 4294901760
      %v3077 = vsub.f32 %v1871, %v3076
      %v3078 = vand.u32 %v3077, 4294901760
      %3079 = vmatmul.mubr.f32.gmra.mrb[0].mxu0 %v3078
      %v3080 = vpop.f32.mrb[0].mxu0
      %v3081 = vadd.f32 %v2773, %v3080
      %v3082 = vpop.f32.mrb[0].mxu0
      %3083 = vmatprep.mubr.f32.mxu0 0.0
      %v3084 = vand.u32 %v1874, 4294901760
      %v3085 = vsub.f32 %v1874, %v3084
      %v3086 = vand.u32 %v3085, 4294901760
      %3087 = vmatmul.mubr.f32.gmra.mrb[0].mxu0 %v3086
      %v3088 = vpop.f32.mrb[0].mxu0
      %v3089 = vadd.f32 %v2780, %v3088
      %v3090 = vpop.f32.mrb[0].mxu0
      %3091 = vmatprep.mubr.f32.mxu0 0.0
      %v3092 = vand.u32 %v1877, 4294901760
      %v3093 = vsub.f32 %v1877, %v3092
      %v3094 = vand.u32 %v3093, 4294901760
      %3095 = vmatmul.mubr.f32.gmra.mrb[0].mxu0 %v3094
      %v3096 = vpop.f32.mrb[0].mxu0
      %v3097 = vadd.f32 %v2787, %v3096
      %v3098 = vpop.f32.mrb[0].mxu0
      %3099 = vmatprep.mubr.f32.mxu0 0.0
      %v3100 = vand.u32 %v1880, 4294901760
      %v3101 = vsub.f32 %v1880, %v3100
      %v3102 = vand.u32 %v3101, 4294901760
      %3103 = vmatmul.mubr.f32.gmra.mrb[0].mxu0 %v3102
      %v3104 = vpop.f32.mrb[0].mxu0
      %v3105 = vadd.f32 %v2794, %v3104
      %v3106 = vpop.f32.mrb[0].mxu0
      %3107 = vmatprep.mubr.f32.mxu0 0.0
      %v3108 = vand.u32 %v1883, 4294901760
      %v3109 = vsub.f32 %v1883, %v3108
      %v3110 = vand.u32 %v3109, 4294901760
      %3111 = vmatmul.mubr.f32.gmra.mrb[0].mxu0 %v3110
      %v3112 = vpop.f32.mrb[0].mxu0
      %v3113 = vadd.f32 %v2801, %v3112
      %v3114 = vpop.f32.mrb[0].mxu0
      %3115 = vmatprep.mubr.f32.mxu0 0.0
      %v3116 = vand.u32 %v1886, 4294901760
      %v3117 = vsub.f32 %v1886, %v3116
      %v3118 = vand.u32 %v3117, 4294901760
      %3119 = vmatmul.mubr.f32.gmra.mrb[0].mxu0 %v3118
      %v3120 = vpop.f32.mrb[0].mxu0
      %v3121 = vadd.f32 %v2808, %v3120
      %v3122 = vpop.f32.mrb[0].mxu0
      %3123 = vmatprep.mubr.f32.mxu0 0.0
      %v3124 = vand.u32 %v1889, 4294901760
      %v3125 = vsub.f32 %v1889, %v3124
      %v3126 = vand.u32 %v3125, 4294901760
      %3127 = vmatmul.mubr.f32.gmra.mrb[0].mxu0 %v3126
      %v3128 = vpop.f32.mrb[0].mxu0
      %v3129 = vadd.f32 %v2815, %v3128
      %v3130 = vpop.f32.mrb[0].mxu0
      %3131 = vmatprep.mubr.f32.mxu0 0.0
      %v3132 = vand.u32 %v1892, 4294901760
      %v3133 = vsub.f32 %v1892, %v3132
      %v3134 = vand.u32 %v3133, 4294901760
      %3135 = vmatmul.mubr.f32.gmra.mrb[0].mxu0 %v3134
      %v3136 = vpop.f32.mrb[0].mxu0
      %v3137 = vadd.f32 %v2822, %v3136
      %v3138 = vpop.f32.mrb[0].mxu0
      %3139 = vmatprep.mubr.f32.mxu0 0.0
      %v3140 = vand.u32 %v1895, 4294901760
      %v3141 = vsub.f32 %v1895, %v3140
      %v3142 = vand.u32 %v3141, 4294901760
      %3143 = vmatmul.mubr.f32.gmra.mrb[0].mxu0 %v3142
      %v3144 = vpop.f32.mrb[0].mxu0
      %v3145 = vadd.f32 %v2829, %v3144
      %v3146 = vpop.f32.mrb[0].mxu0
      %3147 = vmatprep.mubr.f32.mxu0 0.0
      %v3148 = vand.u32 %v1898, 4294901760
      %v3149 = vsub.f32 %v1898, %v3148
      %v3150 = vand.u32 %v3149, 4294901760
      %3151 = vmatmul.mubr.f32.gmra.mrb[0].mxu0 %v3150
      %v3152 = vpop.f32.mrb[0].mxu0
      %v3153 = vadd.f32 %v2836, %v3152
      %v3154 = vpop.f32.mrb[0].mxu0
      %3155 = vmatprep.mubr.f32.mxu0 0.0
      %v3156 = vand.u32 %v1901, 4294901760
      %v3157 = vsub.f32 %v1901, %v3156
      %v3158 = vand.u32 %v3157, 4294901760
      %3159 = vmatmul.mubr.f32.gmra.mrb[0].mxu0 %v3158
      %v3160 = vpop.f32.mrb[0].mxu0
      %v3161 = vadd.f32 %v2843, %v3160
      %v3162 = vpop.f32.mrb[0].mxu0
      %3163 = vmatprep.mubr.f32.mxu0 0.0
      %v3164 = vand.u32 %v1904, 4294901760
      %v3165 = vsub.f32 %v1904, %v3164
      %v3166 = vand.u32 %v3165, 4294901760
      %3167 = vmatmul.mubr.f32.gmra.mrb[0].mxu0 %v3166
      %v3168 = vpop.f32.mrb[0].mxu0
      %v3169 = vadd.f32 %v2850, %v3168
      %v3170 = vpop.f32.mrb[0].mxu0
      %3171 = vmatprep.mubr.f32.mxu0 0.0
      %v3172 = vand.u32 %v1907, 4294901760
      %v3173 = vsub.f32 %v1907, %v3172
      %v3174 = vand.u32 %v3173, 4294901760
      %3175 = vmatmul.mubr.f32.gmra.mrb[0].mxu0 %v3174
      %v3176 = vpop.f32.mrb[0].mxu0
      %v3177 = vadd.f32 %v2857, %v3176
      %v3178 = vpop.f32.mrb[0].mxu0
      %3179 = vmatprep.mubr.f32.mxu0 0.0
      %v3180 = vand.u32 %v1910, 4294901760
      %v3181 = vsub.f32 %v1910, %v3180
      %v3182 = vand.u32 %v3181, 4294901760
      %3183 = vmatmul.mubr.f32.gmra.mrb[0].mxu0 %v3182
      %v3184 = vpop.f32.mrb[0].mxu0
      %v3185 = vadd.f32 %v2864, %v3184
      %v3186 = vpop.f32.mrb[0].mxu0
      %3187 = vmatprep.mubr.f32.mxu0 0.0
      %v3188 = vand.u32 %v1913, 4294901760
      %v3189 = vsub.f32 %v1913, %v3188
      %v3190 = vand.u32 %v3189, 4294901760
      %3191 = vmatmul.mubr.f32.gmra.mrb[0].mxu0 %v3190
      %v3192 = vpop.f32.mrb[0].mxu0
      %v3193 = vadd.f32 %v2871, %v3192
      %v3194 = vpop.f32.mrb[0].mxu0
      %3195 = vmatprep.mubr.f32.mxu0 0.0
      %v3196 = vand.u32 %v1916, 4294901760
      %v3197 = vsub.f32 %v1916, %v3196
      %v3198 = vand.u32 %v3197, 4294901760
      %3199 = vmatmul.mubr.f32.gmra.mrb[0].mxu0 %v3198
      %v3200 = vpop.f32.mrb[0].mxu0
      %v3201 = vadd.f32 %v2878, %v3200
      %v3202 = vpop.f32.mrb[0].mxu0
      %3203 = vmatprep.mubr.f32.mxu0 0.0
      %v3204 = vand.u32 %v1919, 4294901760
      %v3205 = vsub.f32 %v1919, %v3204
      %v3206 = vand.u32 %v3205, 4294901760
      %3207 = vmatmul.mubr.f32.gmra.mrb[0].mxu0 %v3206
      %v3208 = vpop.f32.mrb[0].mxu0
      %v3209 = vadd.f32 %v2885, %v3208
      %v3210 = vpop.f32.mrb[0].mxu0
      %3211 = vmatprep.mubr.f32.mxu0 0.0
      %v3212 = vand.u32 %v1922, 4294901760
      %v3213 = vsub.f32 %v1922, %v3212
      %v3214 = vand.u32 %v3213, 4294901760
      %3215 = vmatmul.mubr.f32.gmra.mrb[0].mxu0 %v3214
      %v3216 = vpop.f32.mrb[0].mxu0
      %v3217 = vadd.f32 %v2892, %v3216
      %v3218 = vpop.f32.mrb[0].mxu0
      %3219 = vmatprep.mubr.f32.mxu0 0.0
      %v3220 = vand.u32 %v1925, 4294901760
      %v3221 = vsub.f32 %v1925, %v3220
      %v3222 = vand.u32 %v3221, 4294901760
      %3223 = vmatmul.mubr.f32.gmra.mrb[0].mxu0 %v3222
      %v3224 = vpop.f32.mrb[0].mxu0
      %v3225 = vadd.f32 %v2899, %v3224
      %v3226 = vpop.f32.mrb[0].mxu0
      %3227 = vdwg.mxu0
      %3228 = vmatprep.subr.mxu0 0.0
      %v3229 = vand.u32 %v1825, 4294901760
      %v3230 = vsub.f32 %v1825, %v3229
      %v3231 = vand.u32 %v3230, 4294901760
      %3232 = vmatpush1.msra.mxu0 %v3231
      %3233 = vmatprep.subr.mxu0 0.0
      %v3234 = vand.u32 %v1826, 4294901760
      %v3235 = vsub.f32 %v1826, %v3234
      %v3236 = vand.u32 %v3235, 4294901760
      %3237 = vmatpush1.msra.mxu0 %v3236
      %3238 = vmatprep.subr.mxu0 0.0
      %v3239 = vand.u32 %v1827, 4294901760
      %v3240 = vsub.f32 %v1827, %v3239
      %v3241 = vand.u32 %v3240, 4294901760
      %3242 = vmatpush1.msra.mxu0 %v3241
      %3243 = vmatprep.subr.mxu0 0.0
      %v3244 = vand.u32 %v1828, 4294901760
      %v3245 = vsub.f32 %v1828, %v3244
      %v3246 = vand.u32 %v3245, 4294901760
      %3247 = vmatpush1.msra.mxu0 %v3246
      %3248 = vmatprep.subr.mxu0 0.0
      %v3249 = vand.u32 %v1929, 4294901760
      %v3250 = vsub.f32 %v1929, %v3249
      %v3251 = vand.u32 %v3250, 4294901760
      %3252 = vmatpush1.msra.mxu0 %v3251
      %3253 = vmatprep.subr.mxu0 0.0
      %3254 = vmatpush1.msra.mxu0 0.0
      %3255 = vmatprep.subr.mxu0 0.0
      %3256 = vmatpush1.msra.mxu0 0.0
      %3257 = vmatprep.subr.mxu0 0.0
      %3258 = vmatpush1.msra.mxu0 0.0
      %3259 = vmatprep.subr.mxu0 0.0
      %3260 = vmatpush1.msra.mxu0 0.0
      %3261 = vmatprep.subr.mxu0 0.0
      %3262 = vmatpush1.msra.mxu0 0.0
      %3263 = vmatprep.subr.mxu0 0.0
      %3264 = vmatpush1.msra.mxu0 0.0
      %3265 = vmatprep.subr.mxu0 0.0
      %3266 = vmatpush1.msra.mxu0 0.0
      %3267 = vmatprep.subr.mxu0 0.0
      %3268 = vmatpush1.msra.mxu0 0.0
      %3269 = vmatprep.subr.mxu0 0.0
      %3270 = vmatpush1.msra.mxu0 0.0
      %3271 = vmatprep.subr.mxu0 0.0
      %3272 = vmatpush1.msra.mxu0 0.0
      %3273 = vmatprep.subr.mxu0 0.0
      %3274 = vmatpush1.msra.mxu0 0.0
      %3275 = vmatprep.subr.mxu0 0.0
      %3276 = vmatpush1.msra.mxu0 0.0
      %3277 = vmatprep.subr.mxu0 0.0
      %3278 = vmatpush1.msra.mxu0 0.0
      %3279 = vmatprep.subr.mxu0 0.0
      %3280 = vmatpush1.msra.mxu0 0.0
      %3281 = vmatprep.subr.mxu0 0.0
      %3282 = vmatpush1.msra.mxu0 0.0
      %3283 = vmatprep.subr.mxu0 0.0
      %3284 = vmatpush1.msra.mxu0 0.0
      %3285 = vmatprep.subr.mxu0 0.0
      %3286 = vmatpush1.msra.mxu0 0.0
      %3287 = vmatprep.subr.mxu0 0.0
      %3288 = vmatpush1.msra.mxu0 0.0
      %3289 = vmatprep.subr.mxu0 0.0
      %3290 = vmatpush1.msra.mxu0 0.0
      %3291 = vmatprep.subr.mxu0 0.0
      %3292 = vmatpush1.msra.mxu0 0.0
      %3293 = vmatprep.subr.mxu0 0.0
      %3294 = vmatpush1.msra.mxu0 0.0
      %3295 = vmatprep.subr.mxu0 0.0
      %3296 = vmatpush1.msra.mxu0 0.0
      %3297 = vmatprep.subr.mxu0 0.0
      %3298 = vmatpush1.msra.mxu0 0.0
      %3299 = vmatprep.subr.mxu0 0.0
      %3300 = vmatpush1.msra.mxu0 0.0
      %3301 = vmatprep.subr.mxu0 0.0
      %3302 = vmatpush1.msra.mxu0 0.0
      %3303 = vmatprep.subr.mxu0 0.0
      %3304 = vmatpush1.msra.mxu0 0.0
      %3305 = vmatprep.subr.mxu0 0.0
      %3306 = vmatpush1.msra.mxu0 0.0
      %3307 = vmatprep.mubr.f32.mxu0 0.0
      %v3308 = vand.u32 %v1832, 4294901760
      %3309 = vmatmul.mubr.f32.gmra.mrb[0].mxu0 %v3308
      %v3310 = vpop.f32.mrb[0].mxu0
      %v3311 = vadd.f32 %v2977, %v3310
      %v3312 = vpop.f32.mrb[0].mxu0
      %3313 = vmatprep.mubr.f32.mxu0 0.0
      %v3314 = vand.u32 %v1835, 4294901760
      %3315 = vmatmul.mubr.f32.gmra.mrb[0].mxu0 %v3314
      %v3316 = vpop.f32.mrb[0].mxu0
      %v3317 = vadd.f32 %v2985, %v3316
      %v3318 = vpop.f32.mrb[0].mxu0
      %3319 = vmatprep.mubr.f32.mxu0 0.0
      %v3320 = vand.u32 %v1838, 4294901760
      %3321 = vmatmul.mubr.f32.gmra.mrb[0].mxu0 %v3320
      %v3322 = vpop.f32.mrb[0].mxu0
      %v3323 = vadd.f32 %v2993, %v3322
      %v3324 = vpop.f32.mrb[0].mxu0
      %3325 = vmatprep.mubr.f32.mxu0 0.0
      %v3326 = vand.u32 %v1841, 4294901760
      %3327 = vmatmul.mubr.f32.gmra.mrb[0].mxu0 %v3326
      %v3328 = vpop.f32.mrb[0].mxu0
      %v3329 = vadd.f32 %v3001, %v3328
      %v3330 = vpop.f32.mrb[0].mxu0
      %3331 = vmatprep.mubr.f32.mxu0 0.0
      %v3332 = vand.u32 %v1844, 4294901760
      %3333 = vmatmul.mubr.f32.gmra.mrb[0].mxu0 %v3332
      %v3334 = vpop.f32.mrb[0].mxu0
      %v3335 = vadd.f32 %v3009, %v3334
      %v3336 = vpop.f32.mrb[0].mxu0
      %3337 = vmatprep.mubr.f32.mxu0 0.0
      %v3338 = vand.u32 %v1847, 4294901760
      %3339 = vmatmul.mubr.f32.gmra.mrb[0].mxu0 %v3338
      %v3340 = vpop.f32.mrb[0].mxu0
      %v3341 = vadd.f32 %v3017, %v3340
      %v3342 = vpop.f32.mrb[0].mxu0
      %3343 = vmatprep.mubr.f32.mxu0 0.0
      %v3344 = vand.u32 %v1850, 4294901760
      %3345 = vmatmul.mubr.f32.gmra.mrb[0].mxu0 %v3344
      %v3346 = vpop.f32.mrb[0].mxu0
      %v3347 = vadd.f32 %v3025, %v3346
      %v3348 = vpop.f32.mrb[0].mxu0
      %3349 = vmatprep.mubr.f32.mxu0 0.0
      %v3350 = vand.u32 %v1853, 4294901760
      %3351 = vmatmul.mubr.f32.gmra.mrb[0].mxu0 %v3350
      %v3352 = vpop.f32.mrb[0].mxu0
      %v3353 = vadd.f32 %v3033, %v3352
      %v3354 = vpop.f32.mrb[0].mxu0
      %3355 = vmatprep.mubr.f32.mxu0 0.0
      %v3356 = vand.u32 %v1856, 4294901760
      %3357 = vmatmul.mubr.f32.gmra.mrb[0].mxu0 %v3356
      %v3358 = vpop.f32.mrb[0].mxu0
      %v3359 = vadd.f32 %v3041, %v3358
      %v3360 = vpop.f32.mrb[0].mxu0
      %3361 = vmatprep.mubr.f32.mxu0 0.0
      %v3362 = vand.u32 %v1859, 4294901760
      %3363 = vmatmul.mubr.f32.gmra.mrb[0].mxu0 %v3362
      %v3364 = vpop.f32.mrb[0].mxu0
      %v3365 = vadd.f32 %v3049, %v3364
      %v3366 = vpop.f32.mrb[0].mxu0
      %3367 = vmatprep.mubr.f32.mxu0 0.0
      %v3368 = vand.u32 %v1862, 4294901760
      %3369 = vmatmul.mubr.f32.gmra.mrb[0].mxu0 %v3368
      %v3370 = vpop.f32.mrb[0].mxu0
      %v3371 = vadd.f32 %v3057, %v3370
      %v3372 = vpop.f32.mrb[0].mxu0
      %3373 = vmatprep.mubr.f32.mxu0 0.0
      %v3374 = vand.u32 %v1865, 4294901760
      %3375 = vmatmul.mubr.f32.gmra.mrb[0].mxu0 %v3374
      %v3376 = vpop.f32.mrb[0].mxu0
      %v3377 = vadd.f32 %v3065, %v3376
      %v3378 = vpop.f32.mrb[0].mxu0
      %3379 = vmatprep.mubr.f32.mxu0 0.0
      %v3380 = vand.u32 %v1868, 4294901760
      %3381 = vmatmul.mubr.f32.gmra.mrb[0].mxu0 %v3380
      %v3382 = vpop.f32.mrb[0].mxu0
      %v3383 = vadd.f32 %v3073, %v3382
      %v3384 = vpop.f32.mrb[0].mxu0
      %3385 = vmatprep.mubr.f32.mxu0 0.0
      %v3386 = vand.u32 %v1871, 4294901760
      %3387 = vmatmul.mubr.f32.gmra.mrb[0].mxu0 %v3386
      %v3388 = vpop.f32.mrb[0].mxu0
      %v3389 = vadd.f32 %v3081, %v3388
      %v3390 = vpop.f32.mrb[0].mxu0
      %3391 = vmatprep.mubr.f32.mxu0 0.0
      %v3392 = vand.u32 %v1874, 4294901760
      %3393 = vmatmul.mubr.f32.gmra.mrb[0].mxu0 %v3392
      %v3394 = vpop.f32.mrb[0].mxu0
      %v3395 = vadd.f32 %v3089, %v3394
      %v3396 = vpop.f32.mrb[0].mxu0
      %3397 = vmatprep.mubr.f32.mxu0 0.0
      %v3398 = vand.u32 %v1877, 4294901760
      %3399 = vmatmul.mubr.f32.gmra.mrb[0].mxu0 %v3398
      %v3400 = vpop.f32.mrb[0].mxu0
      %v3401 = vadd.f32 %v3097, %v3400
      %v3402 = vpop.f32.mrb[0].mxu0
      %3403 = vmatprep.mubr.f32.mxu0 0.0
      %v3404 = vand.u32 %v1880, 4294901760
      %3405 = vmatmul.mubr.f32.gmra.mrb[0].mxu0 %v3404
      %v3406 = vpop.f32.mrb[0].mxu0
      %v3407 = vadd.f32 %v3105, %v3406
      %v3408 = vpop.f32.mrb[0].mxu0
      %3409 = vmatprep.mubr.f32.mxu0 0.0
      %v3410 = vand.u32 %v1883, 4294901760
      %3411 = vmatmul.mubr.f32.gmra.mrb[0].mxu0 %v3410
      %v3412 = vpop.f32.mrb[0].mxu0
      %v3413 = vadd.f32 %v3113, %v3412
      %v3414 = vpop.f32.mrb[0].mxu0
      %3415 = vmatprep.mubr.f32.mxu0 0.0
      %v3416 = vand.u32 %v1886, 4294901760
      %3417 = vmatmul.mubr.f32.gmra.mrb[0].mxu0 %v3416
      %v3418 = vpop.f32.mrb[0].mxu0
      %v3419 = vadd.f32 %v3121, %v3418
      %v3420 = vpop.f32.mrb[0].mxu0
      %3421 = vmatprep.mubr.f32.mxu0 0.0
      %v3422 = vand.u32 %v1889, 4294901760
      %3423 = vmatmul.mubr.f32.gmra.mrb[0].mxu0 %v3422
      %v3424 = vpop.f32.mrb[0].mxu0
      %v3425 = vadd.f32 %v3129, %v3424
      %v3426 = vpop.f32.mrb[0].mxu0
      %3427 = vmatprep.mubr.f32.mxu0 0.0
      %v3428 = vand.u32 %v1892, 4294901760
      %3429 = vmatmul.mubr.f32.gmra.mrb[0].mxu0 %v3428
      %v3430 = vpop.f32.mrb[0].mxu0
      %v3431 = vadd.f32 %v3137, %v3430
      %v3432 = vpop.f32.mrb[0].mxu0
      %3433 = vmatprep.mubr.f32.mxu0 0.0
      %v3434 = vand.u32 %v1895, 4294901760
      %3435 = vmatmul.mubr.f32.gmra.mrb[0].mxu0 %v3434
      %v3436 = vpop.f32.mrb[0].mxu0
      %v3437 = vadd.f32 %v3145, %v3436
      %v3438 = vpop.f32.mrb[0].mxu0
      %3439 = vmatprep.mubr.f32.mxu0 0.0
      %v3440 = vand.u32 %v1898, 4294901760
      %3441 = vmatmul.mubr.f32.gmra.mrb[0].mxu0 %v3440
      %v3442 = vpop.f32.mrb[0].mxu0
      %v3443 = vadd.f32 %v3153, %v3442
      %v3444 = vpop.f32.mrb[0].mxu0
      %3445 = vmatprep.mubr.f32.mxu0 0.0
      %v3446 = vand.u32 %v1901, 4294901760
      %3447 = vmatmul.mubr.f32.gmra.mrb[0].mxu0 %v3446
      %v3448 = vpop.f32.mrb[0].mxu0
      %v3449 = vadd.f32 %v3161, %v3448
      %v3450 = vpop.f32.mrb[0].mxu0
      %3451 = vmatprep.mubr.f32.mxu0 0.0
      %v3452 = vand.u32 %v1904, 4294901760
      %3453 = vmatmul.mubr.f32.gmra.mrb[0].mxu0 %v3452
      %v3454 = vpop.f32.mrb[0].mxu0
      %v3455 = vadd.f32 %v3169, %v3454
      %v3456 = vpop.f32.mrb[0].mxu0
      %3457 = vmatprep.mubr.f32.mxu0 0.0
      %v3458 = vand.u32 %v1907, 4294901760
      %3459 = vmatmul.mubr.f32.gmra.mrb[0].mxu0 %v3458
      %v3460 = vpop.f32.mrb[0].mxu0
      %v3461 = vadd.f32 %v3177, %v3460
      %v3462 = vpop.f32.mrb[0].mxu0
      %3463 = vmatprep.mubr.f32.mxu0 0.0
      %v3464 = vand.u32 %v1910, 4294901760
      %3465 = vmatmul.mubr.f32.gmra.mrb[0].mxu0 %v3464
      %v3466 = vpop.f32.mrb[0].mxu0
      %v3467 = vadd.f32 %v3185, %v3466
      %v3468 = vpop.f32.mrb[0].mxu0
      %3469 = vmatprep.mubr.f32.mxu0 0.0
      %v3470 = vand.u32 %v1913, 4294901760
      %3471 = vmatmul.mubr.f32.gmra.mrb[0].mxu0 %v3470
      %v3472 = vpop.f32.mrb[0].mxu0
      %v3473 = vadd.f32 %v3193, %v3472
      %v3474 = vpop.f32.mrb[0].mxu0
      %3475 = vmatprep.mubr.f32.mxu0 0.0
      %v3476 = vand.u32 %v1916, 4294901760
      %3477 = vmatmul.mubr.f32.gmra.mrb[0].mxu0 %v3476
      %v3478 = vpop.f32.mrb[0].mxu0
      %v3479 = vadd.f32 %v3201, %v3478
      %v3480 = vpop.f32.mrb[0].mxu0
      %3481 = vmatprep.mubr.f32.mxu0 0.0
      %v3482 = vand.u32 %v1919, 4294901760
      %3483 = vmatmul.mubr.f32.gmra.mrb[0].mxu0 %v3482
      %v3484 = vpop.f32.mrb[0].mxu0
      %v3485 = vadd.f32 %v3209, %v3484
      %v3486 = vpop.f32.mrb[0].mxu0
      %3487 = vmatprep.mubr.f32.mxu0 0.0
      %v3488 = vand.u32 %v1922, 4294901760
      %3489 = vmatmul.mubr.f32.gmra.mrb[0].mxu0 %v3488
      %v3490 = vpop.f32.mrb[0].mxu0
      %v3491 = vadd.f32 %v3217, %v3490
      %v3492 = vpop.f32.mrb[0].mxu0
      %3493 = vmatprep.mubr.f32.mxu0 0.0
      %v3494 = vand.u32 %v1925, 4294901760
      %3495 = vmatmul.mubr.f32.gmra.mrb[0].mxu0 %v3494
      %v3496 = vpop.f32.mrb[0].mxu0
      %v3497 = vadd.f32 %v3225, %v3496
      %v3498 = vpop.f32.mrb[0].mxu0
      %3499 = vdwg.mxu0
      %3500 = vmatprep.subr.mxu0 0.0
      %v3501 = vand.u32 %v1825, 4294901760
      %3502 = vmatpush1.msra.mxu0 %v3501
      %3503 = vmatprep.subr.mxu0 0.0
      %v3504 = vand.u32 %v1826, 4294901760
      %3505 = vmatpush1.msra.mxu0 %v3504
      %3506 = vmatprep.subr.mxu0 0.0
      %v3507 = vand.u32 %v1827, 4294901760
      %3508 = vmatpush1.msra.mxu0 %v3507
      %3509 = vmatprep.subr.mxu0 0.0
      %v3510 = vand.u32 %v1828, 4294901760
      %3511 = vmatpush1.msra.mxu0 %v3510
      %3512 = vmatprep.subr.mxu0 0.0
      %v3513 = vand.u32 %v1929, 4294901760
      %3514 = vmatpush1.msra.mxu0 %v3513
      %3515 = vmatprep.subr.mxu0 0.0
      %3516 = vmatpush1.msra.mxu0 0.0
      %3517 = vmatprep.subr.mxu0 0.0
      %3518 = vmatpush1.msra.mxu0 0.0
      %3519 = vmatprep.subr.mxu0 0.0
      %3520 = vmatpush1.msra.mxu0 0.0
      %3521 = vmatprep.subr.mxu0 0.0
      %3522 = vmatpush1.msra.mxu0 0.0
      %3523 = vmatprep.subr.mxu0 0.0
      %3524 = vmatpush1.msra.mxu0 0.0
      %3525 = vmatprep.subr.mxu0 0.0
      %3526 = vmatpush1.msra.mxu0 0.0
      %3527 = vmatprep.subr.mxu0 0.0
      %3528 = vmatpush1.msra.mxu0 0.0
      %3529 = vmatprep.subr.mxu0 0.0
      %3530 = vmatpush1.msra.mxu0 0.0
      %3531 = vmatprep.subr.mxu0 0.0
      %3532 = vmatpush1.msra.mxu0 0.0
      %3533 = vmatprep.subr.mxu0 0.0
      %3534 = vmatpush1.msra.mxu0 0.0
      %3535 = vmatprep.subr.mxu0 0.0
      %3536 = vmatpush1.msra.mxu0 0.0
      %3537 = vmatprep.subr.mxu0 0.0
      %3538 = vmatpush1.msra.mxu0 0.0
      %3539 = vmatprep.subr.mxu0 0.0
      %3540 = vmatpush1.msra.mxu0 0.0
      %3541 = vmatprep.subr.mxu0 0.0
      %3542 = vmatpush1.msra.mxu0 0.0
      %3543 = vmatprep.subr.mxu0 0.0
      %3544 = vmatpush1.msra.mxu0 0.0
      %3545 = vmatprep.subr.mxu0 0.0
      %3546 = vmatpush1.msra.mxu0 0.0
      %3547 = vmatprep.subr.mxu0 0.0
      %3548 = vmatpush1.msra.mxu0 0.0
      %3549 = vmatprep.subr.mxu0 0.0
      %3550 = vmatpush1.msra.mxu0 0.0
      %3551 = vmatprep.subr.mxu0 0.0
      %3552 = vmatpush1.msra.mxu0 0.0
      %3553 = vmatprep.subr.mxu0 0.0
      %3554 = vmatpush1.msra.mxu0 0.0
      %3555 = vmatprep.subr.mxu0 0.0
      %3556 = vmatpush1.msra.mxu0 0.0
      %3557 = vmatprep.subr.mxu0 0.0
      %3558 = vmatpush1.msra.mxu0 0.0
      %3559 = vmatprep.subr.mxu0 0.0
      %3560 = vmatpush1.msra.mxu0 0.0
      %3561 = vmatprep.subr.mxu0 0.0
      %3562 = vmatpush1.msra.mxu0 0.0
      %3563 = vmatprep.subr.mxu0 0.0
      %3564 = vmatpush1.msra.mxu0 0.0
      %3565 = vmatprep.subr.mxu0 0.0
      %3566 = vmatpush1.msra.mxu0 0.0
      %3567 = vmatprep.subr.mxu0 0.0
      %3568 = vmatpush1.msra.mxu0 0.0
      %3569 = vmatprep.mubr.f32.mxu0 0.0
      %v3570 = vand.u32 %v1832, 4294901760
      %3571 = vmatmul.mubr.f32.gmra.mrb[0].mxu0 %v3570
      %v3572 = vpop.f32.mrb[0].mxu0
      %v3573 = vadd.f32 %v3311, %v3572
      %v3574 = vpop.f32.mrb[0].mxu0
      %3575 = vmatprep.mubr.f32.mxu0 0.0
      %v3576 = vand.u32 %v1835, 4294901760
      %3577 = vmatmul.mubr.f32.gmra.mrb[0].mxu0 %v3576
      %v3578 = vpop.f32.mrb[0].mxu0
      %v3579 = vadd.f32 %v3317, %v3578
      %v3580 = vpop.f32.mrb[0].mxu0
      %3581 = vmatprep.mubr.f32.mxu0 0.0
      %v3582 = vand.u32 %v1838, 4294901760
      %3583 = vmatmul.mubr.f32.gmra.mrb[0].mxu0 %v3582
      %v3584 = vpop.f32.mrb[0].mxu0
      %v3585 = vadd.f32 %v3323, %v3584
      %v3586 = vpop.f32.mrb[0].mxu0
      %3587 = vmatprep.mubr.f32.mxu0 0.0
      %v3588 = vand.u32 %v1841, 4294901760
      %3589 = vmatmul.mubr.f32.gmra.mrb[0].mxu0 %v3588
      %v3590 = vpop.f32.mrb[0].mxu0
      %v3591 = vadd.f32 %v3329, %v3590
      %v3592 = vpop.f32.mrb[0].mxu0
      %3593 = vmatprep.mubr.f32.mxu0 0.0
      %v3594 = vand.u32 %v1844, 4294901760
      %3595 = vmatmul.mubr.f32.gmra.mrb[0].mxu0 %v3594
      %v3596 = vpop.f32.mrb[0].mxu0
      %v3597 = vadd.f32 %v3335, %v3596
      %v3598 = vpop.f32.mrb[0].mxu0
      %3599 = vmatprep.mubr.f32.mxu0 0.0
      %v3600 = vand.u32 %v1847, 4294901760
      %3601 = vmatmul.mubr.f32.gmra.mrb[0].mxu0 %v3600
      %v3602 = vpop.f32.mrb[0].mxu0
      %v3603 = vadd.f32 %v3341, %v3602
      %v3604 = vpop.f32.mrb[0].mxu0
      %3605 = vmatprep.mubr.f32.mxu0 0.0
      %v3606 = vand.u32 %v1850, 4294901760
      %3607 = vmatmul.mubr.f32.gmra.mrb[0].mxu0 %v3606
      %v3608 = vpop.f32.mrb[0].mxu0
      %v3609 = vadd.f32 %v3347, %v3608
      %v3610 = vpop.f32.mrb[0].mxu0
      %3611 = vmatprep.mubr.f32.mxu0 0.0
      %v3612 = vand.u32 %v1853, 4294901760
      %3613 = vmatmul.mubr.f32.gmra.mrb[0].mxu0 %v3612
      %v3614 = vpop.f32.mrb[0].mxu0
      %v3615 = vadd.f32 %v3353, %v3614
      %v3616 = vpop.f32.mrb[0].mxu0
      %3617 = vmatprep.mubr.f32.mxu0 0.0
      %v3618 = vand.u32 %v1856, 4294901760
      %3619 = vmatmul.mubr.f32.gmra.mrb[0].mxu0 %v3618
      %v3620 = vpop.f32.mrb[0].mxu0
      %v3621 = vadd.f32 %v3359, %v3620
      %v3622 = vpop.f32.mrb[0].mxu0
      %3623 = vmatprep.mubr.f32.mxu0 0.0
      %v3624 = vand.u32 %v1859, 4294901760
      %3625 = vmatmul.mubr.f32.gmra.mrb[0].mxu0 %v3624
      %v3626 = vpop.f32.mrb[0].mxu0
      %v3627 = vadd.f32 %v3365, %v3626
      %v3628 = vpop.f32.mrb[0].mxu0
      %3629 = vmatprep.mubr.f32.mxu0 0.0
      %v3630 = vand.u32 %v1862, 4294901760
      %3631 = vmatmul.mubr.f32.gmra.mrb[0].mxu0 %v3630
      %v3632 = vpop.f32.mrb[0].mxu0
      %v3633 = vadd.f32 %v3371, %v3632
      %v3634 = vpop.f32.mrb[0].mxu0
      %3635 = vmatprep.mubr.f32.mxu0 0.0
      %v3636 = vand.u32 %v1865, 4294901760
      %3637 = vmatmul.mubr.f32.gmra.mrb[0].mxu0 %v3636
      %v3638 = vpop.f32.mrb[0].mxu0
      %v3639 = vadd.f32 %v3377, %v3638
      %v3640 = vpop.f32.mrb[0].mxu0
      %3641 = vmatprep.mubr.f32.mxu0 0.0
      %v3642 = vand.u32 %v1868, 4294901760
      %3643 = vmatmul.mubr.f32.gmra.mrb[0].mxu0 %v3642
      %v3644 = vpop.f32.mrb[0].mxu0
      %v3645 = vadd.f32 %v3383, %v3644
      %v3646 = vpop.f32.mrb[0].mxu0
      %3647 = vmatprep.mubr.f32.mxu0 0.0
      %v3648 = vand.u32 %v1871, 4294901760
      %3649 = vmatmul.mubr.f32.gmra.mrb[0].mxu0 %v3648
      %v3650 = vpop.f32.mrb[0].mxu0
      %v3651 = vadd.f32 %v3389, %v3650
      %v3652 = vpop.f32.mrb[0].mxu0
      %3653 = vmatprep.mubr.f32.mxu0 0.0
      %v3654 = vand.u32 %v1874, 4294901760
      %3655 = vmatmul.mubr.f32.gmra.mrb[0].mxu0 %v3654
      %v3656 = vpop.f32.mrb[0].mxu0
      %v3657 = vadd.f32 %v3395, %v3656
      %v3658 = vpop.f32.mrb[0].mxu0
      %3659 = vmatprep.mubr.f32.mxu0 0.0
      %v3660 = vand.u32 %v1877, 4294901760
      %3661 = vmatmul.mubr.f32.gmra.mrb[0].mxu0 %v3660
      %v3662 = vpop.f32.mrb[0].mxu0
      %v3663 = vadd.f32 %v3401, %v3662
      %v3664 = vpop.f32.mrb[0].mxu0
      %3665 = vmatprep.mubr.f32.mxu0 0.0
      %v3666 = vand.u32 %v1880, 4294901760
      %3667 = vmatmul.mubr.f32.gmra.mrb[0].mxu0 %v3666
      %v3668 = vpop.f32.mrb[0].mxu0
      %v3669 = vadd.f32 %v3407, %v3668
      %v3670 = vpop.f32.mrb[0].mxu0
      %3671 = vmatprep.mubr.f32.mxu0 0.0
      %v3672 = vand.u32 %v1883, 4294901760
      %3673 = vmatmul.mubr.f32.gmra.mrb[0].mxu0 %v3672
      %v3674 = vpop.f32.mrb[0].mxu0
      %v3675 = vadd.f32 %v3413, %v3674
      %v3676 = vpop.f32.mrb[0].mxu0
      %3677 = vmatprep.mubr.f32.mxu0 0.0
      %v3678 = vand.u32 %v1886, 4294901760
      %3679 = vmatmul.mubr.f32.gmra.mrb[0].mxu0 %v3678
      %v3680 = vpop.f32.mrb[0].mxu0
      %v3681 = vadd.f32 %v3419, %v3680
      %v3682 = vpop.f32.mrb[0].mxu0
      %3683 = vmatprep.mubr.f32.mxu0 0.0
      %v3684 = vand.u32 %v1889, 4294901760
      %3685 = vmatmul.mubr.f32.gmra.mrb[0].mxu0 %v3684
      %v3686 = vpop.f32.mrb[0].mxu0
      %v3687 = vadd.f32 %v3425, %v3686
      %v3688 = vpop.f32.mrb[0].mxu0
      %3689 = vmatprep.mubr.f32.mxu0 0.0
      %v3690 = vand.u32 %v1892, 4294901760
      %3691 = vmatmul.mubr.f32.gmra.mrb[0].mxu0 %v3690
      %v3692 = vpop.f32.mrb[0].mxu0
      %v3693 = vadd.f32 %v3431, %v3692
      %v3694 = vpop.f32.mrb[0].mxu0
      %3695 = vmatprep.mubr.f32.mxu0 0.0
      %v3696 = vand.u32 %v1895, 4294901760
      %3697 = vmatmul.mubr.f32.gmra.mrb[0].mxu0 %v3696
      %v3698 = vpop.f32.mrb[0].mxu0
      %v3699 = vadd.f32 %v3437, %v3698
      %v3700 = vpop.f32.mrb[0].mxu0
      %3701 = vmatprep.mubr.f32.mxu0 0.0
      %v3702 = vand.u32 %v1898, 4294901760
      %3703 = vmatmul.mubr.f32.gmra.mrb[0].mxu0 %v3702
      %v3704 = vpop.f32.mrb[0].mxu0
      %v3705 = vadd.f32 %v3443, %v3704
      %v3706 = vpop.f32.mrb[0].mxu0
      %3707 = vmatprep.mubr.f32.mxu0 0.0
      %v3708 = vand.u32 %v1901, 4294901760
      %3709 = vmatmul.mubr.f32.gmra.mrb[0].mxu0 %v3708
      %v3710 = vpop.f32.mrb[0].mxu0
      %v3711 = vadd.f32 %v3449, %v3710
      %v3712 = vpop.f32.mrb[0].mxu0
      %3713 = vmatprep.mubr.f32.mxu0 0.0
      %v3714 = vand.u32 %v1904, 4294901760
      %3715 = vmatmul.mubr.f32.gmra.mrb[0].mxu0 %v3714
      %v3716 = vpop.f32.mrb[0].mxu0
      %v3717 = vadd.f32 %v3455, %v3716
      %v3718 = vpop.f32.mrb[0].mxu0
      %3719 = vmatprep.mubr.f32.mxu0 0.0
      %v3720 = vand.u32 %v1907, 4294901760
      %3721 = vmatmul.mubr.f32.gmra.mrb[0].mxu0 %v3720
      %v3722 = vpop.f32.mrb[0].mxu0
      %v3723 = vadd.f32 %v3461, %v3722
      %v3724 = vpop.f32.mrb[0].mxu0
      %3725 = vmatprep.mubr.f32.mxu0 0.0
      %v3726 = vand.u32 %v1910, 4294901760
      %3727 = vmatmul.mubr.f32.gmra.mrb[0].mxu0 %v3726
      %v3728 = vpop.f32.mrb[0].mxu0
      %v3729 = vadd.f32 %v3467, %v3728
      %v3730 = vpop.f32.mrb[0].mxu0
      %3731 = vmatprep.mubr.f32.mxu0 0.0
      %v3732 = vand.u32 %v1913, 4294901760
      %3733 = vmatmul.mubr.f32.gmra.mrb[0].mxu0 %v3732
      %v3734 = vpop.f32.mrb[0].mxu0
      %v3735 = vadd.f32 %v3473, %v3734
      %v3736 = vpop.f32.mrb[0].mxu0
      %3737 = vmatprep.mubr.f32.mxu0 0.0
      %v3738 = vand.u32 %v1916, 4294901760
      %3739 = vmatmul.mubr.f32.gmra.mrb[0].mxu0 %v3738
      %v3740 = vpop.f32.mrb[0].mxu0
      %v3741 = vadd.f32 %v3479, %v3740
      %v3742 = vpop.f32.mrb[0].mxu0
      %3743 = vmatprep.mubr.f32.mxu0 0.0
      %v3744 = vand.u32 %v1919, 4294901760
      %3745 = vmatmul.mubr.f32.gmra.mrb[0].mxu0 %v3744
      %v3746 = vpop.f32.mrb[0].mxu0
      %v3747 = vadd.f32 %v3485, %v3746
      %v3748 = vpop.f32.mrb[0].mxu0
      %3749 = vmatprep.mubr.f32.mxu0 0.0
      %v3750 = vand.u32 %v1922, 4294901760
      %3751 = vmatmul.mubr.f32.gmra.mrb[0].mxu0 %v3750
      %v3752 = vpop.f32.mrb[0].mxu0
      %v3753 = vadd.f32 %v3491, %v3752
      %v3754 = vpop.f32.mrb[0].mxu0
      %3755 = vmatprep.mubr.f32.mxu0 0.0
      %v3756 = vand.u32 %v1925, 4294901760
      %3757 = vmatmul.mubr.f32.gmra.mrb[0].mxu0 %v3756
      %v3758 = vpop.f32.mrb[0].mxu0
      %v3759 = vadd.f32 %v3497, %v3758
      %v3760 = vpop.f32.mrb[0].mxu0
      %3761 = vdwg.mxu0
      %vm3762 = vcmask 261120
      %3763 = vst.msk [vmem:[%s177] sm:$0xff] %vm3762, %v3573
      %3764 = vst.msk [vmem:[%s177 + $0x8] sm:$0xff] %vm3762, %v3579
      %3765 = vst.msk [vmem:[%s177 + $0x10] sm:$0xff] %vm3762, %v3585
      %3766 = vst.msk [vmem:[%s177 + $0x18] sm:$0xff] %vm3762, %v3591
      %3767 = vst.msk [vmem:[%s177 + $0x20] sm:$0xff] %vm3762, %v3597
      %3768 = vst.msk [vmem:[%s177 + $0x28] sm:$0xff] %vm3762, %v3603
      %3769 = vst.msk [vmem:[%s177 + $0x30] sm:$0xff] %vm3762, %v3609
      %3770 = vst.msk [vmem:[%s177 + $0x38] sm:$0xff] %vm3762, %v3615
      %3771 = vst.msk [vmem:[%s177 + $0x40] sm:$0xff] %vm3762, %v3621
      %3772 = vst.msk [vmem:[%s177 + $0x48] sm:$0xff] %vm3762, %v3627
      %3773 = vst.msk [vmem:[%s177 + $0x50] sm:$0xff] %vm3762, %v3633
      %3774 = vst.msk [vmem:[%s177 + $0x58] sm:$0xff] %vm3762, %v3639
      %3775 = vst.msk [vmem:[%s177 + $0x60] sm:$0xff] %vm3762, %v3645
      %3776 = vst.msk [vmem:[%s177 + $0x68] sm:$0xff] %vm3762, %v3651
      %3777 = vst.msk [vmem:[%s177 + $0x70] sm:$0xff] %vm3762, %v3657
      %3778 = vst.msk [vmem:[%s177 + $0x78] sm:$0xff] %vm3762, %v3663
      %3779 = vst.msk [vmem:[%s177 + $0x80] sm:$0xff] %vm3762, %v3669
      %3780 = vst.msk [vmem:[%s177 + $0x88] sm:$0xff] %vm3762, %v3675
      %3781 = vst.msk [vmem:[%s177 + $0x90] sm:$0xff] %vm3762, %v3681
      %3782 = vst.msk [vmem:[%s177 + $0x98] sm:$0xff] %vm3762, %v3687
      %3783 = vst.msk [vmem:[%s177 + $0xa0] sm:$0xff] %vm3762, %v3693
      %3784 = vst.msk [vmem:[%s177 + $0xa8] sm:$0xff] %vm3762, %v3699
      %3785 = vst.msk [vmem:[%s177 + $0xb0] sm:$0xff] %vm3762, %v3705
      %3786 = vst.msk [vmem:[%s177 + $0xb8] sm:$0xff] %vm3762, %v3711
      %3787 = vst.msk [vmem:[%s177 + $0xc0] sm:$0xff] %vm3762, %v3717
      %3788 = vst.msk [vmem:[%s177 + $0xc8] sm:$0xff] %vm3762, %v3723
      %3789 = vst.msk [vmem:[%s177 + $0xd0] sm:$0xff] %vm3762, %v3729
      %3790 = vst.msk [vmem:[%s177 + $0xd8] sm:$0xff] %vm3762, %v3735
      %3791 = vst.msk [vmem:[%s177 + $0xe0] sm:$0xff] %vm3762, %v3741
      %3792 = vst.msk [vmem:[%s177 + $0xe8] sm:$0xff] %vm3762, %v3747
      %3793 = vst.msk [vmem:[%s177 + $0xf0] sm:$0xff] %vm3762, %v3753
      %3794 = vst.msk [vmem:[%s177 + $0xf8] sm:$0xff] %vm3762, %v3759
      %v3795 = vsel %vm3762, %v3573, 0.0
      %v3796 = vsel %vm3762, %v3579, 0.0
      %v3797 = vadd.f32 %v3795, %v3796
      %v3798 = vsel %vm3762, %v3585, 0.0
      %v3799 = vadd.f32 %v3797, %v3798
      %v3800 = vsel %vm3762, %v3591, 0.0
      %v3801 = vadd.f32 %v3799, %v3800
      %v3802 = vsel %vm3762, %v3597, 0.0
      %v3803 = vadd.f32 %v3801, %v3802
      %v3804 = vsel %vm3762, %v3603, 0.0
      %v3805 = vadd.f32 %v3803, %v3804
      %v3806 = vsel %vm3762, %v3609, 0.0
      %v3807 = vadd.f32 %v3805, %v3806
      %v3808 = vsel %vm3762, %v3615, 0.0
      %v3809 = vadd.f32 %v3807, %v3808
      %v3810 = vsel %vm3762, %v3621, 0.0
      %v3811 = vadd.f32 %v3809, %v3810
      %v3812 = vsel %vm3762, %v3627, 0.0
      %v3813 = vadd.f32 %v3811, %v3812
      %v3814 = vsel %vm3762, %v3633, 0.0
      %v3815 = vadd.f32 %v3813, %v3814
      %v3816 = vsel %vm3762, %v3639, 0.0
      %v3817 = vadd.f32 %v3815, %v3816
      %v3818 = vsel %vm3762, %v3645, 0.0
      %v3819 = vadd.f32 %v3817, %v3818
      %v3820 = vsel %vm3762, %v3651, 0.0
      %v3821 = vadd.f32 %v3819, %v3820
      %v3822 = vsel %vm3762, %v3657, 0.0
      %v3823 = vadd.f32 %v3821, %v3822
      %v3824 = vsel %vm3762, %v3663, 0.0
      %v3825 = vadd.f32 %v3823, %v3824
      %v3826 = vsel %vm3762, %v3669, 0.0
      %v3827 = vadd.f32 %v3825, %v3826
      %v3828 = vsel %vm3762, %v3675, 0.0
      %v3829 = vadd.f32 %v3827, %v3828
      %v3830 = vsel %vm3762, %v3681, 0.0
      %v3831 = vadd.f32 %v3829, %v3830
      %v3832 = vsel %vm3762, %v3687, 0.0
      %v3833 = vadd.f32 %v3831, %v3832
      %v3834 = vsel %vm3762, %v3693, 0.0
      %v3835 = vadd.f32 %v3833, %v3834
      %v3836 = vsel %vm3762, %v3699, 0.0
      %v3837 = vadd.f32 %v3835, %v3836
      %v3838 = vsel %vm3762, %v3705, 0.0
      %v3839 = vadd.f32 %v3837, %v3838
      %v3840 = vsel %vm3762, %v3711, 0.0
      %v3841 = vadd.f32 %v3839, %v3840
      %v3842 = vsel %vm3762, %v3717, 0.0
      %v3843 = vadd.f32 %v3841, %v3842
      %v3844 = vsel %vm3762, %v3723, 0.0
      %v3845 = vadd.f32 %v3843, %v3844
      %v3846 = vsel %vm3762, %v3729, 0.0
      %v3847 = vadd.f32 %v3845, %v3846
      %v3848 = vsel %vm3762, %v3735, 0.0
      %v3849 = vadd.f32 %v3847, %v3848
      %v3850 = vsel %vm3762, %v3741, 0.0
      %v3851 = vadd.f32 %v3849, %v3850
      %v3852 = vsel %vm3762, %v3747, 0.0
      %v3853 = vadd.f32 %v3851, %v3852
      %v3854 = vsel %vm3762, %v3753, 0.0
      %v3855 = vadd.f32 %v3853, %v3854
      %v3856 = vsel %vm3762, %v3759, 0.0
      %v3857 = vadd.f32 %v3855, %v3856
      %v3858 = vrot.slane %v3857, 4
      %v3859 = vadd.f32 %v3857, %v3858
      %v3860 = vrot.slane %v3859, 2
      %v3861 = vadd.f32 %v3859, %v3860
      %v3862 = vrot.slane %v3861, 1
      %v3863 = vadd.f32 %v3861, %v3862
      %vm3864 = vcmask 253952
      %3865 = vst.msk [vmem:[%s181] sm:$0x1] %vm3864, %v3863
      %v3866 = vmul.f32 %v3573, %v3573
      %v3867 = vmul.f32 %v3579, %v3579
      %v3868 = vmul.f32 %v3585, %v3585
      %v3869 = vmul.f32 %v3591, %v3591
      %v3870 = vmul.f32 %v3597, %v3597
      %v3871 = vmul.f32 %v3603, %v3603
      %v3872 = vmul.f32 %v3609, %v3609
      %v3873 = vmul.f32 %v3615, %v3615
      %v3874 = vmul.f32 %v3621, %v3621
      %v3875 = vmul.f32 %v3627, %v3627
      %v3876 = vmul.f32 %v3633, %v3633
      %v3877 = vmul.f32 %v3639, %v3639
      %v3878 = vmul.f32 %v3645, %v3645
      %v3879 = vmul.f32 %v3651, %v3651
      %v3880 = vmul.f32 %v3657, %v3657
      %v3881 = vmul.f32 %v3663, %v3663
      %v3882 = vmul.f32 %v3669, %v3669
      %v3883 = vmul.f32 %v3675, %v3675
      %v3884 = vmul.f32 %v3681, %v3681
      %v3885 = vmul.f32 %v3687, %v3687
      %v3886 = vmul.f32 %v3693, %v3693
      %v3887 = vmul.f32 %v3699, %v3699
      %v3888 = vmul.f32 %v3705, %v3705
      %v3889 = vmul.f32 %v3711, %v3711
      %v3890 = vmul.f32 %v3717, %v3717
      %v3891 = vmul.f32 %v3723, %v3723
      %v3892 = vmul.f32 %v3729, %v3729
      %v3893 = vmul.f32 %v3735, %v3735
      %v3894 = vmul.f32 %v3741, %v3741
      %v3895 = vmul.f32 %v3747, %v3747
      %v3896 = vmul.f32 %v3753, %v3753
      %v3897 = vmul.f32 %v3759, %v3759
      %v3898 = vsel %vm3762, %v3866, 0.0
      %v3899 = vsel %vm3762, %v3867, 0.0
      %v3900 = vadd.f32 %v3898, %v3899
      %v3901 = vsel %vm3762, %v3868, 0.0
      %v3902 = vadd.f32 %v3900, %v3901
      %v3903 = vsel %vm3762, %v3869, 0.0
      %v3904 = vadd.f32 %v3902, %v3903
      %v3905 = vsel %vm3762, %v3870, 0.0
      %v3906 = vadd.f32 %v3904, %v3905
      %v3907 = vsel %vm3762, %v3871, 0.0
      %v3908 = vadd.f32 %v3906, %v3907
      %v3909 = vsel %vm3762, %v3872, 0.0
      %v3910 = vadd.f32 %v3908, %v3909
      %v3911 = vsel %vm3762, %v3873, 0.0
      %v3912 = vadd.f32 %v3910, %v3911
      %v3913 = vsel %vm3762, %v3874, 0.0
      %v3914 = vadd.f32 %v3912, %v3913
      %v3915 = vsel %vm3762, %v3875, 0.0
      %v3916 = vadd.f32 %v3914, %v3915
      %v3917 = vsel %vm3762, %v3876, 0.0
      %v3918 = vadd.f32 %v3916, %v3917
      %v3919 = vsel %vm3762, %v3877, 0.0
      %v3920 = vadd.f32 %v3918, %v3919
      %v3921 = vsel %vm3762, %v3878, 0.0
      %v3922 = vadd.f32 %v3920, %v3921
      %v3923 = vsel %vm3762, %v3879, 0.0
      %v3924 = vadd.f32 %v3922, %v3923
      %v3925 = vsel %vm3762, %v3880, 0.0
      %v3926 = vadd.f32 %v3924, %v3925
      %v3927 = vsel %vm3762, %v3881, 0.0
      %v3928 = vadd.f32 %v3926, %v3927
      %v3929 = vsel %vm3762, %v3882, 0.0
      %v3930 = vadd.f32 %v3928, %v3929
      %v3931 = vsel %vm3762, %v3883, 0.0
      %v3932 = vadd.f32 %v3930, %v3931
      %v3933 = vsel %vm3762, %v3884, 0.0
      %v3934 = vadd.f32 %v3932, %v3933
      %v3935 = vsel %vm3762, %v3885, 0.0
      %v3936 = vadd.f32 %v3934, %v3935
      %v3937 = vsel %vm3762, %v3886, 0.0
      %v3938 = vadd.f32 %v3936, %v3937
      %v3939 = vsel %vm3762, %v3887, 0.0
      %v3940 = vadd.f32 %v3938, %v3939
      %v3941 = vsel %vm3762, %v3888, 0.0
      %v3942 = vadd.f32 %v3940, %v3941
      %v3943 = vsel %vm3762, %v3889, 0.0
      %v3944 = vadd.f32 %v3942, %v3943
      %v3945 = vsel %vm3762, %v3890, 0.0
      %v3946 = vadd.f32 %v3944, %v3945
      %v3947 = vsel %vm3762, %v3891, 0.0
      %v3948 = vadd.f32 %v3946, %v3947
      %v3949 = vsel %vm3762, %v3892, 0.0
      %v3950 = vadd.f32 %v3948, %v3949
      %v3951 = vsel %vm3762, %v3893, 0.0
      %v3952 = vadd.f32 %v3950, %v3951
      %v3953 = vsel %vm3762, %v3894, 0.0
      %v3954 = vadd.f32 %v3952, %v3953
      %v3955 = vsel %vm3762, %v3895, 0.0
      %v3956 = vadd.f32 %v3954, %v3955
      %v3957 = vsel %vm3762, %v3896, 0.0
      %v3958 = vadd.f32 %v3956, %v3957
      %v3959 = vsel %vm3762, %v3897, 0.0
      %v3960 = vadd.f32 %v3958, %v3959
      %v3961 = vrot.slane %v3960, 4
      %v3962 = vadd.f32 %v3960, %v3961
      %v3963 = vrot.slane %v3962, 2
      %v3964 = vadd.f32 %v3962, %v3963
      %v3965 = vrot.slane %v3964, 1
      %v3966 = vadd.f32 %v3964, %v3965
      %3967 = vst.msk [vmem:[%s181 + $0x1] sm:$0x1] %vm3864, %v3966
      %p3968 = scmp.lt.s32.totalorder %s15, 1
      %s3969 = scalar_select %p3968, %s15, 1
      %s3970 = smul.addr %s3969, 32
      %s3971 = smul.addr %s3970, 8
      %s3972 = scalar_lea.vmem %s2, %s3971
      %p3973 = scmp.lt.s32.totalorder %s15, 1
      %s3974 = scalar_select %p3973, %s15, 1
      %s3975 = smul.addr %s3974, 2
      %s3976 = scalar_lea.vmem %s3, %s3975
      // Predicated region
      $region29: #{up_block_forward.1} parent=27 // pred_check
        %p3977 = pneg %p80
      $region30: #{up_block_forward.1} parent=27 // pred_check_branch
        %3979 = sbr.rel (%p3977) target = $region32
      $region31: #{up_block_forward.1} parent=27 // pred_region
        _
      $region32: #{up_block_forward.1} parent=27 // pred_fallthru
        _
      // Predicated region
      $region33: #{up_block_forward.1} parent=27 // pred_check
        %p3980 = pneg %p106
      $region34: #{up_block_forward.1} parent=27 // pred_check_branch
        %3982 = sbr.rel (%p3980) target = $region36
      $region35: #{up_block_forward.1} parent=27 // pred_region
        _
      $region36: #{up_block_forward.1} parent=27 // pred_fallthru
        _
    $region28: #{up_block_forward.1} parent=5 // pred_fallthru
      _
    %p3983 = scmp.le.s32.totalorder 2, %s10
    // Predicated region
    $region37: #{up_block_forward.1} parent=5 // pred_check
      %p3984 = pneg %p3983
    $region38: #{up_block_forward.1} parent=5 // pred_check_branch
      %3986 = sbr.rel (%p3984) target = $region40
    $region39: #{up_block_forward.1} parent=5 // pred_region
      %s3987 = ssub.s32 %s10, 2
      // Predicated region
      $region41: #{up_block_forward.1} parent=39 // pred_check
        %p3988 = pneg %p86
      $region42: #{up_block_forward.1} parent=39 // pred_check_branch
        %3990 = sbr.rel (%p3988) target = $region44
      $region43: #{up_block_forward.1} parent=39 // pred_region
        %p3991 = scmp.lt.s32.totalorder %s16, 1
        %s3992 = scalar_select %p3991, %s16, 1
        %s3993 = smul.addr %s3992, 32
        %s3994 = smul.addr %s3993, 8
        %s3995 = scalar_lea.vmem %s2, %s3994
      $region44: #{up_block_forward.1} parent=39 // pred_fallthru
        _
      // Predicated region
      $region45: #{up_block_forward.1} parent=39 // pred_check
        %p3996 = pneg %p112
      $region46: #{up_block_forward.1} parent=39 // pred_check_branch
        %3998 = sbr.rel (%p3996) target = $region48
      $region47: #{up_block_forward.1} parent=39 // pred_region
        %p3999 = scmp.lt.s32.totalorder %s16, 1
        %s4000 = scalar_select %p3999, %s16, 1
        %s4001 = smul.addr %s4000, 2
        %s4002 = scalar_lea.vmem %s3, %s4001
      $region48: #{up_block_forward.1} parent=39 // pred_fallthru
        _
    $region40: #{up_block_forward.1} parent=5 // pred_fallthru
      _
  $region6: #{up_block_forward.1} parent=0 // loop_footer
    %s14 = sadd.s32 1, %s10
  $region7: #{up_block_forward.1} parent=0 // loop_footer_branch
    %9 = sbr.rel target = $region3
  $region8: #{up_block_forward.1} parent=0 // loop_exit
    _

</llo_original>
